<compile_context>
chip_gen: v7x
topology: tpu7x:2x2x1
jax: 0.10.0
libtpu: 0.0.40
codegen_flags: <defaults>
</compile_context>

<pallas_src>
import math

import jax
import jax.numpy as jnp
from jax.experimental import pallas as pl
from jax.experimental.pallas import tpu as pltpu


def gru_fused_kernel(x_ref, wx_ref, bx_ref, wh_ref, bhn_ref, out_ref, xg_ref):
    """Whole GRUModel forward, fully VMEM-resident.

    x_ref   : (B, T, D)   input sequence (batch-major, PyTorch layout)
    wx_ref  : (D, GP)     fused x-side weights  [Wx_r | Wx_i@Wa_x | Wx_n | 0-pad]
    bx_ref  : (1, GP)     fused x-side biases   [bx_r+bh_r | bA | bx_n | 0]
    wh_ref  : (H, GP)     fused recurrent weights [Wh_r | Wh_i@Wa_h | Wh_n | 0]
    bhn_ref : (1, GP)     recurrent bias, nonzero only on the n-gate lanes
                          (multiplied by the reset gate, cannot be pre-folded)
    out_ref : (B, T, H)   hidden state at every step (batch-major output)
    xg_ref  : (B, T, GP)  VMEM scratch for the hoisted x-side gate inputs
    """
    B, T, D = x_ref.shape
    H = out_ref.shape[2]

    # Fused weights / biases live in vregs for the whole kernel.
    wx = wx_ref[...]
    bx = bx_ref[...]
    wh = wh_ref[...]
    bhn = bhn_ref[...]

    # --- hoisted x-side projection (independent of h): bulk MXU matmuls ---
    for b in range(B):
        xg_ref[b] = (
            jnp.dot(x_ref[b], wx, preferred_element_type=jnp.float32) + bx
        )

    h = jnp.zeros((B, H), jnp.float32)

    # --- serial recurrence, fully unrolled (static indices, lane-dense ops) ---
    # Per step the critical path is ONE (B,H)x(H,GP) matmul + elementwise.
    # TODO(synk): could hold `wh` in the MXU across the loop with
    # pltpu.matmul_push_rhs/acc_lhs/pop to shave the per-step RHS push.
    for t in range(T):
        g = jnp.dot(h, wh, preferred_element_type=jnp.float32) + bhn   # (B, GP)
        pre = xg_ref[:, t, :]                                          # (B, GP)

        # reset gate + attention input gate in a single sigmoid pass
        ra = jax.nn.sigmoid(pre[:, : 2 * H] + g[:, : 2 * H])
        r = ra[:, :H]
        a = ra[:, H: 2 * H]

        n = jnp.tanh(pre[:, 2 * H: 3 * H] + r * g[:, 2 * H: 3 * H])
        h = n + a * (h - n)

        out_ref[:, t, :] = h


def prepare_params(params):
    """One-time (out-of-jit) weight folding and gate fusion.

    Folds attention(concat(i_i, h_i)) into the input-gate weights, concatenates
    the three gates, and zero-pads the fused gate dim to a multiple of 128
    lanes (padding columns / bias lanes are zero, so no garbage leaks into the
    sigmoid/tanh inputs).
    """
    x2h_w, x2h_b = params["x2h_w"], params["x2h_b"]
    h2h_w, h2h_b = params["h2h_w"], params["h2h_b"]
    att_w, att_b = params["att_w"], params["att_b"]

    D = x2h_w.shape[0]
    H = h2h_w.shape[0]
    GP = ((3 * H + 127) // 128) * 128          # fused gate dim padded to 128 lanes

    Wx_r, Wx_i, Wx_n = x2h_w[:, :H], x2h_w[:, H:2 * H], x2h_w[:, 2 * H:]
    bx_r, bx_i, bx_n = x2h_b[:H], x2h_b[H:2 * H], x2h_b[2 * H:]
    Wh_r, Wh_i, Wh_n = h2h_w[:, :H], h2h_w[:, H:2 * H], h2h_w[:, 2 * H:]
    bh_r, bh_i, bh_n = h2h_b[:H], h2h_b[H:2 * H], h2h_b[2 * H:]
    Wa_x, Wa_h = att_w[:H, :], att_w[H:, :]

    # inputgate = sigmoid(x @ (Wx_i@Wa_x) + h @ (Wh_i@Wa_h) + bA)
    WxA = Wx_i @ Wa_x                                   # (D, H)
    WhA = Wh_i @ Wa_h                                   # (H, H)
    bA = bx_i @ Wa_x + bh_i @ Wa_h + att_b              # (H,)

    wx_cat = jnp.zeros((D, GP), jnp.float32)
    wx_cat = (wx_cat.at[:, :H].set(Wx_r)
                    .at[:, H:2 * H].set(WxA)
                    .at[:, 2 * H:3 * H].set(Wx_n))
    bx_cat = jnp.zeros((1, GP), jnp.float32)
    bx_cat = (bx_cat.at[0, :H].set(bx_r + bh_r)
                    .at[0, H:2 * H].set(bA)
                    .at[0, 2 * H:3 * H].set(bx_n))
    wh_cat = jnp.zeros((H, GP), jnp.float32)
    wh_cat = (wh_cat.at[:, :H].set(Wh_r)
                    .at[:, H:2 * H].set(WhA)
                    .at[:, 2 * H:3 * H].set(Wh_n))
    bhn_pad = jnp.zeros((1, GP), jnp.float32).at[0, 2 * H:3 * H].set(bh_n)

    return dict(wx_cat=wx_cat, bx_cat=bx_cat, wh_cat=wh_cat, bhn_pad=bhn_pad)


@jax.jit
def gru_forward(x, wx_cat, bx_cat, wh_cat, bhn_pad):
    """x: (B, T, D) float32.  Returns hidden states (B, T, H).

    Single pallas_call, no grid: everything (input, fused weights, output,
    scratch) is VMEM-resident (~80 KB total, far under any gen's VMEM).
    """
    B, T, D = x.shape
    H = wh_cat.shape[0]
    GP = wh_cat.shape[1]

    vmem = pl.BlockSpec(memory_space=pltpu.MemorySpace.VMEM)
    return pl.pallas_call(
        gru_fused_kernel,
        out_shape=jax.ShapeDtypeStruct((B, T, H), jnp.float32),
        in_specs=[vmem, vmem, vmem, vmem, vmem],
        out_specs=vmem,
        scratch_shapes=[pltpu.VMEM((B, T, GP), jnp.float32)],
    )(x, wx_cat, bx_cat, wh_cat, bhn_pad)


def gru_reference(x, x2h_w, x2h_b, h2h_w, h2h_b, att_w, att_b):
    """Pure-JAX replica of the PyTorch GRUModel forward (no folding/fusion)."""
    B, T, D = x.shape
    H = h2h_w.shape[0]
    h = jnp.zeros((B, H), jnp.float32)
    outs = []
    for t in range(T):
        gx = x[:, t, :] @ x2h_w + x2h_b
        gh = h @ h2h_w + h2h_b
        i_r, i_i, i_n = gx[:, :H], gx[:, H:2 * H], gx[:, 2 * H:]
        h_r, h_i, h_n = gh[:, :H], gh[:, H:2 * H], gh[:, 2 * H:]
        resetgate = jax.nn.sigmoid(i_r + h_r)
        inputgate = jax.nn.sigmoid(jnp.concatenate([i_i, h_i], -1) @ att_w + att_b)
        newgate = jnp.tanh(i_n + resetgate * h_n)
        h = newgate + inputgate * (h - newgate)
        outs.append(h)
    return jnp.stack(outs, axis=1)                         # (B, T, H)


def make_params(key, input_dim, hidden_dim):
    """PyTorch GRUCell.reset_parameters: uniform(-1/sqrt(H), 1/sqrt(H)).
    Weights stored already transposed: (in, out)."""
    std = 1.0 / math.sqrt(hidden_dim)
    ks = jax.random.split(key, 6)
    u = lambda k, shape: jax.random.uniform(k, shape, jnp.float32, -std, std)
    D, H = input_dim, hidden_dim
    return dict(
        x2h_w=u(ks[0], (D, 3 * H)),
        x2h_b=u(ks[1], (3 * H,)),
        h2h_w=u(ks[2], (H, 3 * H)),
        h2h_b=u(ks[3], (3 * H,)),
        att_w=u(ks[4], (2 * H, H)),
        att_b=u(ks[5], (H,)),
    )


if __name__ == "__main__":
    B, T, D, H = 2, 30, 16, 32
    key = jax.random.PRNGKey(0)
    kx, kp = jax.random.split(key)

    x = jax.random.normal(kx, (B, T, D), jnp.float32)
    p = make_params(kp, D, H)

    # One-time weight folding / fusion (outside the per-call jit).
    fused = prepare_params(p)
    fused = jax.tree_util.tree_map(jax.block_until_ready, fused)

    out = gru_forward(x, fused["wx_cat"], fused["bx_cat"],
                      fused["wh_cat"], fused["bhn_pad"])
    out = jax.block_until_ready(out)

    ref = gru_reference(x, p["x2h_w"], p["x2h_b"], p["h2h_w"], p["h2h_b"],
                        p["att_w"], p["att_b"])

    assert out.shape == (B, T, H), out.shape
    # atol slightly above fp32 ulp level: the attention-weight fold and gate
    # fusion reassociate fp32 matmuls vs. the unfused reference.
    assert jnp.allclose(out, ref, atol=2e-5, rtol=1e-5), \
        float(jnp.max(jnp.abs(out - ref)))
    print("KERNEL_OK")
</pallas_src>

<mosaic_0001>
module attributes {stable_mosaic.version = 11 : i64} {
  func.func @gru_fused_kernel(%arg0: memref<2x30x16xf32, #tpu.memory_space<vmem>>, %arg1: memref<16x128xf32, #tpu.memory_space<vmem>>, %arg2: memref<1x128xf32, #tpu.memory_space<vmem>>, %arg3: memref<32x128xf32, #tpu.memory_space<vmem>>, %arg4: memref<1x128xf32, #tpu.memory_space<vmem>>, %arg5: memref<2x30x32xf32, #tpu.memory_space<vmem>>, %arg6: memref<2x30x128xf32, #tpu.memory_space<vmem>>) attributes {dimension_semantics = [], scalar_prefetch = 0 : i64, scratch_operands = 1 : i64, tpu.core_type = #tpu.core_type<tc>} {
    %c0 = arith.constant 0 : index
    %c0_0 = arith.constant 0 : index
    %0 = vector.load %arg1[%c0, %c0_0] : memref<16x128xf32, #tpu.memory_space<vmem>>, vector<16x128xf32>
    %c0_1 = arith.constant 0 : index
    %c0_2 = arith.constant 0 : index
    %1 = vector.load %arg2[%c0_1, %c0_2] : memref<1x128xf32, #tpu.memory_space<vmem>>, vector<1x128xf32>
    %c0_3 = arith.constant 0 : index
    %c0_4 = arith.constant 0 : index
    %2 = vector.load %arg3[%c0_3, %c0_4] : memref<32x128xf32, #tpu.memory_space<vmem>>, vector<32x128xf32>
    %c0_5 = arith.constant 0 : index
    %c0_6 = arith.constant 0 : index
    %3 = vector.load %arg4[%c0_5, %c0_6] : memref<1x128xf32, #tpu.memory_space<vmem>>, vector<1x128xf32>
    %c0_7 = arith.constant 0 : index
    %c0_8 = arith.constant 0 : index
    %c0_9 = arith.constant 0 : index
    %4 = vector.load %arg0[%c0_7, %c0_8, %c0_9] : memref<2x30x16xf32, #tpu.memory_space<vmem>>, vector<1x30x16xf32>
    %5 = vector.shape_cast %4 : vector<1x30x16xf32> to vector<30x16xf32>
    %cst = arith.constant dense<0.000000e+00> : vector<30x128xf32>
    %6 = tpu.matmul %5, %0, %cst {dimension_numbers = #tpu.dot_dimension_numbers<[1], [0], [0], [1], [0, 0, 1, 1], [], []>} : vector<30x16xf32>, vector<16x128xf32>, vector<30x128xf32> -> vector<30x128xf32>
    %7 = vector.broadcast %1 : vector<1x128xf32> to vector<30x128xf32>
    %8 = arith.addf %6, %7 : vector<30x128xf32>
    %c0_10 = arith.constant 0 : index
    %c0_11 = arith.constant 0 : index
    %c0_12 = arith.constant 0 : index
    %9 = vector.load %arg6[%c0_10, %c0_11, %c0_12] : memref<2x30x128xf32, #tpu.memory_space<vmem>>, vector<1x30x128xf32>
    %10 = vector.shape_cast %9 : vector<1x30x128xf32> to vector<30x128xf32>
    %11 = vector.shape_cast %8 : vector<30x128xf32> to vector<1x30x128xf32>
    tpu.vector_store %arg6[%c0_10, %c0_11, %c0_12], %11 {strides = array<i32>} : memref<2x30x128xf32, #tpu.memory_space<vmem>>, vector<1x30x128xf32>,
    %c1 = arith.constant 1 : index
    %c0_13 = arith.constant 0 : index
    %c0_14 = arith.constant 0 : index
    %12 = vector.load %arg0[%c1, %c0_13, %c0_14] : memref<2x30x16xf32, #tpu.memory_space<vmem>>, vector<1x30x16xf32>
    %13 = vector.shape_cast %12 : vector<1x30x16xf32> to vector<30x16xf32>
    %cst_15 = arith.constant dense<0.000000e+00> : vector<30x128xf32>
    %14 = tpu.matmul %13, %0, %cst_15 {dimension_numbers = #tpu.dot_dimension_numbers<[1], [0], [0], [1], [0, 0, 1, 1], [], []>} : vector<30x16xf32>, vector<16x128xf32>, vector<30x128xf32> -> vector<30x128xf32>
    %15 = vector.broadcast %1 : vector<1x128xf32> to vector<30x128xf32>
    %16 = arith.addf %14, %15 : vector<30x128xf32>
    %c1_16 = arith.constant 1 : index
    %c0_17 = arith.constant 0 : index
    %c0_18 = arith.constant 0 : index
    %17 = vector.load %arg6[%c1_16, %c0_17, %c0_18] : memref<2x30x128xf32, #tpu.memory_space<vmem>>, vector<1x30x128xf32>
    %18 = vector.shape_cast %17 : vector<1x30x128xf32> to vector<30x128xf32>
    %19 = vector.shape_cast %16 : vector<30x128xf32> to vector<1x30x128xf32>
    tpu.vector_store %arg6[%c1_16, %c0_17, %c0_18], %19 {strides = array<i32>} : memref<2x30x128xf32, #tpu.memory_space<vmem>>, vector<1x30x128xf32>,
    %cst_19 = arith.constant 0.000000e+00 : f32
    %20 = vector.broadcast %cst_19 : f32 to vector<2x32xf32>
    %cst_20 = arith.constant dense<0.000000e+00> : vector<2x128xf32>
    %21 = tpu.matmul %20, %2, %cst_20 {dimension_numbers = #tpu.dot_dimension_numbers<[1], [0], [0], [1], [0, 0, 1, 1], [], []>} : vector<2x32xf32>, vector<32x128xf32>, vector<2x128xf32> -> vector<2x128xf32>
    %22 = vector.broadcast %3 : vector<1x128xf32> to vector<2x128xf32>
    %23 = arith.addf %21, %22 : vector<2x128xf32>
    %c0_21 = arith.constant 0 : index
    %c0_22 = arith.constant 0 : index
    %c0_23 = arith.constant 0 : index
    %24 = vector.load %arg6[%c0_21, %c0_22, %c0_23] : memref<2x30x128xf32, #tpu.memory_space<vmem>>, vector<2x1x128xf32>
    %25 = vector.shape_cast %24 : vector<2x1x128xf32> to vector<2x128xf32>
    %26 = vector.extract_strided_slice %25 {offsets = [0, 0], sizes = [2, 64], strides = [1, 1]} : vector<2x128xf32> to vector<2x64xf32>
    %27 = vector.extract_strided_slice %23 {offsets = [0, 0], sizes = [2, 64], strides = [1, 1]} : vector<2x128xf32> to vector<2x64xf32>
    %28 = arith.addf %26, %27 : vector<2x64xf32>
    %29 = arith.negf %28 : vector<2x64xf32>
    %30 = math.exp %29 : vector<2x64xf32>
    %cst_24 = arith.constant 1.000000e+00 : f32
    %31 = vector.broadcast %cst_24 : f32 to vector<2x64xf32>
    %32 = arith.addf %31, %30 : vector<2x64xf32>
    %33 = arith.divf %31, %32 : vector<2x64xf32>
    %34 = vector.extract_strided_slice %33 {offsets = [0, 0], sizes = [2, 32], strides = [1, 1]} : vector<2x64xf32> to vector<2x32xf32>
    %35 = vector.extract_strided_slice %33 {offsets = [0, 32], sizes = [2, 32], strides = [1, 1]} : vector<2x64xf32> to vector<2x32xf32>
    %36 = vector.extract_strided_slice %25 {offsets = [0, 64], sizes = [2, 32], strides = [1, 1]} : vector<2x128xf32> to vector<2x32xf32>
    %37 = vector.extract_strided_slice %23 {offsets = [0, 64], sizes = [2, 32], strides = [1, 1]} : vector<2x128xf32> to vector<2x32xf32>
    %38 = arith.mulf %34, %37 : vector<2x32xf32>
    %39 = arith.addf %36, %38 : vector<2x32xf32>
    %40 = math.tanh %39 : vector<2x32xf32>
    %41 = arith.subf %20, %40 : vector<2x32xf32>
    %42 = arith.mulf %35, %41 : vector<2x32xf32>
    %43 = arith.addf %40, %42 : vector<2x32xf32>
    %c0_25 = arith.constant 0 : index
    %c0_26 = arith.constant 0 : index
    %c0_27 = arith.constant 0 : index
    %44 = vector.load %arg5[%c0_25, %c0_26, %c0_27] : memref<2x30x32xf32, #tpu.memory_space<vmem>>, vector<2x1x32xf32>
    %45 = vector.shape_cast %44 : vector<2x1x32xf32> to vector<2x32xf32>
    %46 = vector.shape_cast %43 : vector<2x32xf32> to vector<2x1x32xf32>
    tpu.vector_store %arg5[%c0_25, %c0_26, %c0_27], %46 {strides = array<i32>} : memref<2x30x32xf32, #tpu.memory_space<vmem>>, vector<2x1x32xf32>,
    %cst_28 = arith.constant dense<0.000000e+00> : vector<2x128xf32>
    %47 = tpu.matmul %43, %2, %cst_28 {dimension_numbers = #tpu.dot_dimension_numbers<[1], [0], [0], [1], [0, 0, 1, 1], [], []>} : vector<2x32xf32>, vector<32x128xf32>, vector<2x128xf32> -> vector<2x128xf32>
    %48 = vector.broadcast %3 : vector<1x128xf32> to vector<2x128xf32>
    %49 = arith.addf %47, %48 : vector<2x128xf32>
    %c0_29 = arith.constant 0 : index
    %c1_30 = arith.constant 1 : index
    %c0_31 = arith.constant 0 : index
    %50 = vector.load %arg6[%c0_29, %c1_30, %c0_31] : memref<2x30x128xf32, #tpu.memory_space<vmem>>, vector<2x1x128xf32>
    %51 = vector.shape_cast %50 : vector<2x1x128xf32> to vector<2x128xf32>
    %52 = vector.extract_strided_slice %51 {offsets = [0, 0], sizes = [2, 64], strides = [1, 1]} : vector<2x128xf32> to vector<2x64xf32>
    %53 = vector.extract_strided_slice %49 {offsets = [0, 0], sizes = [2, 64], strides = [1, 1]} : vector<2x128xf32> to vector<2x64xf32>
    %54 = arith.addf %52, %53 : vector<2x64xf32>
    %55 = arith.negf %54 : vector<2x64xf32>
    %56 = math.exp %55 : vector<2x64xf32>
    %cst_32 = arith.constant 1.000000e+00 : f32
    %57 = vector.broadcast %cst_32 : f32 to vector<2x64xf32>
    %58 = arith.addf %57, %56 : vector<2x64xf32>
    %59 = arith.divf %57, %58 : vector<2x64xf32>
    %60 = vector.extract_strided_slice %59 {offsets = [0, 0], sizes = [2, 32], strides = [1, 1]} : vector<2x64xf32> to vector<2x32xf32>
    %61 = vector.extract_strided_slice %59 {offsets = [0, 32], sizes = [2, 32], strides = [1, 1]} : vector<2x64xf32> to vector<2x32xf32>
    %62 = vector.extract_strided_slice %51 {offsets = [0, 64], sizes = [2, 32], strides = [1, 1]} : vector<2x128xf32> to vector<2x32xf32>
    %63 = vector.extract_strided_slice %49 {offsets = [0, 64], sizes = [2, 32], strides = [1, 1]} : vector<2x128xf32> to vector<2x32xf32>
    %64 = arith.mulf %60, %63 : vector<2x32xf32>
    %65 = arith.addf %62, %64 : vector<2x32xf32>
    %66 = math.tanh %65 : vector<2x32xf32>
    %67 = arith.subf %43, %66 : vector<2x32xf32>
    %68 = arith.mulf %61, %67 : vector<2x32xf32>
    %69 = arith.addf %66, %68 : vector<2x32xf32>
    %c0_33 = arith.constant 0 : index
    %c1_34 = arith.constant 1 : index
    %c0_35 = arith.constant 0 : index
    %70 = vector.load %arg5[%c0_33, %c1_34, %c0_35] : memref<2x30x32xf32, #tpu.memory_space<vmem>>, vector<2x1x32xf32>
    %71 = vector.shape_cast %70 : vector<2x1x32xf32> to vector<2x32xf32>
    %72 = vector.shape_cast %69 : vector<2x32xf32> to vector<2x1x32xf32>
    tpu.vector_store %arg5[%c0_33, %c1_34, %c0_35], %72 {strides = array<i32>} : memref<2x30x32xf32, #tpu.memory_space<vmem>>, vector<2x1x32xf32>,
    %cst_36 = arith.constant dense<0.000000e+00> : vector<2x128xf32>
    %73 = tpu.matmul %69, %2, %cst_36 {dimension_numbers = #tpu.dot_dimension_numbers<[1], [0], [0], [1], [0, 0, 1, 1], [], []>} : vector<2x32xf32>, vector<32x128xf32>, vector<2x128xf32> -> vector<2x128xf32>
    %74 = vector.broadcast %3 : vector<1x128xf32> to vector<2x128xf32>
    %75 = arith.addf %73, %74 : vector<2x128xf32>
    %c0_37 = arith.constant 0 : index
    %c2 = arith.constant 2 : index
    %c0_38 = arith.constant 0 : index
    %76 = vector.load %arg6[%c0_37, %c2, %c0_38] : memref<2x30x128xf32, #tpu.memory_space<vmem>>, vector<2x1x128xf32>
    %77 = vector.shape_cast %76 : vector<2x1x128xf32> to vector<2x128xf32>
    %78 = vector.extract_strided_slice %77 {offsets = [0, 0], sizes = [2, 64], strides = [1, 1]} : vector<2x128xf32> to vector<2x64xf32>
    %79 = vector.extract_strided_slice %75 {offsets = [0, 0], sizes = [2, 64], strides = [1, 1]} : vector<2x128xf32> to vector<2x64xf32>
    %80 = arith.addf %78, %79 : vector<2x64xf32>
    %81 = arith.negf %80 : vector<2x64xf32>
    %82 = math.exp %81 : vector<2x64xf32>
    %cst_39 = arith.constant 1.000000e+00 : f32
    %83 = vector.broadcast %cst_39 : f32 to vector<2x64xf32>
    %84 = arith.addf %83, %82 : vector<2x64xf32>
    %85 = arith.divf %83, %84 : vector<2x64xf32>
    %86 = vector.extract_strided_slice %85 {offsets = [0, 0], sizes = [2, 32], strides = [1, 1]} : vector<2x64xf32> to vector<2x32xf32>
    %87 = vector.extract_strided_slice %85 {offsets = [0, 32], sizes = [2, 32], strides = [1, 1]} : vector<2x64xf32> to vector<2x32xf32>
    %88 = vector.extract_strided_slice %77 {offsets = [0, 64], sizes = [2, 32], strides = [1, 1]} : vector<2x128xf32> to vector<2x32xf32>
    %89 = vector.extract_strided_slice %75 {offsets = [0, 64], sizes = [2, 32], strides = [1, 1]} : vector<2x128xf32> to vector<2x32xf32>
    %90 = arith.mulf %86, %89 : vector<2x32xf32>
    %91 = arith.addf %88, %90 : vector<2x32xf32>
    %92 = math.tanh %91 : vector<2x32xf32>
    %93 = arith.subf %69, %92 : vector<2x32xf32>
    %94 = arith.mulf %87, %93 : vector<2x32xf32>
    %95 = arith.addf %92, %94 : vector<2x32xf32>
    %c0_40 = arith.constant 0 : index
    %c2_41 = arith.constant 2 : index
    %c0_42 = arith.constant 0 : index
    %96 = vector.load %arg5[%c0_40, %c2_41, %c0_42] : memref<2x30x32xf32, #tpu.memory_space<vmem>>, vector<2x1x32xf32>
    %97 = vector.shape_cast %96 : vector<2x1x32xf32> to vector<2x32xf32>
    %98 = vector.shape_cast %95 : vector<2x32xf32> to vector<2x1x32xf32>
    tpu.vector_store %arg5[%c0_40, %c2_41, %c0_42], %98 {strides = array<i32>} : memref<2x30x32xf32, #tpu.memory_space<vmem>>, vector<2x1x32xf32>,
    %cst_43 = arith.constant dense<0.000000e+00> : vector<2x128xf32>
    %99 = tpu.matmul %95, %2, %cst_43 {dimension_numbers = #tpu.dot_dimension_numbers<[1], [0], [0], [1], [0, 0, 1, 1], [], []>} : vector<2x32xf32>, vector<32x128xf32>, vector<2x128xf32> -> vector<2x128xf32>
    %100 = vector.broadcast %3 : vector<1x128xf32> to vector<2x128xf32>
    %101 = arith.addf %99, %100 : vector<2x128xf32>
    %c0_44 = arith.constant 0 : index
    %c3 = arith.constant 3 : index
    %c0_45 = arith.constant 0 : index
    %102 = vector.load %arg6[%c0_44, %c3, %c0_45] : memref<2x30x128xf32, #tpu.memory_space<vmem>>, vector<2x1x128xf32>
    %103 = vector.shape_cast %102 : vector<2x1x128xf32> to vector<2x128xf32>
    %104 = vector.extract_strided_slice %103 {offsets = [0, 0], sizes = [2, 64], strides = [1, 1]} : vector<2x128xf32> to vector<2x64xf32>
    %105 = vector.extract_strided_slice %101 {offsets = [0, 0], sizes = [2, 64], strides = [1, 1]} : vector<2x128xf32> to vector<2x64xf32>
    %106 = arith.addf %104, %105 : vector<2x64xf32>
    %107 = arith.negf %106 : vector<2x64xf32>
    %108 = math.exp %107 : vector<2x64xf32>
    %cst_46 = arith.constant 1.000000e+00 : f32
    %109 = vector.broadcast %cst_46 : f32 to vector<2x64xf32>
    %110 = arith.addf %109, %108 : vector<2x64xf32>
    %111 = arith.divf %109, %110 : vector<2x64xf32>
    %112 = vector.extract_strided_slice %111 {offsets = [0, 0], sizes = [2, 32], strides = [1, 1]} : vector<2x64xf32> to vector<2x32xf32>
    %113 = vector.extract_strided_slice %111 {offsets = [0, 32], sizes = [2, 32], strides = [1, 1]} : vector<2x64xf32> to vector<2x32xf32>
    %114 = vector.extract_strided_slice %103 {offsets = [0, 64], sizes = [2, 32], strides = [1, 1]} : vector<2x128xf32> to vector<2x32xf32>
    %115 = vector.extract_strided_slice %101 {offsets = [0, 64], sizes = [2, 32], strides = [1, 1]} : vector<2x128xf32> to vector<2x32xf32>
    %116 = arith.mulf %112, %115 : vector<2x32xf32>
    %117 = arith.addf %114, %116 : vector<2x32xf32>
    %118 = math.tanh %117 : vector<2x32xf32>
    %119 = arith.subf %95, %118 : vector<2x32xf32>
    %120 = arith.mulf %113, %119 : vector<2x32xf32>
    %121 = arith.addf %118, %120 : vector<2x32xf32>
    %c0_47 = arith.constant 0 : index
    %c3_48 = arith.constant 3 : index
    %c0_49 = arith.constant 0 : index
    %122 = vector.load %arg5[%c0_47, %c3_48, %c0_49] : memref<2x30x32xf32, #tpu.memory_space<vmem>>, vector<2x1x32xf32>
    %123 = vector.shape_cast %122 : vector<2x1x32xf32> to vector<2x32xf32>
    %124 = vector.shape_cast %121 : vector<2x32xf32> to vector<2x1x32xf32>
    tpu.vector_store %arg5[%c0_47, %c3_48, %c0_49], %124 {strides = array<i32>} : memref<2x30x32xf32, #tpu.memory_space<vmem>>, vector<2x1x32xf32>,
    %cst_50 = arith.constant dense<0.000000e+00> : vector<2x128xf32>
    %125 = tpu.matmul %121, %2, %cst_50 {dimension_numbers = #tpu.dot_dimension_numbers<[1], [0], [0], [1], [0, 0, 1, 1], [], []>} : vector<2x32xf32>, vector<32x128xf32>, vector<2x128xf32> -> vector<2x128xf32>
    %126 = vector.broadcast %3 : vector<1x128xf32> to vector<2x128xf32>
    %127 = arith.addf %125, %126 : vector<2x128xf32>
    %c0_51 = arith.constant 0 : index
    %c4 = arith.constant 4 : index
    %c0_52 = arith.constant 0 : index
    %128 = vector.load %arg6[%c0_51, %c4, %c0_52] : memref<2x30x128xf32, #tpu.memory_space<vmem>>, vector<2x1x128xf32>
    %129 = vector.shape_cast %128 : vector<2x1x128xf32> to vector<2x128xf32>
    %130 = vector.extract_strided_slice %129 {offsets = [0, 0], sizes = [2, 64], strides = [1, 1]} : vector<2x128xf32> to vector<2x64xf32>
    %131 = vector.extract_strided_slice %127 {offsets = [0, 0], sizes = [2, 64], strides = [1, 1]} : vector<2x128xf32> to vector<2x64xf32>
    %132 = arith.addf %130, %131 : vector<2x64xf32>
    %133 = arith.negf %132 : vector<2x64xf32>
    %134 = math.exp %133 : vector<2x64xf32>
    %cst_53 = arith.constant 1.000000e+00 : f32
    %135 = vector.broadcast %cst_53 : f32 to vector<2x64xf32>
    %136 = arith.addf %135, %134 : vector<2x64xf32>
    %137 = arith.divf %135, %136 : vector<2x64xf32>
    %138 = vector.extract_strided_slice %137 {offsets = [0, 0], sizes = [2, 32], strides = [1, 1]} : vector<2x64xf32> to vector<2x32xf32>
    %139 = vector.extract_strided_slice %137 {offsets = [0, 32], sizes = [2, 32], strides = [1, 1]} : vector<2x64xf32> to vector<2x32xf32>
    %140 = vector.extract_strided_slice %129 {offsets = [0, 64], sizes = [2, 32], strides = [1, 1]} : vector<2x128xf32> to vector<2x32xf32>
    %141 = vector.extract_strided_slice %127 {offsets = [0, 64], sizes = [2, 32], strides = [1, 1]} : vector<2x128xf32> to vector<2x32xf32>
    %142 = arith.mulf %138, %141 : vector<2x32xf32>
    %143 = arith.addf %140, %142 : vector<2x32xf32>
    %144 = math.tanh %143 : vector<2x32xf32>
    %145 = arith.subf %121, %144 : vector<2x32xf32>
    %146 = arith.mulf %139, %145 : vector<2x32xf32>
    %147 = arith.addf %144, %146 : vector<2x32xf32>
    %c0_54 = arith.constant 0 : index
    %c4_55 = arith.constant 4 : index
    %c0_56 = arith.constant 0 : index
    %148 = vector.load %arg5[%c0_54, %c4_55, %c0_56] : memref<2x30x32xf32, #tpu.memory_space<vmem>>, vector<2x1x32xf32>
    %149 = vector.shape_cast %148 : vector<2x1x32xf32> to vector<2x32xf32>
    %150 = vector.shape_cast %147 : vector<2x32xf32> to vector<2x1x32xf32>
    tpu.vector_store %arg5[%c0_54, %c4_55, %c0_56], %150 {strides = array<i32>} : memref<2x30x32xf32, #tpu.memory_space<vmem>>, vector<2x1x32xf32>,
    %cst_57 = arith.constant dense<0.000000e+00> : vector<2x128xf32>
    %151 = tpu.matmul %147, %2, %cst_57 {dimension_numbers = #tpu.dot_dimension_numbers<[1], [0], [0], [1], [0, 0, 1, 1], [], []>} : vector<2x32xf32>, vector<32x128xf32>, vector<2x128xf32> -> vector<2x128xf32>
    %152 = vector.broadcast %3 : vector<1x128xf32> to vector<2x128xf32>
    %153 = arith.addf %151, %152 : vector<2x128xf32>
    %c0_58 = arith.constant 0 : index
    %c5 = arith.constant 5 : index
    %c0_59 = arith.constant 0 : index
    %154 = vector.load %arg6[%c0_58, %c5, %c0_59] : memref<2x30x128xf32, #tpu.memory_space<vmem>>, vector<2x1x128xf32>
    %155 = vector.shape_cast %154 : vector<2x1x128xf32> to vector<2x128xf32>
    %156 = vector.extract_strided_slice %155 {offsets = [0, 0], sizes = [2, 64], strides = [1, 1]} : vector<2x128xf32> to vector<2x64xf32>
    %157 = vector.extract_strided_slice %153 {offsets = [0, 0], sizes = [2, 64], strides = [1, 1]} : vector<2x128xf32> to vector<2x64xf32>
    %158 = arith.addf %156, %157 : vector<2x64xf32>
    %159 = arith.negf %158 : vector<2x64xf32>
    %160 = math.exp %159 : vector<2x64xf32>
    %cst_60 = arith.constant 1.000000e+00 : f32
    %161 = vector.broadcast %cst_60 : f32 to vector<2x64xf32>
    %162 = arith.addf %161, %160 : vector<2x64xf32>
    %163 = arith.divf %161, %162 : vector<2x64xf32>
    %164 = vector.extract_strided_slice %163 {offsets = [0, 0], sizes = [2, 32], strides = [1, 1]} : vector<2x64xf32> to vector<2x32xf32>
    %165 = vector.extract_strided_slice %163 {offsets = [0, 32], sizes = [2, 32], strides = [1, 1]} : vector<2x64xf32> to vector<2x32xf32>
    %166 = vector.extract_strided_slice %155 {offsets = [0, 64], sizes = [2, 32], strides = [1, 1]} : vector<2x128xf32> to vector<2x32xf32>
    %167 = vector.extract_strided_slice %153 {offsets = [0, 64], sizes = [2, 32], strides = [1, 1]} : vector<2x128xf32> to vector<2x32xf32>
    %168 = arith.mulf %164, %167 : vector<2x32xf32>
    %169 = arith.addf %166, %168 : vector<2x32xf32>
    %170 = math.tanh %169 : vector<2x32xf32>
    %171 = arith.subf %147, %170 : vector<2x32xf32>
    %172 = arith.mulf %165, %171 : vector<2x32xf32>
    %173 = arith.addf %170, %172 : vector<2x32xf32>
    %c0_61 = arith.constant 0 : index
    %c5_62 = arith.constant 5 : index
    %c0_63 = arith.constant 0 : index
    %174 = vector.load %arg5[%c0_61, %c5_62, %c0_63] : memref<2x30x32xf32, #tpu.memory_space<vmem>>, vector<2x1x32xf32>
    %175 = vector.shape_cast %174 : vector<2x1x32xf32> to vector<2x32xf32>
    %176 = vector.shape_cast %173 : vector<2x32xf32> to vector<2x1x32xf32>
    tpu.vector_store %arg5[%c0_61, %c5_62, %c0_63], %176 {strides = array<i32>} : memref<2x30x32xf32, #tpu.memory_space<vmem>>, vector<2x1x32xf32>,
    %cst_64 = arith.constant dense<0.000000e+00> : vector<2x128xf32>
    %177 = tpu.matmul %173, %2, %cst_64 {dimension_numbers = #tpu.dot_dimension_numbers<[1], [0], [0], [1], [0, 0, 1, 1], [], []>} : vector<2x32xf32>, vector<32x128xf32>, vector<2x128xf32> -> vector<2x128xf32>
    %178 = vector.broadcast %3 : vector<1x128xf32> to vector<2x128xf32>
    %179 = arith.addf %177, %178 : vector<2x128xf32>
    %c0_65 = arith.constant 0 : index
    %c6 = arith.constant 6 : index
    %c0_66 = arith.constant 0 : index
    %180 = vector.load %arg6[%c0_65, %c6, %c0_66] : memref<2x30x128xf32, #tpu.memory_space<vmem>>, vector<2x1x128xf32>
    %181 = vector.shape_cast %180 : vector<2x1x128xf32> to vector<2x128xf32>
    %182 = vector.extract_strided_slice %181 {offsets = [0, 0], sizes = [2, 64], strides = [1, 1]} : vector<2x128xf32> to vector<2x64xf32>
    %183 = vector.extract_strided_slice %179 {offsets = [0, 0], sizes = [2, 64], strides = [1, 1]} : vector<2x128xf32> to vector<2x64xf32>
    %184 = arith.addf %182, %183 : vector<2x64xf32>
    %185 = arith.negf %184 : vector<2x64xf32>
    %186 = math.exp %185 : vector<2x64xf32>
    %cst_67 = arith.constant 1.000000e+00 : f32
    %187 = vector.broadcast %cst_67 : f32 to vector<2x64xf32>
    %188 = arith.addf %187, %186 : vector<2x64xf32>
    %189 = arith.divf %187, %188 : vector<2x64xf32>
    %190 = vector.extract_strided_slice %189 {offsets = [0, 0], sizes = [2, 32], strides = [1, 1]} : vector<2x64xf32> to vector<2x32xf32>
    %191 = vector.extract_strided_slice %189 {offsets = [0, 32], sizes = [2, 32], strides = [1, 1]} : vector<2x64xf32> to vector<2x32xf32>
    %192 = vector.extract_strided_slice %181 {offsets = [0, 64], sizes = [2, 32], strides = [1, 1]} : vector<2x128xf32> to vector<2x32xf32>
    %193 = vector.extract_strided_slice %179 {offsets = [0, 64], sizes = [2, 32], strides = [1, 1]} : vector<2x128xf32> to vector<2x32xf32>
    %194 = arith.mulf %190, %193 : vector<2x32xf32>
    %195 = arith.addf %192, %194 : vector<2x32xf32>
    %196 = math.tanh %195 : vector<2x32xf32>
    %197 = arith.subf %173, %196 : vector<2x32xf32>
    %198 = arith.mulf %191, %197 : vector<2x32xf32>
    %199 = arith.addf %196, %198 : vector<2x32xf32>
    %c0_68 = arith.constant 0 : index
    %c6_69 = arith.constant 6 : index
    %c0_70 = arith.constant 0 : index
    %200 = vector.load %arg5[%c0_68, %c6_69, %c0_70] : memref<2x30x32xf32, #tpu.memory_space<vmem>>, vector<2x1x32xf32>
    %201 = vector.shape_cast %200 : vector<2x1x32xf32> to vector<2x32xf32>
    %202 = vector.shape_cast %199 : vector<2x32xf32> to vector<2x1x32xf32>
    tpu.vector_store %arg5[%c0_68, %c6_69, %c0_70], %202 {strides = array<i32>} : memref<2x30x32xf32, #tpu.memory_space<vmem>>, vector<2x1x32xf32>,
    %cst_71 = arith.constant dense<0.000000e+00> : vector<2x128xf32>
    %203 = tpu.matmul %199, %2, %cst_71 {dimension_numbers = #tpu.dot_dimension_numbers<[1], [0], [0], [1], [0, 0, 1, 1], [], []>} : vector<2x32xf32>, vector<32x128xf32>, vector<2x128xf32> -> vector<2x128xf32>
    %204 = vector.broadcast %3 : vector<1x128xf32> to vector<2x128xf32>
    %205 = arith.addf %203, %204 : vector<2x128xf32>
    %c0_72 = arith.constant 0 : index
    %c7 = arith.constant 7 : index
    %c0_73 = arith.constant 0 : index
    %206 = vector.load %arg6[%c0_72, %c7, %c0_73] : memref<2x30x128xf32, #tpu.memory_space<vmem>>, vector<2x1x128xf32>
    %207 = vector.shape_cast %206 : vector<2x1x128xf32> to vector<2x128xf32>
    %208 = vector.extract_strided_slice %207 {offsets = [0, 0], sizes = [2, 64], strides = [1, 1]} : vector<2x128xf32> to vector<2x64xf32>
    %209 = vector.extract_strided_slice %205 {offsets = [0, 0], sizes = [2, 64], strides = [1, 1]} : vector<2x128xf32> to vector<2x64xf32>
    %210 = arith.addf %208, %209 : vector<2x64xf32>
    %211 = arith.negf %210 : vector<2x64xf32>
    %212 = math.exp %211 : vector<2x64xf32>
    %cst_74 = arith.constant 1.000000e+00 : f32
    %213 = vector.broadcast %cst_74 : f32 to vector<2x64xf32>
    %214 = arith.addf %213, %212 : vector<2x64xf32>
    %215 = arith.divf %213, %214 : vector<2x64xf32>
    %216 = vector.extract_strided_slice %215 {offsets = [0, 0], sizes = [2, 32], strides = [1, 1]} : vector<2x64xf32> to vector<2x32xf32>
    %217 = vector.extract_strided_slice %215 {offsets = [0, 32], sizes = [2, 32], strides = [1, 1]} : vector<2x64xf32> to vector<2x32xf32>
    %218 = vector.extract_strided_slice %207 {offsets = [0, 64], sizes = [2, 32], strides = [1, 1]} : vector<2x128xf32> to vector<2x32xf32>
    %219 = vector.extract_strided_slice %205 {offsets = [0, 64], sizes = [2, 32], strides = [1, 1]} : vector<2x128xf32> to vector<2x32xf32>
    %220 = arith.mulf %216, %219 : vector<2x32xf32>
    %221 = arith.addf %218, %220 : vector<2x32xf32>
    %222 = math.tanh %221 : vector<2x32xf32>
    %223 = arith.subf %199, %222 : vector<2x32xf32>
    %224 = arith.mulf %217, %223 : vector<2x32xf32>
    %225 = arith.addf %222, %224 : vector<2x32xf32>
    %c0_75 = arith.constant 0 : index
    %c7_76 = arith.constant 7 : index
    %c0_77 = arith.constant 0 : index
    %226 = vector.load %arg5[%c0_75, %c7_76, %c0_77] : memref<2x30x32xf32, #tpu.memory_space<vmem>>, vector<2x1x32xf32>
    %227 = vector.shape_cast %226 : vector<2x1x32xf32> to vector<2x32xf32>
    %228 = vector.shape_cast %225 : vector<2x32xf32> to vector<2x1x32xf32>
    tpu.vector_store %arg5[%c0_75, %c7_76, %c0_77], %228 {strides = array<i32>} : memref<2x30x32xf32, #tpu.memory_space<vmem>>, vector<2x1x32xf32>,
    %cst_78 = arith.constant dense<0.000000e+00> : vector<2x128xf32>
    %229 = tpu.matmul %225, %2, %cst_78 {dimension_numbers = #tpu.dot_dimension_numbers<[1], [0], [0], [1], [0, 0, 1, 1], [], []>} : vector<2x32xf32>, vector<32x128xf32>, vector<2x128xf32> -> vector<2x128xf32>
    %230 = vector.broadcast %3 : vector<1x128xf32> to vector<2x128xf32>
    %231 = arith.addf %229, %230 : vector<2x128xf32>
    %c0_79 = arith.constant 0 : index
    %c8 = arith.constant 8 : index
    %c0_80 = arith.constant 0 : index
    %232 = vector.load %arg6[%c0_79, %c8, %c0_80] : memref<2x30x128xf32, #tpu.memory_space<vmem>>, vector<2x1x128xf32>
    %233 = vector.shape_cast %232 : vector<2x1x128xf32> to vector<2x128xf32>
    %234 = vector.extract_strided_slice %233 {offsets = [0, 0], sizes = [2, 64], strides = [1, 1]} : vector<2x128xf32> to vector<2x64xf32>
    %235 = vector.extract_strided_slice %231 {offsets = [0, 0], sizes = [2, 64], strides = [1, 1]} : vector<2x128xf32> to vector<2x64xf32>
    %236 = arith.addf %234, %235 : vector<2x64xf32>
    %237 = arith.negf %236 : vector<2x64xf32>
    %238 = math.exp %237 : vector<2x64xf32>
    %cst_81 = arith.constant 1.000000e+00 : f32
    %239 = vector.broadcast %cst_81 : f32 to vector<2x64xf32>
    %240 = arith.addf %239, %238 : vector<2x64xf32>
    %241 = arith.divf %239, %240 : vector<2x64xf32>
    %242 = vector.extract_strided_slice %241 {offsets = [0, 0], sizes = [2, 32], strides = [1, 1]} : vector<2x64xf32> to vector<2x32xf32>
    %243 = vector.extract_strided_slice %241 {offsets = [0, 32], sizes = [2, 32], strides = [1, 1]} : vector<2x64xf32> to vector<2x32xf32>
    %244 = vector.extract_strided_slice %233 {offsets = [0, 64], sizes = [2, 32], strides = [1, 1]} : vector<2x128xf32> to vector<2x32xf32>
    %245 = vector.extract_strided_slice %231 {offsets = [0, 64], sizes = [2, 32], strides = [1, 1]} : vector<2x128xf32> to vector<2x32xf32>
    %246 = arith.mulf %242, %245 : vector<2x32xf32>
    %247 = arith.addf %244, %246 : vector<2x32xf32>
    %248 = math.tanh %247 : vector<2x32xf32>
    %249 = arith.subf %225, %248 : vector<2x32xf32>
    %250 = arith.mulf %243, %249 : vector<2x32xf32>
    %251 = arith.addf %248, %250 : vector<2x32xf32>
    %c0_82 = arith.constant 0 : index
    %c8_83 = arith.constant 8 : index
    %c0_84 = arith.constant 0 : index
    %252 = vector.load %arg5[%c0_82, %c8_83, %c0_84] : memref<2x30x32xf32, #tpu.memory_space<vmem>>, vector<2x1x32xf32>
    %253 = vector.shape_cast %252 : vector<2x1x32xf32> to vector<2x32xf32>
    %254 = vector.shape_cast %251 : vector<2x32xf32> to vector<2x1x32xf32>
    tpu.vector_store %arg5[%c0_82, %c8_83, %c0_84], %254 {strides = array<i32>} : memref<2x30x32xf32, #tpu.memory_space<vmem>>, vector<2x1x32xf32>,
    %cst_85 = arith.constant dense<0.000000e+00> : vector<2x128xf32>
    %255 = tpu.matmul %251, %2, %cst_85 {dimension_numbers = #tpu.dot_dimension_numbers<[1], [0], [0], [1], [0, 0, 1, 1], [], []>} : vector<2x32xf32>, vector<32x128xf32>, vector<2x128xf32> -> vector<2x128xf32>
    %256 = vector.broadcast %3 : vector<1x128xf32> to vector<2x128xf32>
    %257 = arith.addf %255, %256 : vector<2x128xf32>
    %c0_86 = arith.constant 0 : index
    %c9 = arith.constant 9 : index
    %c0_87 = arith.constant 0 : index
    %258 = vector.load %arg6[%c0_86, %c9, %c0_87] : memref<2x30x128xf32, #tpu.memory_space<vmem>>, vector<2x1x128xf32>
    %259 = vector.shape_cast %258 : vector<2x1x128xf32> to vector<2x128xf32>
    %260 = vector.extract_strided_slice %259 {offsets = [0, 0], sizes = [2, 64], strides = [1, 1]} : vector<2x128xf32> to vector<2x64xf32>
    %261 = vector.extract_strided_slice %257 {offsets = [0, 0], sizes = [2, 64], strides = [1, 1]} : vector<2x128xf32> to vector<2x64xf32>
    %262 = arith.addf %260, %261 : vector<2x64xf32>
    %263 = arith.negf %262 : vector<2x64xf32>
    %264 = math.exp %263 : vector<2x64xf32>
    %cst_88 = arith.constant 1.000000e+00 : f32
    %265 = vector.broadcast %cst_88 : f32 to vector<2x64xf32>
    %266 = arith.addf %265, %264 : vector<2x64xf32>
    %267 = arith.divf %265, %266 : vector<2x64xf32>
    %268 = vector.extract_strided_slice %267 {offsets = [0, 0], sizes = [2, 32], strides = [1, 1]} : vector<2x64xf32> to vector<2x32xf32>
    %269 = vector.extract_strided_slice %267 {offsets = [0, 32], sizes = [2, 32], strides = [1, 1]} : vector<2x64xf32> to vector<2x32xf32>
    %270 = vector.extract_strided_slice %259 {offsets = [0, 64], sizes = [2, 32], strides = [1, 1]} : vector<2x128xf32> to vector<2x32xf32>
    %271 = vector.extract_strided_slice %257 {offsets = [0, 64], sizes = [2, 32], strides = [1, 1]} : vector<2x128xf32> to vector<2x32xf32>
    %272 = arith.mulf %268, %271 : vector<2x32xf32>
    %273 = arith.addf %270, %272 : vector<2x32xf32>
    %274 = math.tanh %273 : vector<2x32xf32>
    %275 = arith.subf %251, %274 : vector<2x32xf32>
    %276 = arith.mulf %269, %275 : vector<2x32xf32>
    %277 = arith.addf %274, %276 : vector<2x32xf32>
    %c0_89 = arith.constant 0 : index
    %c9_90 = arith.constant 9 : index
    %c0_91 = arith.constant 0 : index
    %278 = vector.load %arg5[%c0_89, %c9_90, %c0_91] : memref<2x30x32xf32, #tpu.memory_space<vmem>>, vector<2x1x32xf32>
    %279 = vector.shape_cast %278 : vector<2x1x32xf32> to vector<2x32xf32>
    %280 = vector.shape_cast %277 : vector<2x32xf32> to vector<2x1x32xf32>
    tpu.vector_store %arg5[%c0_89, %c9_90, %c0_91], %280 {strides = array<i32>} : memref<2x30x32xf32, #tpu.memory_space<vmem>>, vector<2x1x32xf32>,
    %cst_92 = arith.constant dense<0.000000e+00> : vector<2x128xf32>
    %281 = tpu.matmul %277, %2, %cst_92 {dimension_numbers = #tpu.dot_dimension_numbers<[1], [0], [0], [1], [0, 0, 1, 1], [], []>} : vector<2x32xf32>, vector<32x128xf32>, vector<2x128xf32> -> vector<2x128xf32>
    %282 = vector.broadcast %3 : vector<1x128xf32> to vector<2x128xf32>
    %283 = arith.addf %281, %282 : vector<2x128xf32>
    %c0_93 = arith.constant 0 : index
    %c10 = arith.constant 10 : index
    %c0_94 = arith.constant 0 : index
    %284 = vector.load %arg6[%c0_93, %c10, %c0_94] : memref<2x30x128xf32, #tpu.memory_space<vmem>>, vector<2x1x128xf32>
    %285 = vector.shape_cast %284 : vector<2x1x128xf32> to vector<2x128xf32>
    %286 = vector.extract_strided_slice %285 {offsets = [0, 0], sizes = [2, 64], strides = [1, 1]} : vector<2x128xf32> to vector<2x64xf32>
    %287 = vector.extract_strided_slice %283 {offsets = [0, 0], sizes = [2, 64], strides = [1, 1]} : vector<2x128xf32> to vector<2x64xf32>
    %288 = arith.addf %286, %287 : vector<2x64xf32>
    %289 = arith.negf %288 : vector<2x64xf32>
    %290 = math.exp %289 : vector<2x64xf32>
    %cst_95 = arith.constant 1.000000e+00 : f32
    %291 = vector.broadcast %cst_95 : f32 to vector<2x64xf32>
    %292 = arith.addf %291, %290 : vector<2x64xf32>
    %293 = arith.divf %291, %292 : vector<2x64xf32>
    %294 = vector.extract_strided_slice %293 {offsets = [0, 0], sizes = [2, 32], strides = [1, 1]} : vector<2x64xf32> to vector<2x32xf32>
    %295 = vector.extract_strided_slice %293 {offsets = [0, 32], sizes = [2, 32], strides = [1, 1]} : vector<2x64xf32> to vector<2x32xf32>
    %296 = vector.extract_strided_slice %285 {offsets = [0, 64], sizes = [2, 32], strides = [1, 1]} : vector<2x128xf32> to vector<2x32xf32>
    %297 = vector.extract_strided_slice %283 {offsets = [0, 64], sizes = [2, 32], strides = [1, 1]} : vector<2x128xf32> to vector<2x32xf32>
    %298 = arith.mulf %294, %297 : vector<2x32xf32>
    %299 = arith.addf %296, %298 : vector<2x32xf32>
    %300 = math.tanh %299 : vector<2x32xf32>
    %301 = arith.subf %277, %300 : vector<2x32xf32>
    %302 = arith.mulf %295, %301 : vector<2x32xf32>
    %303 = arith.addf %300, %302 : vector<2x32xf32>
    %c0_96 = arith.constant 0 : index
    %c10_97 = arith.constant 10 : index
    %c0_98 = arith.constant 0 : index
    %304 = vector.load %arg5[%c0_96, %c10_97, %c0_98] : memref<2x30x32xf32, #tpu.memory_space<vmem>>, vector<2x1x32xf32>
    %305 = vector.shape_cast %304 : vector<2x1x32xf32> to vector<2x32xf32>
    %306 = vector.shape_cast %303 : vector<2x32xf32> to vector<2x1x32xf32>
    tpu.vector_store %arg5[%c0_96, %c10_97, %c0_98], %306 {strides = array<i32>} : memref<2x30x32xf32, #tpu.memory_space<vmem>>, vector<2x1x32xf32>,
    %cst_99 = arith.constant dense<0.000000e+00> : vector<2x128xf32>
    %307 = tpu.matmul %303, %2, %cst_99 {dimension_numbers = #tpu.dot_dimension_numbers<[1], [0], [0], [1], [0, 0, 1, 1], [], []>} : vector<2x32xf32>, vector<32x128xf32>, vector<2x128xf32> -> vector<2x128xf32>
    %308 = vector.broadcast %3 : vector<1x128xf32> to vector<2x128xf32>
    %309 = arith.addf %307, %308 : vector<2x128xf32>
    %c0_100 = arith.constant 0 : index
    %c11 = arith.constant 11 : index
    %c0_101 = arith.constant 0 : index
    %310 = vector.load %arg6[%c0_100, %c11, %c0_101] : memref<2x30x128xf32, #tpu.memory_space<vmem>>, vector<2x1x128xf32>
    %311 = vector.shape_cast %310 : vector<2x1x128xf32> to vector<2x128xf32>
    %312 = vector.extract_strided_slice %311 {offsets = [0, 0], sizes = [2, 64], strides = [1, 1]} : vector<2x128xf32> to vector<2x64xf32>
    %313 = vector.extract_strided_slice %309 {offsets = [0, 0], sizes = [2, 64], strides = [1, 1]} : vector<2x128xf32> to vector<2x64xf32>
    %314 = arith.addf %312, %313 : vector<2x64xf32>
    %315 = arith.negf %314 : vector<2x64xf32>
    %316 = math.exp %315 : vector<2x64xf32>
    %cst_102 = arith.constant 1.000000e+00 : f32
    %317 = vector.broadcast %cst_102 : f32 to vector<2x64xf32>
    %318 = arith.addf %317, %316 : vector<2x64xf32>
    %319 = arith.divf %317, %318 : vector<2x64xf32>
    %320 = vector.extract_strided_slice %319 {offsets = [0, 0], sizes = [2, 32], strides = [1, 1]} : vector<2x64xf32> to vector<2x32xf32>
    %321 = vector.extract_strided_slice %319 {offsets = [0, 32], sizes = [2, 32], strides = [1, 1]} : vector<2x64xf32> to vector<2x32xf32>
    %322 = vector.extract_strided_slice %311 {offsets = [0, 64], sizes = [2, 32], strides = [1, 1]} : vector<2x128xf32> to vector<2x32xf32>
    %323 = vector.extract_strided_slice %309 {offsets = [0, 64], sizes = [2, 32], strides = [1, 1]} : vector<2x128xf32> to vector<2x32xf32>
    %324 = arith.mulf %320, %323 : vector<2x32xf32>
    %325 = arith.addf %322, %324 : vector<2x32xf32>
    %326 = math.tanh %325 : vector<2x32xf32>
    %327 = arith.subf %303, %326 : vector<2x32xf32>
    %328 = arith.mulf %321, %327 : vector<2x32xf32>
    %329 = arith.addf %326, %328 : vector<2x32xf32>
    %c0_103 = arith.constant 0 : index
    %c11_104 = arith.constant 11 : index
    %c0_105 = arith.constant 0 : index
    %330 = vector.load %arg5[%c0_103, %c11_104, %c0_105] : memref<2x30x32xf32, #tpu.memory_space<vmem>>, vector<2x1x32xf32>
    %331 = vector.shape_cast %330 : vector<2x1x32xf32> to vector<2x32xf32>
    %332 = vector.shape_cast %329 : vector<2x32xf32> to vector<2x1x32xf32>
    tpu.vector_store %arg5[%c0_103, %c11_104, %c0_105], %332 {strides = array<i32>} : memref<2x30x32xf32, #tpu.memory_space<vmem>>, vector<2x1x32xf32>,
    %cst_106 = arith.constant dense<0.000000e+00> : vector<2x128xf32>
    %333 = tpu.matmul %329, %2, %cst_106 {dimension_numbers = #tpu.dot_dimension_numbers<[1], [0], [0], [1], [0, 0, 1, 1], [], []>} : vector<2x32xf32>, vector<32x128xf32>, vector<2x128xf32> -> vector<2x128xf32>
    %334 = vector.broadcast %3 : vector<1x128xf32> to vector<2x128xf32>
    %335 = arith.addf %333, %334 : vector<2x128xf32>
    %c0_107 = arith.constant 0 : index
    %c12 = arith.constant 12 : index
    %c0_108 = arith.constant 0 : index
    %336 = vector.load %arg6[%c0_107, %c12, %c0_108] : memref<2x30x128xf32, #tpu.memory_space<vmem>>, vector<2x1x128xf32>
    %337 = vector.shape_cast %336 : vector<2x1x128xf32> to vector<2x128xf32>
    %338 = vector.extract_strided_slice %337 {offsets = [0, 0], sizes = [2, 64], strides = [1, 1]} : vector<2x128xf32> to vector<2x64xf32>
    %339 = vector.extract_strided_slice %335 {offsets = [0, 0], sizes = [2, 64], strides = [1, 1]} : vector<2x128xf32> to vector<2x64xf32>
    %340 = arith.addf %338, %339 : vector<2x64xf32>
    %341 = arith.negf %340 : vector<2x64xf32>
    %342 = math.exp %341 : vector<2x64xf32>
    %cst_109 = arith.constant 1.000000e+00 : f32
    %343 = vector.broadcast %cst_109 : f32 to vector<2x64xf32>
    %344 = arith.addf %343, %342 : vector<2x64xf32>
    %345 = arith.divf %343, %344 : vector<2x64xf32>
    %346 = vector.extract_strided_slice %345 {offsets = [0, 0], sizes = [2, 32], strides = [1, 1]} : vector<2x64xf32> to vector<2x32xf32>
    %347 = vector.extract_strided_slice %345 {offsets = [0, 32], sizes = [2, 32], strides = [1, 1]} : vector<2x64xf32> to vector<2x32xf32>
    %348 = vector.extract_strided_slice %337 {offsets = [0, 64], sizes = [2, 32], strides = [1, 1]} : vector<2x128xf32> to vector<2x32xf32>
    %349 = vector.extract_strided_slice %335 {offsets = [0, 64], sizes = [2, 32], strides = [1, 1]} : vector<2x128xf32> to vector<2x32xf32>
    %350 = arith.mulf %346, %349 : vector<2x32xf32>
    %351 = arith.addf %348, %350 : vector<2x32xf32>
    %352 = math.tanh %351 : vector<2x32xf32>
    %353 = arith.subf %329, %352 : vector<2x32xf32>
    %354 = arith.mulf %347, %353 : vector<2x32xf32>
    %355 = arith.addf %352, %354 : vector<2x32xf32>
    %c0_110 = arith.constant 0 : index
    %c12_111 = arith.constant 12 : index
    %c0_112 = arith.constant 0 : index
    %356 = vector.load %arg5[%c0_110, %c12_111, %c0_112] : memref<2x30x32xf32, #tpu.memory_space<vmem>>, vector<2x1x32xf32>
    %357 = vector.shape_cast %356 : vector<2x1x32xf32> to vector<2x32xf32>
    %358 = vector.shape_cast %355 : vector<2x32xf32> to vector<2x1x32xf32>
    tpu.vector_store %arg5[%c0_110, %c12_111, %c0_112], %358 {strides = array<i32>} : memref<2x30x32xf32, #tpu.memory_space<vmem>>, vector<2x1x32xf32>,
    %cst_113 = arith.constant dense<0.000000e+00> : vector<2x128xf32>
    %359 = tpu.matmul %355, %2, %cst_113 {dimension_numbers = #tpu.dot_dimension_numbers<[1], [0], [0], [1], [0, 0, 1, 1], [], []>} : vector<2x32xf32>, vector<32x128xf32>, vector<2x128xf32> -> vector<2x128xf32>
    %360 = vector.broadcast %3 : vector<1x128xf32> to vector<2x128xf32>
    %361 = arith.addf %359, %360 : vector<2x128xf32>
    %c0_114 = arith.constant 0 : index
    %c13 = arith.constant 13 : index
    %c0_115 = arith.constant 0 : index
    %362 = vector.load %arg6[%c0_114, %c13, %c0_115] : memref<2x30x128xf32, #tpu.memory_space<vmem>>, vector<2x1x128xf32>
    %363 = vector.shape_cast %362 : vector<2x1x128xf32> to vector<2x128xf32>
    %364 = vector.extract_strided_slice %363 {offsets = [0, 0], sizes = [2, 64], strides = [1, 1]} : vector<2x128xf32> to vector<2x64xf32>
    %365 = vector.extract_strided_slice %361 {offsets = [0, 0], sizes = [2, 64], strides = [1, 1]} : vector<2x128xf32> to vector<2x64xf32>
    %366 = arith.addf %364, %365 : vector<2x64xf32>
    %367 = arith.negf %366 : vector<2x64xf32>
    %368 = math.exp %367 : vector<2x64xf32>
    %cst_116 = arith.constant 1.000000e+00 : f32
    %369 = vector.broadcast %cst_116 : f32 to vector<2x64xf32>
    %370 = arith.addf %369, %368 : vector<2x64xf32>
    %371 = arith.divf %369, %370 : vector<2x64xf32>
    %372 = vector.extract_strided_slice %371 {offsets = [0, 0], sizes = [2, 32], strides = [1, 1]} : vector<2x64xf32> to vector<2x32xf32>
    %373 = vector.extract_strided_slice %371 {offsets = [0, 32], sizes = [2, 32], strides = [1, 1]} : vector<2x64xf32> to vector<2x32xf32>
    %374 = vector.extract_strided_slice %363 {offsets = [0, 64], sizes = [2, 32], strides = [1, 1]} : vector<2x128xf32> to vector<2x32xf32>
    %375 = vector.extract_strided_slice %361 {offsets = [0, 64], sizes = [2, 32], strides = [1, 1]} : vector<2x128xf32> to vector<2x32xf32>
    %376 = arith.mulf %372, %375 : vector<2x32xf32>
    %377 = arith.addf %374, %376 : vector<2x32xf32>
    %378 = math.tanh %377 : vector<2x32xf32>
    %379 = arith.subf %355, %378 : vector<2x32xf32>
    %380 = arith.mulf %373, %379 : vector<2x32xf32>
    %381 = arith.addf %378, %380 : vector<2x32xf32>
    %c0_117 = arith.constant 0 : index
    %c13_118 = arith.constant 13 : index
    %c0_119 = arith.constant 0 : index
    %382 = vector.load %arg5[%c0_117, %c13_118, %c0_119] : memref<2x30x32xf32, #tpu.memory_space<vmem>>, vector<2x1x32xf32>
    %383 = vector.shape_cast %382 : vector<2x1x32xf32> to vector<2x32xf32>
    %384 = vector.shape_cast %381 : vector<2x32xf32> to vector<2x1x32xf32>
    tpu.vector_store %arg5[%c0_117, %c13_118, %c0_119], %384 {strides = array<i32>} : memref<2x30x32xf32, #tpu.memory_space<vmem>>, vector<2x1x32xf32>,
    %cst_120 = arith.constant dense<0.000000e+00> : vector<2x128xf32>
    %385 = tpu.matmul %381, %2, %cst_120 {dimension_numbers = #tpu.dot_dimension_numbers<[1], [0], [0], [1], [0, 0, 1, 1], [], []>} : vector<2x32xf32>, vector<32x128xf32>, vector<2x128xf32> -> vector<2x128xf32>
    %386 = vector.broadcast %3 : vector<1x128xf32> to vector<2x128xf32>
    %387 = arith.addf %385, %386 : vector<2x128xf32>
    %c0_121 = arith.constant 0 : index
    %c14 = arith.constant 14 : index
    %c0_122 = arith.constant 0 : index
    %388 = vector.load %arg6[%c0_121, %c14, %c0_122] : memref<2x30x128xf32, #tpu.memory_space<vmem>>, vector<2x1x128xf32>
    %389 = vector.shape_cast %388 : vector<2x1x128xf32> to vector<2x128xf32>
    %390 = vector.extract_strided_slice %389 {offsets = [0, 0], sizes = [2, 64], strides = [1, 1]} : vector<2x128xf32> to vector<2x64xf32>
    %391 = vector.extract_strided_slice %387 {offsets = [0, 0], sizes = [2, 64], strides = [1, 1]} : vector<2x128xf32> to vector<2x64xf32>
    %392 = arith.addf %390, %391 : vector<2x64xf32>
    %393 = arith.negf %392 : vector<2x64xf32>
    %394 = math.exp %393 : vector<2x64xf32>
    %cst_123 = arith.constant 1.000000e+00 : f32
    %395 = vector.broadcast %cst_123 : f32 to vector<2x64xf32>
    %396 = arith.addf %395, %394 : vector<2x64xf32>
    %397 = arith.divf %395, %396 : vector<2x64xf32>
    %398 = vector.extract_strided_slice %397 {offsets = [0, 0], sizes = [2, 32], strides = [1, 1]} : vector<2x64xf32> to vector<2x32xf32>
    %399 = vector.extract_strided_slice %397 {offsets = [0, 32], sizes = [2, 32], strides = [1, 1]} : vector<2x64xf32> to vector<2x32xf32>
    %400 = vector.extract_strided_slice %389 {offsets = [0, 64], sizes = [2, 32], strides = [1, 1]} : vector<2x128xf32> to vector<2x32xf32>
    %401 = vector.extract_strided_slice %387 {offsets = [0, 64], sizes = [2, 32], strides = [1, 1]} : vector<2x128xf32> to vector<2x32xf32>
    %402 = arith.mulf %398, %401 : vector<2x32xf32>
    %403 = arith.addf %400, %402 : vector<2x32xf32>
    %404 = math.tanh %403 : vector<2x32xf32>
    %405 = arith.subf %381, %404 : vector<2x32xf32>
    %406 = arith.mulf %399, %405 : vector<2x32xf32>
    %407 = arith.addf %404, %406 : vector<2x32xf32>
    %c0_124 = arith.constant 0 : index
    %c14_125 = arith.constant 14 : index
    %c0_126 = arith.constant 0 : index
    %408 = vector.load %arg5[%c0_124, %c14_125, %c0_126] : memref<2x30x32xf32, #tpu.memory_space<vmem>>, vector<2x1x32xf32>
    %409 = vector.shape_cast %408 : vector<2x1x32xf32> to vector<2x32xf32>
    %410 = vector.shape_cast %407 : vector<2x32xf32> to vector<2x1x32xf32>
    tpu.vector_store %arg5[%c0_124, %c14_125, %c0_126], %410 {strides = array<i32>} : memref<2x30x32xf32, #tpu.memory_space<vmem>>, vector<2x1x32xf32>,
    %cst_127 = arith.constant dense<0.000000e+00> : vector<2x128xf32>
    %411 = tpu.matmul %407, %2, %cst_127 {dimension_numbers = #tpu.dot_dimension_numbers<[1], [0], [0], [1], [0, 0, 1, 1], [], []>} : vector<2x32xf32>, vector<32x128xf32>, vector<2x128xf32> -> vector<2x128xf32>
    %412 = vector.broadcast %3 : vector<1x128xf32> to vector<2x128xf32>
    %413 = arith.addf %411, %412 : vector<2x128xf32>
    %c0_128 = arith.constant 0 : index
    %c15 = arith.constant 15 : index
    %c0_129 = arith.constant 0 : index
    %414 = vector.load %arg6[%c0_128, %c15, %c0_129] : memref<2x30x128xf32, #tpu.memory_space<vmem>>, vector<2x1x128xf32>
    %415 = vector.shape_cast %414 : vector<2x1x128xf32> to vector<2x128xf32>
    %416 = vector.extract_strided_slice %415 {offsets = [0, 0], sizes = [2, 64], strides = [1, 1]} : vector<2x128xf32> to vector<2x64xf32>
    %417 = vector.extract_strided_slice %413 {offsets = [0, 0], sizes = [2, 64], strides = [1, 1]} : vector<2x128xf32> to vector<2x64xf32>
    %418 = arith.addf %416, %417 : vector<2x64xf32>
    %419 = arith.negf %418 : vector<2x64xf32>
    %420 = math.exp %419 : vector<2x64xf32>
    %cst_130 = arith.constant 1.000000e+00 : f32
    %421 = vector.broadcast %cst_130 : f32 to vector<2x64xf32>
    %422 = arith.addf %421, %420 : vector<2x64xf32>
    %423 = arith.divf %421, %422 : vector<2x64xf32>
    %424 = vector.extract_strided_slice %423 {offsets = [0, 0], sizes = [2, 32], strides = [1, 1]} : vector<2x64xf32> to vector<2x32xf32>
    %425 = vector.extract_strided_slice %423 {offsets = [0, 32], sizes = [2, 32], strides = [1, 1]} : vector<2x64xf32> to vector<2x32xf32>
    %426 = vector.extract_strided_slice %415 {offsets = [0, 64], sizes = [2, 32], strides = [1, 1]} : vector<2x128xf32> to vector<2x32xf32>
    %427 = vector.extract_strided_slice %413 {offsets = [0, 64], sizes = [2, 32], strides = [1, 1]} : vector<2x128xf32> to vector<2x32xf32>
    %428 = arith.mulf %424, %427 : vector<2x32xf32>
    %429 = arith.addf %426, %428 : vector<2x32xf32>
    %430 = math.tanh %429 : vector<2x32xf32>
    %431 = arith.subf %407, %430 : vector<2x32xf32>
    %432 = arith.mulf %425, %431 : vector<2x32xf32>
    %433 = arith.addf %430, %432 : vector<2x32xf32>
    %c0_131 = arith.constant 0 : index
    %c15_132 = arith.constant 15 : index
    %c0_133 = arith.constant 0 : index
    %434 = vector.load %arg5[%c0_131, %c15_132, %c0_133] : memref<2x30x32xf32, #tpu.memory_space<vmem>>, vector<2x1x32xf32>
    %435 = vector.shape_cast %434 : vector<2x1x32xf32> to vector<2x32xf32>
    %436 = vector.shape_cast %433 : vector<2x32xf32> to vector<2x1x32xf32>
    tpu.vector_store %arg5[%c0_131, %c15_132, %c0_133], %436 {strides = array<i32>} : memref<2x30x32xf32, #tpu.memory_space<vmem>>, vector<2x1x32xf32>,
    %cst_134 = arith.constant dense<0.000000e+00> : vector<2x128xf32>
    %437 = tpu.matmul %433, %2, %cst_134 {dimension_numbers = #tpu.dot_dimension_numbers<[1], [0], [0], [1], [0, 0, 1, 1], [], []>} : vector<2x32xf32>, vector<32x128xf32>, vector<2x128xf32> -> vector<2x128xf32>
    %438 = vector.broadcast %3 : vector<1x128xf32> to vector<2x128xf32>
    %439 = arith.addf %437, %438 : vector<2x128xf32>
    %c0_135 = arith.constant 0 : index
    %c16 = arith.constant 16 : index
    %c0_136 = arith.constant 0 : index
    %440 = vector.load %arg6[%c0_135, %c16, %c0_136] : memref<2x30x128xf32, #tpu.memory_space<vmem>>, vector<2x1x128xf32>
    %441 = vector.shape_cast %440 : vector<2x1x128xf32> to vector<2x128xf32>
    %442 = vector.extract_strided_slice %441 {offsets = [0, 0], sizes = [2, 64], strides = [1, 1]} : vector<2x128xf32> to vector<2x64xf32>
    %443 = vector.extract_strided_slice %439 {offsets = [0, 0], sizes = [2, 64], strides = [1, 1]} : vector<2x128xf32> to vector<2x64xf32>
    %444 = arith.addf %442, %443 : vector<2x64xf32>
    %445 = arith.negf %444 : vector<2x64xf32>
    %446 = math.exp %445 : vector<2x64xf32>
    %cst_137 = arith.constant 1.000000e+00 : f32
    %447 = vector.broadcast %cst_137 : f32 to vector<2x64xf32>
    %448 = arith.addf %447, %446 : vector<2x64xf32>
    %449 = arith.divf %447, %448 : vector<2x64xf32>
    %450 = vector.extract_strided_slice %449 {offsets = [0, 0], sizes = [2, 32], strides = [1, 1]} : vector<2x64xf32> to vector<2x32xf32>
    %451 = vector.extract_strided_slice %449 {offsets = [0, 32], sizes = [2, 32], strides = [1, 1]} : vector<2x64xf32> to vector<2x32xf32>
    %452 = vector.extract_strided_slice %441 {offsets = [0, 64], sizes = [2, 32], strides = [1, 1]} : vector<2x128xf32> to vector<2x32xf32>
    %453 = vector.extract_strided_slice %439 {offsets = [0, 64], sizes = [2, 32], strides = [1, 1]} : vector<2x128xf32> to vector<2x32xf32>
    %454 = arith.mulf %450, %453 : vector<2x32xf32>
    %455 = arith.addf %452, %454 : vector<2x32xf32>
    %456 = math.tanh %455 : vector<2x32xf32>
    %457 = arith.subf %433, %456 : vector<2x32xf32>
    %458 = arith.mulf %451, %457 : vector<2x32xf32>
    %459 = arith.addf %456, %458 : vector<2x32xf32>
    %c0_138 = arith.constant 0 : index
    %c16_139 = arith.constant 16 : index
    %c0_140 = arith.constant 0 : index
    %460 = vector.load %arg5[%c0_138, %c16_139, %c0_140] : memref<2x30x32xf32, #tpu.memory_space<vmem>>, vector<2x1x32xf32>
    %461 = vector.shape_cast %460 : vector<2x1x32xf32> to vector<2x32xf32>
    %462 = vector.shape_cast %459 : vector<2x32xf32> to vector<2x1x32xf32>
    tpu.vector_store %arg5[%c0_138, %c16_139, %c0_140], %462 {strides = array<i32>} : memref<2x30x32xf32, #tpu.memory_space<vmem>>, vector<2x1x32xf32>,
    %cst_141 = arith.constant dense<0.000000e+00> : vector<2x128xf32>
    %463 = tpu.matmul %459, %2, %cst_141 {dimension_numbers = #tpu.dot_dimension_numbers<[1], [0], [0], [1], [0, 0, 1, 1], [], []>} : vector<2x32xf32>, vector<32x128xf32>, vector<2x128xf32> -> vector<2x128xf32>
    %464 = vector.broadcast %3 : vector<1x128xf32> to vector<2x128xf32>
    %465 = arith.addf %463, %464 : vector<2x128xf32>
    %c0_142 = arith.constant 0 : index
    %c17 = arith.constant 17 : index
    %c0_143 = arith.constant 0 : index
    %466 = vector.load %arg6[%c0_142, %c17, %c0_143] : memref<2x30x128xf32, #tpu.memory_space<vmem>>, vector<2x1x128xf32>
    %467 = vector.shape_cast %466 : vector<2x1x128xf32> to vector<2x128xf32>
    %468 = vector.extract_strided_slice %467 {offsets = [0, 0], sizes = [2, 64], strides = [1, 1]} : vector<2x128xf32> to vector<2x64xf32>
    %469 = vector.extract_strided_slice %465 {offsets = [0, 0], sizes = [2, 64], strides = [1, 1]} : vector<2x128xf32> to vector<2x64xf32>
    %470 = arith.addf %468, %469 : vector<2x64xf32>
    %471 = arith.negf %470 : vector<2x64xf32>
    %472 = math.exp %471 : vector<2x64xf32>
    %cst_144 = arith.constant 1.000000e+00 : f32
    %473 = vector.broadcast %cst_144 : f32 to vector<2x64xf32>
    %474 = arith.addf %473, %472 : vector<2x64xf32>
    %475 = arith.divf %473, %474 : vector<2x64xf32>
    %476 = vector.extract_strided_slice %475 {offsets = [0, 0], sizes = [2, 32], strides = [1, 1]} : vector<2x64xf32> to vector<2x32xf32>
    %477 = vector.extract_strided_slice %475 {offsets = [0, 32], sizes = [2, 32], strides = [1, 1]} : vector<2x64xf32> to vector<2x32xf32>
    %478 = vector.extract_strided_slice %467 {offsets = [0, 64], sizes = [2, 32], strides = [1, 1]} : vector<2x128xf32> to vector<2x32xf32>
    %479 = vector.extract_strided_slice %465 {offsets = [0, 64], sizes = [2, 32], strides = [1, 1]} : vector<2x128xf32> to vector<2x32xf32>
    %480 = arith.mulf %476, %479 : vector<2x32xf32>
    %481 = arith.addf %478, %480 : vector<2x32xf32>
    %482 = math.tanh %481 : vector<2x32xf32>
    %483 = arith.subf %459, %482 : vector<2x32xf32>
    %484 = arith.mulf %477, %483 : vector<2x32xf32>
    %485 = arith.addf %482, %484 : vector<2x32xf32>
    %c0_145 = arith.constant 0 : index
    %c17_146 = arith.constant 17 : index
    %c0_147 = arith.constant 0 : index
    %486 = vector.load %arg5[%c0_145, %c17_146, %c0_147] : memref<2x30x32xf32, #tpu.memory_space<vmem>>, vector<2x1x32xf32>
    %487 = vector.shape_cast %486 : vector<2x1x32xf32> to vector<2x32xf32>
    %488 = vector.shape_cast %485 : vector<2x32xf32> to vector<2x1x32xf32>
    tpu.vector_store %arg5[%c0_145, %c17_146, %c0_147], %488 {strides = array<i32>} : memref<2x30x32xf32, #tpu.memory_space<vmem>>, vector<2x1x32xf32>,
    %cst_148 = arith.constant dense<0.000000e+00> : vector<2x128xf32>
    %489 = tpu.matmul %485, %2, %cst_148 {dimension_numbers = #tpu.dot_dimension_numbers<[1], [0], [0], [1], [0, 0, 1, 1], [], []>} : vector<2x32xf32>, vector<32x128xf32>, vector<2x128xf32> -> vector<2x128xf32>
    %490 = vector.broadcast %3 : vector<1x128xf32> to vector<2x128xf32>
    %491 = arith.addf %489, %490 : vector<2x128xf32>
    %c0_149 = arith.constant 0 : index
    %c18 = arith.constant 18 : index
    %c0_150 = arith.constant 0 : index
    %492 = vector.load %arg6[%c0_149, %c18, %c0_150] : memref<2x30x128xf32, #tpu.memory_space<vmem>>, vector<2x1x128xf32>
    %493 = vector.shape_cast %492 : vector<2x1x128xf32> to vector<2x128xf32>
    %494 = vector.extract_strided_slice %493 {offsets = [0, 0], sizes = [2, 64], strides = [1, 1]} : vector<2x128xf32> to vector<2x64xf32>
    %495 = vector.extract_strided_slice %491 {offsets = [0, 0], sizes = [2, 64], strides = [1, 1]} : vector<2x128xf32> to vector<2x64xf32>
    %496 = arith.addf %494, %495 : vector<2x64xf32>
    %497 = arith.negf %496 : vector<2x64xf32>
    %498 = math.exp %497 : vector<2x64xf32>
    %cst_151 = arith.constant 1.000000e+00 : f32
    %499 = vector.broadcast %cst_151 : f32 to vector<2x64xf32>
    %500 = arith.addf %499, %498 : vector<2x64xf32>
    %501 = arith.divf %499, %500 : vector<2x64xf32>
    %502 = vector.extract_strided_slice %501 {offsets = [0, 0], sizes = [2, 32], strides = [1, 1]} : vector<2x64xf32> to vector<2x32xf32>
    %503 = vector.extract_strided_slice %501 {offsets = [0, 32], sizes = [2, 32], strides = [1, 1]} : vector<2x64xf32> to vector<2x32xf32>
    %504 = vector.extract_strided_slice %493 {offsets = [0, 64], sizes = [2, 32], strides = [1, 1]} : vector<2x128xf32> to vector<2x32xf32>
    %505 = vector.extract_strided_slice %491 {offsets = [0, 64], sizes = [2, 32], strides = [1, 1]} : vector<2x128xf32> to vector<2x32xf32>
    %506 = arith.mulf %502, %505 : vector<2x32xf32>
    %507 = arith.addf %504, %506 : vector<2x32xf32>
    %508 = math.tanh %507 : vector<2x32xf32>
    %509 = arith.subf %485, %508 : vector<2x32xf32>
    %510 = arith.mulf %503, %509 : vector<2x32xf32>
    %511 = arith.addf %508, %510 : vector<2x32xf32>
    %c0_152 = arith.constant 0 : index
    %c18_153 = arith.constant 18 : index
    %c0_154 = arith.constant 0 : index
    %512 = vector.load %arg5[%c0_152, %c18_153, %c0_154] : memref<2x30x32xf32, #tpu.memory_space<vmem>>, vector<2x1x32xf32>
    %513 = vector.shape_cast %512 : vector<2x1x32xf32> to vector<2x32xf32>
    %514 = vector.shape_cast %511 : vector<2x32xf32> to vector<2x1x32xf32>
    tpu.vector_store %arg5[%c0_152, %c18_153, %c0_154], %514 {strides = array<i32>} : memref<2x30x32xf32, #tpu.memory_space<vmem>>, vector<2x1x32xf32>,
    %cst_155 = arith.constant dense<0.000000e+00> : vector<2x128xf32>
    %515 = tpu.matmul %511, %2, %cst_155 {dimension_numbers = #tpu.dot_dimension_numbers<[1], [0], [0], [1], [0, 0, 1, 1], [], []>} : vector<2x32xf32>, vector<32x128xf32>, vector<2x128xf32> -> vector<2x128xf32>
    %516 = vector.broadcast %3 : vector<1x128xf32> to vector<2x128xf32>
    %517 = arith.addf %515, %516 : vector<2x128xf32>
    %c0_156 = arith.constant 0 : index
    %c19 = arith.constant 19 : index
    %c0_157 = arith.constant 0 : index
    %518 = vector.load %arg6[%c0_156, %c19, %c0_157] : memref<2x30x128xf32, #tpu.memory_space<vmem>>, vector<2x1x128xf32>
    %519 = vector.shape_cast %518 : vector<2x1x128xf32> to vector<2x128xf32>
    %520 = vector.extract_strided_slice %519 {offsets = [0, 0], sizes = [2, 64], strides = [1, 1]} : vector<2x128xf32> to vector<2x64xf32>
    %521 = vector.extract_strided_slice %517 {offsets = [0, 0], sizes = [2, 64], strides = [1, 1]} : vector<2x128xf32> to vector<2x64xf32>
    %522 = arith.addf %520, %521 : vector<2x64xf32>
    %523 = arith.negf %522 : vector<2x64xf32>
    %524 = math.exp %523 : vector<2x64xf32>
    %cst_158 = arith.constant 1.000000e+00 : f32
    %525 = vector.broadcast %cst_158 : f32 to vector<2x64xf32>
    %526 = arith.addf %525, %524 : vector<2x64xf32>
    %527 = arith.divf %525, %526 : vector<2x64xf32>
    %528 = vector.extract_strided_slice %527 {offsets = [0, 0], sizes = [2, 32], strides = [1, 1]} : vector<2x64xf32> to vector<2x32xf32>
    %529 = vector.extract_strided_slice %527 {offsets = [0, 32], sizes = [2, 32], strides = [1, 1]} : vector<2x64xf32> to vector<2x32xf32>
    %530 = vector.extract_strided_slice %519 {offsets = [0, 64], sizes = [2, 32], strides = [1, 1]} : vector<2x128xf32> to vector<2x32xf32>
    %531 = vector.extract_strided_slice %517 {offsets = [0, 64], sizes = [2, 32], strides = [1, 1]} : vector<2x128xf32> to vector<2x32xf32>
    %532 = arith.mulf %528, %531 : vector<2x32xf32>
    %533 = arith.addf %530, %532 : vector<2x32xf32>
    %534 = math.tanh %533 : vector<2x32xf32>
    %535 = arith.subf %511, %534 : vector<2x32xf32>
    %536 = arith.mulf %529, %535 : vector<2x32xf32>
    %537 = arith.addf %534, %536 : vector<2x32xf32>
    %c0_159 = arith.constant 0 : index
    %c19_160 = arith.constant 19 : index
    %c0_161 = arith.constant 0 : index
    %538 = vector.load %arg5[%c0_159, %c19_160, %c0_161] : memref<2x30x32xf32, #tpu.memory_space<vmem>>, vector<2x1x32xf32>
    %539 = vector.shape_cast %538 : vector<2x1x32xf32> to vector<2x32xf32>
    %540 = vector.shape_cast %537 : vector<2x32xf32> to vector<2x1x32xf32>
    tpu.vector_store %arg5[%c0_159, %c19_160, %c0_161], %540 {strides = array<i32>} : memref<2x30x32xf32, #tpu.memory_space<vmem>>, vector<2x1x32xf32>,
    %cst_162 = arith.constant dense<0.000000e+00> : vector<2x128xf32>
    %541 = tpu.matmul %537, %2, %cst_162 {dimension_numbers = #tpu.dot_dimension_numbers<[1], [0], [0], [1], [0, 0, 1, 1], [], []>} : vector<2x32xf32>, vector<32x128xf32>, vector<2x128xf32> -> vector<2x128xf32>
    %542 = vector.broadcast %3 : vector<1x128xf32> to vector<2x128xf32>
    %543 = arith.addf %541, %542 : vector<2x128xf32>
    %c0_163 = arith.constant 0 : index
    %c20 = arith.constant 20 : index
    %c0_164 = arith.constant 0 : index
    %544 = vector.load %arg6[%c0_163, %c20, %c0_164] : memref<2x30x128xf32, #tpu.memory_space<vmem>>, vector<2x1x128xf32>
    %545 = vector.shape_cast %544 : vector<2x1x128xf32> to vector<2x128xf32>
    %546 = vector.extract_strided_slice %545 {offsets = [0, 0], sizes = [2, 64], strides = [1, 1]} : vector<2x128xf32> to vector<2x64xf32>
    %547 = vector.extract_strided_slice %543 {offsets = [0, 0], sizes = [2, 64], strides = [1, 1]} : vector<2x128xf32> to vector<2x64xf32>
    %548 = arith.addf %546, %547 : vector<2x64xf32>
    %549 = arith.negf %548 : vector<2x64xf32>
    %550 = math.exp %549 : vector<2x64xf32>
    %cst_165 = arith.constant 1.000000e+00 : f32
    %551 = vector.broadcast %cst_165 : f32 to vector<2x64xf32>
    %552 = arith.addf %551, %550 : vector<2x64xf32>
    %553 = arith.divf %551, %552 : vector<2x64xf32>
    %554 = vector.extract_strided_slice %553 {offsets = [0, 0], sizes = [2, 32], strides = [1, 1]} : vector<2x64xf32> to vector<2x32xf32>
    %555 = vector.extract_strided_slice %553 {offsets = [0, 32], sizes = [2, 32], strides = [1, 1]} : vector<2x64xf32> to vector<2x32xf32>
    %556 = vector.extract_strided_slice %545 {offsets = [0, 64], sizes = [2, 32], strides = [1, 1]} : vector<2x128xf32> to vector<2x32xf32>
    %557 = vector.extract_strided_slice %543 {offsets = [0, 64], sizes = [2, 32], strides = [1, 1]} : vector<2x128xf32> to vector<2x32xf32>
    %558 = arith.mulf %554, %557 : vector<2x32xf32>
    %559 = arith.addf %556, %558 : vector<2x32xf32>
    %560 = math.tanh %559 : vector<2x32xf32>
    %561 = arith.subf %537, %560 : vector<2x32xf32>
    %562 = arith.mulf %555, %561 : vector<2x32xf32>
    %563 = arith.addf %560, %562 : vector<2x32xf32>
    %c0_166 = arith.constant 0 : index
    %c20_167 = arith.constant 20 : index
    %c0_168 = arith.constant 0 : index
    %564 = vector.load %arg5[%c0_166, %c20_167, %c0_168] : memref<2x30x32xf32, #tpu.memory_space<vmem>>, vector<2x1x32xf32>
    %565 = vector.shape_cast %564 : vector<2x1x32xf32> to vector<2x32xf32>
    %566 = vector.shape_cast %563 : vector<2x32xf32> to vector<2x1x32xf32>
    tpu.vector_store %arg5[%c0_166, %c20_167, %c0_168], %566 {strides = array<i32>} : memref<2x30x32xf32, #tpu.memory_space<vmem>>, vector<2x1x32xf32>,
    %cst_169 = arith.constant dense<0.000000e+00> : vector<2x128xf32>
    %567 = tpu.matmul %563, %2, %cst_169 {dimension_numbers = #tpu.dot_dimension_numbers<[1], [0], [0], [1], [0, 0, 1, 1], [], []>} : vector<2x32xf32>, vector<32x128xf32>, vector<2x128xf32> -> vector<2x128xf32>
    %568 = vector.broadcast %3 : vector<1x128xf32> to vector<2x128xf32>
    %569 = arith.addf %567, %568 : vector<2x128xf32>
    %c0_170 = arith.constant 0 : index
    %c21 = arith.constant 21 : index
    %c0_171 = arith.constant 0 : index
    %570 = vector.load %arg6[%c0_170, %c21, %c0_171] : memref<2x30x128xf32, #tpu.memory_space<vmem>>, vector<2x1x128xf32>
    %571 = vector.shape_cast %570 : vector<2x1x128xf32> to vector<2x128xf32>
    %572 = vector.extract_strided_slice %571 {offsets = [0, 0], sizes = [2, 64], strides = [1, 1]} : vector<2x128xf32> to vector<2x64xf32>
    %573 = vector.extract_strided_slice %569 {offsets = [0, 0], sizes = [2, 64], strides = [1, 1]} : vector<2x128xf32> to vector<2x64xf32>
    %574 = arith.addf %572, %573 : vector<2x64xf32>
    %575 = arith.negf %574 : vector<2x64xf32>
    %576 = math.exp %575 : vector<2x64xf32>
    %cst_172 = arith.constant 1.000000e+00 : f32
    %577 = vector.broadcast %cst_172 : f32 to vector<2x64xf32>
    %578 = arith.addf %577, %576 : vector<2x64xf32>
    %579 = arith.divf %577, %578 : vector<2x64xf32>
    %580 = vector.extract_strided_slice %579 {offsets = [0, 0], sizes = [2, 32], strides = [1, 1]} : vector<2x64xf32> to vector<2x32xf32>
    %581 = vector.extract_strided_slice %579 {offsets = [0, 32], sizes = [2, 32], strides = [1, 1]} : vector<2x64xf32> to vector<2x32xf32>
    %582 = vector.extract_strided_slice %571 {offsets = [0, 64], sizes = [2, 32], strides = [1, 1]} : vector<2x128xf32> to vector<2x32xf32>
    %583 = vector.extract_strided_slice %569 {offsets = [0, 64], sizes = [2, 32], strides = [1, 1]} : vector<2x128xf32> to vector<2x32xf32>
    %584 = arith.mulf %580, %583 : vector<2x32xf32>
    %585 = arith.addf %582, %584 : vector<2x32xf32>
    %586 = math.tanh %585 : vector<2x32xf32>
    %587 = arith.subf %563, %586 : vector<2x32xf32>
    %588 = arith.mulf %581, %587 : vector<2x32xf32>
    %589 = arith.addf %586, %588 : vector<2x32xf32>
    %c0_173 = arith.constant 0 : index
    %c21_174 = arith.constant 21 : index
    %c0_175 = arith.constant 0 : index
    %590 = vector.load %arg5[%c0_173, %c21_174, %c0_175] : memref<2x30x32xf32, #tpu.memory_space<vmem>>, vector<2x1x32xf32>
    %591 = vector.shape_cast %590 : vector<2x1x32xf32> to vector<2x32xf32>
    %592 = vector.shape_cast %589 : vector<2x32xf32> to vector<2x1x32xf32>
    tpu.vector_store %arg5[%c0_173, %c21_174, %c0_175], %592 {strides = array<i32>} : memref<2x30x32xf32, #tpu.memory_space<vmem>>, vector<2x1x32xf32>,
    %cst_176 = arith.constant dense<0.000000e+00> : vector<2x128xf32>
    %593 = tpu.matmul %589, %2, %cst_176 {dimension_numbers = #tpu.dot_dimension_numbers<[1], [0], [0], [1], [0, 0, 1, 1], [], []>} : vector<2x32xf32>, vector<32x128xf32>, vector<2x128xf32> -> vector<2x128xf32>
    %594 = vector.broadcast %3 : vector<1x128xf32> to vector<2x128xf32>
    %595 = arith.addf %593, %594 : vector<2x128xf32>
    %c0_177 = arith.constant 0 : index
    %c22 = arith.constant 22 : index
    %c0_178 = arith.constant 0 : index
    %596 = vector.load %arg6[%c0_177, %c22, %c0_178] : memref<2x30x128xf32, #tpu.memory_space<vmem>>, vector<2x1x128xf32>
    %597 = vector.shape_cast %596 : vector<2x1x128xf32> to vector<2x128xf32>
    %598 = vector.extract_strided_slice %597 {offsets = [0, 0], sizes = [2, 64], strides = [1, 1]} : vector<2x128xf32> to vector<2x64xf32>
    %599 = vector.extract_strided_slice %595 {offsets = [0, 0], sizes = [2, 64], strides = [1, 1]} : vector<2x128xf32> to vector<2x64xf32>
    %600 = arith.addf %598, %599 : vector<2x64xf32>
    %601 = arith.negf %600 : vector<2x64xf32>
    %602 = math.exp %601 : vector<2x64xf32>
    %cst_179 = arith.constant 1.000000e+00 : f32
    %603 = vector.broadcast %cst_179 : f32 to vector<2x64xf32>
    %604 = arith.addf %603, %602 : vector<2x64xf32>
    %605 = arith.divf %603, %604 : vector<2x64xf32>
    %606 = vector.extract_strided_slice %605 {offsets = [0, 0], sizes = [2, 32], strides = [1, 1]} : vector<2x64xf32> to vector<2x32xf32>
    %607 = vector.extract_strided_slice %605 {offsets = [0, 32], sizes = [2, 32], strides = [1, 1]} : vector<2x64xf32> to vector<2x32xf32>
    %608 = vector.extract_strided_slice %597 {offsets = [0, 64], sizes = [2, 32], strides = [1, 1]} : vector<2x128xf32> to vector<2x32xf32>
    %609 = vector.extract_strided_slice %595 {offsets = [0, 64], sizes = [2, 32], strides = [1, 1]} : vector<2x128xf32> to vector<2x32xf32>
    %610 = arith.mulf %606, %609 : vector<2x32xf32>
    %611 = arith.addf %608, %610 : vector<2x32xf32>
    %612 = math.tanh %611 : vector<2x32xf32>
    %613 = arith.subf %589, %612 : vector<2x32xf32>
    %614 = arith.mulf %607, %613 : vector<2x32xf32>
    %615 = arith.addf %612, %614 : vector<2x32xf32>
    %c0_180 = arith.constant 0 : index
    %c22_181 = arith.constant 22 : index
    %c0_182 = arith.constant 0 : index
    %616 = vector.load %arg5[%c0_180, %c22_181, %c0_182] : memref<2x30x32xf32, #tpu.memory_space<vmem>>, vector<2x1x32xf32>
    %617 = vector.shape_cast %616 : vector<2x1x32xf32> to vector<2x32xf32>
    %618 = vector.shape_cast %615 : vector<2x32xf32> to vector<2x1x32xf32>
    tpu.vector_store %arg5[%c0_180, %c22_181, %c0_182], %618 {strides = array<i32>} : memref<2x30x32xf32, #tpu.memory_space<vmem>>, vector<2x1x32xf32>,
    %cst_183 = arith.constant dense<0.000000e+00> : vector<2x128xf32>
    %619 = tpu.matmul %615, %2, %cst_183 {dimension_numbers = #tpu.dot_dimension_numbers<[1], [0], [0], [1], [0, 0, 1, 1], [], []>} : vector<2x32xf32>, vector<32x128xf32>, vector<2x128xf32> -> vector<2x128xf32>
    %620 = vector.broadcast %3 : vector<1x128xf32> to vector<2x128xf32>
    %621 = arith.addf %619, %620 : vector<2x128xf32>
    %c0_184 = arith.constant 0 : index
    %c23 = arith.constant 23 : index
    %c0_185 = arith.constant 0 : index
    %622 = vector.load %arg6[%c0_184, %c23, %c0_185] : memref<2x30x128xf32, #tpu.memory_space<vmem>>, vector<2x1x128xf32>
    %623 = vector.shape_cast %622 : vector<2x1x128xf32> to vector<2x128xf32>
    %624 = vector.extract_strided_slice %623 {offsets = [0, 0], sizes = [2, 64], strides = [1, 1]} : vector<2x128xf32> to vector<2x64xf32>
    %625 = vector.extract_strided_slice %621 {offsets = [0, 0], sizes = [2, 64], strides = [1, 1]} : vector<2x128xf32> to vector<2x64xf32>
    %626 = arith.addf %624, %625 : vector<2x64xf32>
    %627 = arith.negf %626 : vector<2x64xf32>
    %628 = math.exp %627 : vector<2x64xf32>
    %cst_186 = arith.constant 1.000000e+00 : f32
    %629 = vector.broadcast %cst_186 : f32 to vector<2x64xf32>
    %630 = arith.addf %629, %628 : vector<2x64xf32>
    %631 = arith.divf %629, %630 : vector<2x64xf32>
    %632 = vector.extract_strided_slice %631 {offsets = [0, 0], sizes = [2, 32], strides = [1, 1]} : vector<2x64xf32> to vector<2x32xf32>
    %633 = vector.extract_strided_slice %631 {offsets = [0, 32], sizes = [2, 32], strides = [1, 1]} : vector<2x64xf32> to vector<2x32xf32>
    %634 = vector.extract_strided_slice %623 {offsets = [0, 64], sizes = [2, 32], strides = [1, 1]} : vector<2x128xf32> to vector<2x32xf32>
    %635 = vector.extract_strided_slice %621 {offsets = [0, 64], sizes = [2, 32], strides = [1, 1]} : vector<2x128xf32> to vector<2x32xf32>
    %636 = arith.mulf %632, %635 : vector<2x32xf32>
    %637 = arith.addf %634, %636 : vector<2x32xf32>
    %638 = math.tanh %637 : vector<2x32xf32>
    %639 = arith.subf %615, %638 : vector<2x32xf32>
    %640 = arith.mulf %633, %639 : vector<2x32xf32>
    %641 = arith.addf %638, %640 : vector<2x32xf32>
    %c0_187 = arith.constant 0 : index
    %c23_188 = arith.constant 23 : index
    %c0_189 = arith.constant 0 : index
    %642 = vector.load %arg5[%c0_187, %c23_188, %c0_189] : memref<2x30x32xf32, #tpu.memory_space<vmem>>, vector<2x1x32xf32>
    %643 = vector.shape_cast %642 : vector<2x1x32xf32> to vector<2x32xf32>
    %644 = vector.shape_cast %641 : vector<2x32xf32> to vector<2x1x32xf32>
    tpu.vector_store %arg5[%c0_187, %c23_188, %c0_189], %644 {strides = array<i32>} : memref<2x30x32xf32, #tpu.memory_space<vmem>>, vector<2x1x32xf32>,
    %cst_190 = arith.constant dense<0.000000e+00> : vector<2x128xf32>
    %645 = tpu.matmul %641, %2, %cst_190 {dimension_numbers = #tpu.dot_dimension_numbers<[1], [0], [0], [1], [0, 0, 1, 1], [], []>} : vector<2x32xf32>, vector<32x128xf32>, vector<2x128xf32> -> vector<2x128xf32>
    %646 = vector.broadcast %3 : vector<1x128xf32> to vector<2x128xf32>
    %647 = arith.addf %645, %646 : vector<2x128xf32>
    %c0_191 = arith.constant 0 : index
    %c24 = arith.constant 24 : index
    %c0_192 = arith.constant 0 : index
    %648 = vector.load %arg6[%c0_191, %c24, %c0_192] : memref<2x30x128xf32, #tpu.memory_space<vmem>>, vector<2x1x128xf32>
    %649 = vector.shape_cast %648 : vector<2x1x128xf32> to vector<2x128xf32>
    %650 = vector.extract_strided_slice %649 {offsets = [0, 0], sizes = [2, 64], strides = [1, 1]} : vector<2x128xf32> to vector<2x64xf32>
    %651 = vector.extract_strided_slice %647 {offsets = [0, 0], sizes = [2, 64], strides = [1, 1]} : vector<2x128xf32> to vector<2x64xf32>
    %652 = arith.addf %650, %651 : vector<2x64xf32>
    %653 = arith.negf %652 : vector<2x64xf32>
    %654 = math.exp %653 : vector<2x64xf32>
    %cst_193 = arith.constant 1.000000e+00 : f32
    %655 = vector.broadcast %cst_193 : f32 to vector<2x64xf32>
    %656 = arith.addf %655, %654 : vector<2x64xf32>
    %657 = arith.divf %655, %656 : vector<2x64xf32>
    %658 = vector.extract_strided_slice %657 {offsets = [0, 0], sizes = [2, 32], strides = [1, 1]} : vector<2x64xf32> to vector<2x32xf32>
    %659 = vector.extract_strided_slice %657 {offsets = [0, 32], sizes = [2, 32], strides = [1, 1]} : vector<2x64xf32> to vector<2x32xf32>
    %660 = vector.extract_strided_slice %649 {offsets = [0, 64], sizes = [2, 32], strides = [1, 1]} : vector<2x128xf32> to vector<2x32xf32>
    %661 = vector.extract_strided_slice %647 {offsets = [0, 64], sizes = [2, 32], strides = [1, 1]} : vector<2x128xf32> to vector<2x32xf32>
    %662 = arith.mulf %658, %661 : vector<2x32xf32>
    %663 = arith.addf %660, %662 : vector<2x32xf32>
    %664 = math.tanh %663 : vector<2x32xf32>
    %665 = arith.subf %641, %664 : vector<2x32xf32>
    %666 = arith.mulf %659, %665 : vector<2x32xf32>
    %667 = arith.addf %664, %666 : vector<2x32xf32>
    %c0_194 = arith.constant 0 : index
    %c24_195 = arith.constant 24 : index
    %c0_196 = arith.constant 0 : index
    %668 = vector.load %arg5[%c0_194, %c24_195, %c0_196] : memref<2x30x32xf32, #tpu.memory_space<vmem>>, vector<2x1x32xf32>
    %669 = vector.shape_cast %668 : vector<2x1x32xf32> to vector<2x32xf32>
    %670 = vector.shape_cast %667 : vector<2x32xf32> to vector<2x1x32xf32>
    tpu.vector_store %arg5[%c0_194, %c24_195, %c0_196], %670 {strides = array<i32>} : memref<2x30x32xf32, #tpu.memory_space<vmem>>, vector<2x1x32xf32>,
    %cst_197 = arith.constant dense<0.000000e+00> : vector<2x128xf32>
    %671 = tpu.matmul %667, %2, %cst_197 {dimension_numbers = #tpu.dot_dimension_numbers<[1], [0], [0], [1], [0, 0, 1, 1], [], []>} : vector<2x32xf32>, vector<32x128xf32>, vector<2x128xf32> -> vector<2x128xf32>
    %672 = vector.broadcast %3 : vector<1x128xf32> to vector<2x128xf32>
    %673 = arith.addf %671, %672 : vector<2x128xf32>
    %c0_198 = arith.constant 0 : index
    %c25 = arith.constant 25 : index
    %c0_199 = arith.constant 0 : index
    %674 = vector.load %arg6[%c0_198, %c25, %c0_199] : memref<2x30x128xf32, #tpu.memory_space<vmem>>, vector<2x1x128xf32>
    %675 = vector.shape_cast %674 : vector<2x1x128xf32> to vector<2x128xf32>
    %676 = vector.extract_strided_slice %675 {offsets = [0, 0], sizes = [2, 64], strides = [1, 1]} : vector<2x128xf32> to vector<2x64xf32>
    %677 = vector.extract_strided_slice %673 {offsets = [0, 0], sizes = [2, 64], strides = [1, 1]} : vector<2x128xf32> to vector<2x64xf32>
    %678 = arith.addf %676, %677 : vector<2x64xf32>
    %679 = arith.negf %678 : vector<2x64xf32>
    %680 = math.exp %679 : vector<2x64xf32>
    %cst_200 = arith.constant 1.000000e+00 : f32
    %681 = vector.broadcast %cst_200 : f32 to vector<2x64xf32>
    %682 = arith.addf %681, %680 : vector<2x64xf32>
    %683 = arith.divf %681, %682 : vector<2x64xf32>
    %684 = vector.extract_strided_slice %683 {offsets = [0, 0], sizes = [2, 32], strides = [1, 1]} : vector<2x64xf32> to vector<2x32xf32>
    %685 = vector.extract_strided_slice %683 {offsets = [0, 32], sizes = [2, 32], strides = [1, 1]} : vector<2x64xf32> to vector<2x32xf32>
    %686 = vector.extract_strided_slice %675 {offsets = [0, 64], sizes = [2, 32], strides = [1, 1]} : vector<2x128xf32> to vector<2x32xf32>
    %687 = vector.extract_strided_slice %673 {offsets = [0, 64], sizes = [2, 32], strides = [1, 1]} : vector<2x128xf32> to vector<2x32xf32>
    %688 = arith.mulf %684, %687 : vector<2x32xf32>
    %689 = arith.addf %686, %688 : vector<2x32xf32>
    %690 = math.tanh %689 : vector<2x32xf32>
    %691 = arith.subf %667, %690 : vector<2x32xf32>
    %692 = arith.mulf %685, %691 : vector<2x32xf32>
    %693 = arith.addf %690, %692 : vector<2x32xf32>
    %c0_201 = arith.constant 0 : index
    %c25_202 = arith.constant 25 : index
    %c0_203 = arith.constant 0 : index
    %694 = vector.load %arg5[%c0_201, %c25_202, %c0_203] : memref<2x30x32xf32, #tpu.memory_space<vmem>>, vector<2x1x32xf32>
    %695 = vector.shape_cast %694 : vector<2x1x32xf32> to vector<2x32xf32>
    %696 = vector.shape_cast %693 : vector<2x32xf32> to vector<2x1x32xf32>
    tpu.vector_store %arg5[%c0_201, %c25_202, %c0_203], %696 {strides = array<i32>} : memref<2x30x32xf32, #tpu.memory_space<vmem>>, vector<2x1x32xf32>,
    %cst_204 = arith.constant dense<0.000000e+00> : vector<2x128xf32>
    %697 = tpu.matmul %693, %2, %cst_204 {dimension_numbers = #tpu.dot_dimension_numbers<[1], [0], [0], [1], [0, 0, 1, 1], [], []>} : vector<2x32xf32>, vector<32x128xf32>, vector<2x128xf32> -> vector<2x128xf32>
    %698 = vector.broadcast %3 : vector<1x128xf32> to vector<2x128xf32>
    %699 = arith.addf %697, %698 : vector<2x128xf32>
    %c0_205 = arith.constant 0 : index
    %c26 = arith.constant 26 : index
    %c0_206 = arith.constant 0 : index
    %700 = vector.load %arg6[%c0_205, %c26, %c0_206] : memref<2x30x128xf32, #tpu.memory_space<vmem>>, vector<2x1x128xf32>
    %701 = vector.shape_cast %700 : vector<2x1x128xf32> to vector<2x128xf32>
    %702 = vector.extract_strided_slice %701 {offsets = [0, 0], sizes = [2, 64], strides = [1, 1]} : vector<2x128xf32> to vector<2x64xf32>
    %703 = vector.extract_strided_slice %699 {offsets = [0, 0], sizes = [2, 64], strides = [1, 1]} : vector<2x128xf32> to vector<2x64xf32>
    %704 = arith.addf %702, %703 : vector<2x64xf32>
    %705 = arith.negf %704 : vector<2x64xf32>
    %706 = math.exp %705 : vector<2x64xf32>
    %cst_207 = arith.constant 1.000000e+00 : f32
    %707 = vector.broadcast %cst_207 : f32 to vector<2x64xf32>
    %708 = arith.addf %707, %706 : vector<2x64xf32>
    %709 = arith.divf %707, %708 : vector<2x64xf32>
    %710 = vector.extract_strided_slice %709 {offsets = [0, 0], sizes = [2, 32], strides = [1, 1]} : vector<2x64xf32> to vector<2x32xf32>
    %711 = vector.extract_strided_slice %709 {offsets = [0, 32], sizes = [2, 32], strides = [1, 1]} : vector<2x64xf32> to vector<2x32xf32>
    %712 = vector.extract_strided_slice %701 {offsets = [0, 64], sizes = [2, 32], strides = [1, 1]} : vector<2x128xf32> to vector<2x32xf32>
    %713 = vector.extract_strided_slice %699 {offsets = [0, 64], sizes = [2, 32], strides = [1, 1]} : vector<2x128xf32> to vector<2x32xf32>
    %714 = arith.mulf %710, %713 : vector<2x32xf32>
    %715 = arith.addf %712, %714 : vector<2x32xf32>
    %716 = math.tanh %715 : vector<2x32xf32>
    %717 = arith.subf %693, %716 : vector<2x32xf32>
    %718 = arith.mulf %711, %717 : vector<2x32xf32>
    %719 = arith.addf %716, %718 : vector<2x32xf32>
    %c0_208 = arith.constant 0 : index
    %c26_209 = arith.constant 26 : index
    %c0_210 = arith.constant 0 : index
    %720 = vector.load %arg5[%c0_208, %c26_209, %c0_210] : memref<2x30x32xf32, #tpu.memory_space<vmem>>, vector<2x1x32xf32>
    %721 = vector.shape_cast %720 : vector<2x1x32xf32> to vector<2x32xf32>
    %722 = vector.shape_cast %719 : vector<2x32xf32> to vector<2x1x32xf32>
    tpu.vector_store %arg5[%c0_208, %c26_209, %c0_210], %722 {strides = array<i32>} : memref<2x30x32xf32, #tpu.memory_space<vmem>>, vector<2x1x32xf32>,
    %cst_211 = arith.constant dense<0.000000e+00> : vector<2x128xf32>
    %723 = tpu.matmul %719, %2, %cst_211 {dimension_numbers = #tpu.dot_dimension_numbers<[1], [0], [0], [1], [0, 0, 1, 1], [], []>} : vector<2x32xf32>, vector<32x128xf32>, vector<2x128xf32> -> vector<2x128xf32>
    %724 = vector.broadcast %3 : vector<1x128xf32> to vector<2x128xf32>
    %725 = arith.addf %723, %724 : vector<2x128xf32>
    %c0_212 = arith.constant 0 : index
    %c27 = arith.constant 27 : index
    %c0_213 = arith.constant 0 : index
    %726 = vector.load %arg6[%c0_212, %c27, %c0_213] : memref<2x30x128xf32, #tpu.memory_space<vmem>>, vector<2x1x128xf32>
    %727 = vector.shape_cast %726 : vector<2x1x128xf32> to vector<2x128xf32>
    %728 = vector.extract_strided_slice %727 {offsets = [0, 0], sizes = [2, 64], strides = [1, 1]} : vector<2x128xf32> to vector<2x64xf32>
    %729 = vector.extract_strided_slice %725 {offsets = [0, 0], sizes = [2, 64], strides = [1, 1]} : vector<2x128xf32> to vector<2x64xf32>
    %730 = arith.addf %728, %729 : vector<2x64xf32>
    %731 = arith.negf %730 : vector<2x64xf32>
    %732 = math.exp %731 : vector<2x64xf32>
    %cst_214 = arith.constant 1.000000e+00 : f32
    %733 = vector.broadcast %cst_214 : f32 to vector<2x64xf32>
    %734 = arith.addf %733, %732 : vector<2x64xf32>
    %735 = arith.divf %733, %734 : vector<2x64xf32>
    %736 = vector.extract_strided_slice %735 {offsets = [0, 0], sizes = [2, 32], strides = [1, 1]} : vector<2x64xf32> to vector<2x32xf32>
    %737 = vector.extract_strided_slice %735 {offsets = [0, 32], sizes = [2, 32], strides = [1, 1]} : vector<2x64xf32> to vector<2x32xf32>
    %738 = vector.extract_strided_slice %727 {offsets = [0, 64], sizes = [2, 32], strides = [1, 1]} : vector<2x128xf32> to vector<2x32xf32>
    %739 = vector.extract_strided_slice %725 {offsets = [0, 64], sizes = [2, 32], strides = [1, 1]} : vector<2x128xf32> to vector<2x32xf32>
    %740 = arith.mulf %736, %739 : vector<2x32xf32>
    %741 = arith.addf %738, %740 : vector<2x32xf32>
    %742 = math.tanh %741 : vector<2x32xf32>
    %743 = arith.subf %719, %742 : vector<2x32xf32>
    %744 = arith.mulf %737, %743 : vector<2x32xf32>
    %745 = arith.addf %742, %744 : vector<2x32xf32>
    %c0_215 = arith.constant 0 : index
    %c27_216 = arith.constant 27 : index
    %c0_217 = arith.constant 0 : index
    %746 = vector.load %arg5[%c0_215, %c27_216, %c0_217] : memref<2x30x32xf32, #tpu.memory_space<vmem>>, vector<2x1x32xf32>
    %747 = vector.shape_cast %746 : vector<2x1x32xf32> to vector<2x32xf32>
    %748 = vector.shape_cast %745 : vector<2x32xf32> to vector<2x1x32xf32>
    tpu.vector_store %arg5[%c0_215, %c27_216, %c0_217], %748 {strides = array<i32>} : memref<2x30x32xf32, #tpu.memory_space<vmem>>, vector<2x1x32xf32>,
    %cst_218 = arith.constant dense<0.000000e+00> : vector<2x128xf32>
    %749 = tpu.matmul %745, %2, %cst_218 {dimension_numbers = #tpu.dot_dimension_numbers<[1], [0], [0], [1], [0, 0, 1, 1], [], []>} : vector<2x32xf32>, vector<32x128xf32>, vector<2x128xf32> -> vector<2x128xf32>
    %750 = vector.broadcast %3 : vector<1x128xf32> to vector<2x128xf32>
    %751 = arith.addf %749, %750 : vector<2x128xf32>
    %c0_219 = arith.constant 0 : index
    %c28 = arith.constant 28 : index
    %c0_220 = arith.constant 0 : index
    %752 = vector.load %arg6[%c0_219, %c28, %c0_220] : memref<2x30x128xf32, #tpu.memory_space<vmem>>, vector<2x1x128xf32>
    %753 = vector.shape_cast %752 : vector<2x1x128xf32> to vector<2x128xf32>
    %754 = vector.extract_strided_slice %753 {offsets = [0, 0], sizes = [2, 64], strides = [1, 1]} : vector<2x128xf32> to vector<2x64xf32>
    %755 = vector.extract_strided_slice %751 {offsets = [0, 0], sizes = [2, 64], strides = [1, 1]} : vector<2x128xf32> to vector<2x64xf32>
    %756 = arith.addf %754, %755 : vector<2x64xf32>
    %757 = arith.negf %756 : vector<2x64xf32>
    %758 = math.exp %757 : vector<2x64xf32>
    %cst_221 = arith.constant 1.000000e+00 : f32
    %759 = vector.broadcast %cst_221 : f32 to vector<2x64xf32>
    %760 = arith.addf %759, %758 : vector<2x64xf32>
    %761 = arith.divf %759, %760 : vector<2x64xf32>
    %762 = vector.extract_strided_slice %761 {offsets = [0, 0], sizes = [2, 32], strides = [1, 1]} : vector<2x64xf32> to vector<2x32xf32>
    %763 = vector.extract_strided_slice %761 {offsets = [0, 32], sizes = [2, 32], strides = [1, 1]} : vector<2x64xf32> to vector<2x32xf32>
    %764 = vector.extract_strided_slice %753 {offsets = [0, 64], sizes = [2, 32], strides = [1, 1]} : vector<2x128xf32> to vector<2x32xf32>
    %765 = vector.extract_strided_slice %751 {offsets = [0, 64], sizes = [2, 32], strides = [1, 1]} : vector<2x128xf32> to vector<2x32xf32>
    %766 = arith.mulf %762, %765 : vector<2x32xf32>
    %767 = arith.addf %764, %766 : vector<2x32xf32>
    %768 = math.tanh %767 : vector<2x32xf32>
    %769 = arith.subf %745, %768 : vector<2x32xf32>
    %770 = arith.mulf %763, %769 : vector<2x32xf32>
    %771 = arith.addf %768, %770 : vector<2x32xf32>
    %c0_222 = arith.constant 0 : index
    %c28_223 = arith.constant 28 : index
    %c0_224 = arith.constant 0 : index
    %772 = vector.load %arg5[%c0_222, %c28_223, %c0_224] : memref<2x30x32xf32, #tpu.memory_space<vmem>>, vector<2x1x32xf32>
    %773 = vector.shape_cast %772 : vector<2x1x32xf32> to vector<2x32xf32>
    %774 = vector.shape_cast %771 : vector<2x32xf32> to vector<2x1x32xf32>
    tpu.vector_store %arg5[%c0_222, %c28_223, %c0_224], %774 {strides = array<i32>} : memref<2x30x32xf32, #tpu.memory_space<vmem>>, vector<2x1x32xf32>,
    %cst_225 = arith.constant dense<0.000000e+00> : vector<2x128xf32>
    %775 = tpu.matmul %771, %2, %cst_225 {dimension_numbers = #tpu.dot_dimension_numbers<[1], [0], [0], [1], [0, 0, 1, 1], [], []>} : vector<2x32xf32>, vector<32x128xf32>, vector<2x128xf32> -> vector<2x128xf32>
    %776 = vector.broadcast %3 : vector<1x128xf32> to vector<2x128xf32>
    %777 = arith.addf %775, %776 : vector<2x128xf32>
    %c0_226 = arith.constant 0 : index
    %c29 = arith.constant 29 : index
    %c0_227 = arith.constant 0 : index
    %778 = vector.load %arg6[%c0_226, %c29, %c0_227] : memref<2x30x128xf32, #tpu.memory_space<vmem>>, vector<2x1x128xf32>
    %779 = vector.shape_cast %778 : vector<2x1x128xf32> to vector<2x128xf32>
    %780 = vector.extract_strided_slice %779 {offsets = [0, 0], sizes = [2, 64], strides = [1, 1]} : vector<2x128xf32> to vector<2x64xf32>
    %781 = vector.extract_strided_slice %777 {offsets = [0, 0], sizes = [2, 64], strides = [1, 1]} : vector<2x128xf32> to vector<2x64xf32>
    %782 = arith.addf %780, %781 : vector<2x64xf32>
    %783 = arith.negf %782 : vector<2x64xf32>
    %784 = math.exp %783 : vector<2x64xf32>
    %cst_228 = arith.constant 1.000000e+00 : f32
    %785 = vector.broadcast %cst_228 : f32 to vector<2x64xf32>
    %786 = arith.addf %785, %784 : vector<2x64xf32>
    %787 = arith.divf %785, %786 : vector<2x64xf32>
    %788 = vector.extract_strided_slice %787 {offsets = [0, 0], sizes = [2, 32], strides = [1, 1]} : vector<2x64xf32> to vector<2x32xf32>
    %789 = vector.extract_strided_slice %787 {offsets = [0, 32], sizes = [2, 32], strides = [1, 1]} : vector<2x64xf32> to vector<2x32xf32>
    %790 = vector.extract_strided_slice %779 {offsets = [0, 64], sizes = [2, 32], strides = [1, 1]} : vector<2x128xf32> to vector<2x32xf32>
    %791 = vector.extract_strided_slice %777 {offsets = [0, 64], sizes = [2, 32], strides = [1, 1]} : vector<2x128xf32> to vector<2x32xf32>
    %792 = arith.mulf %788, %791 : vector<2x32xf32>
    %793 = arith.addf %790, %792 : vector<2x32xf32>
    %794 = math.tanh %793 : vector<2x32xf32>
    %795 = arith.subf %771, %794 : vector<2x32xf32>
    %796 = arith.mulf %789, %795 : vector<2x32xf32>
    %797 = arith.addf %794, %796 : vector<2x32xf32>
    %c0_229 = arith.constant 0 : index
    %c29_230 = arith.constant 29 : index
    %c0_231 = arith.constant 0 : index
    %798 = vector.load %arg5[%c0_229, %c29_230, %c0_231] : memref<2x30x32xf32, #tpu.memory_space<vmem>>, vector<2x1x32xf32>
    %799 = vector.shape_cast %798 : vector<2x1x32xf32> to vector<2x32xf32>
    %800 = vector.shape_cast %797 : vector<2x32xf32> to vector<2x1x32xf32>
    tpu.vector_store %arg5[%c0_229, %c29_230, %c0_231], %800 {strides = array<i32>} : memref<2x30x32xf32, #tpu.memory_space<vmem>>, vector<2x1x32xf32>,
    return
  }
}

</mosaic_0001>

<llo_original>
// kernel: gru_forward.1
$region0: #{gru_forward.1}
  #allocation0 [shape = 'u32[]', space=smem, size = 0x4, offset = 0x4, fixed_abs, tag = 'smem constant byte address 0x4 - core index']
  #allocation1 [shape = 'u32[144,128]{1,0:T(1,128)}', space=vmem, size = 0x12000, scoped, tag = 'internal scratch']
  #allocation2 [shape = 'f32[2,30,128]{2,1,0:T(8,128)}', space=vmem, size = 0x8000, scoped, tag = 'scratch operand']
  %s0 = inlined_call_operand.vmem [shape: f32[2,30,16], index: 0, kind: input, shape index: {}]
  %s1 = inlined_call_operand.vmem [shape: f32[16,128], index: 1, kind: input, shape index: {}]
  %s2 = inlined_call_operand.vmem [shape: f32[1,128], index: 2, kind: input, shape index: {}]
  %s3 = inlined_call_operand.vmem [shape: f32[32,128], index: 3, kind: input, shape index: {}]
  %s4 = inlined_call_operand.vmem [shape: f32[1,128], index: 4, kind: input, shape index: {}]
  %s5 = inlined_call_operand.vmem [shape: f32[2,30,32], index: 5, kind: output, shape index: {}]
  %s6 = sld [smem:[#allocation0]]
  $region30: #{gru_forward.1} parent=0
    _
  %s8 = ssub.s32 1, %s6
  %s9 = scalar_select 0, %s8, %s6
  // Predicated region
  $region2: #{gru_forward.1} parent=0 // pred_check
    _
  $region3: #{gru_forward.1} parent=0 // pred_check_branch
    %11 = sbr.rel (0) target = $region5
  $region4: #{gru_forward.1} parent=0 // pred_region
    _
  $region5: #{gru_forward.1} parent=0 // pred_fallthru
    _
  // Predicated region
  $region6: #{gru_forward.1} parent=0 // pred_check
    _
  $region7: #{gru_forward.1} parent=0 // pred_check_branch
    %13 = sbr.rel (0) target = $region9
  $region8: #{gru_forward.1} parent=0 // pred_region
    _
  $region9: #{gru_forward.1} parent=0 // pred_fallthru
    _
  // Predicated region
  $region10: #{gru_forward.1} parent=0 // pred_check
    _
  $region11: #{gru_forward.1} parent=0 // pred_check_branch
    %15 = sbr.rel (0) target = $region13
  $region12: #{gru_forward.1} parent=0 // pred_region
    _
  $region13: #{gru_forward.1} parent=0 // pred_fallthru
    _
  // Predicated region
  $region14: #{gru_forward.1} parent=0 // pred_check
    _
  $region15: #{gru_forward.1} parent=0 // pred_check_branch
    %17 = sbr.rel (0) target = $region17
  $region16: #{gru_forward.1} parent=0 // pred_region
    _
  $region17: #{gru_forward.1} parent=0 // pred_fallthru
    _
  // Predicated region
  $region18: #{gru_forward.1} parent=0 // pred_check
    _
  $region19: #{gru_forward.1} parent=0 // pred_check_branch
    %19 = sbr.rel (0) target = $region21
  $region20: #{gru_forward.1} parent=0 // pred_region
    _
  $region21: #{gru_forward.1} parent=0 // pred_fallthru
    _
  %v20 = vld [vmem:[%s1] sm:$0xff]
  %v21 = vld [vmem:[%s1 + $0x8] sm:$0xff]
  %v22 = vld [vmem:[%s2] sm:$0x1]
  %v23 = vld [vmem:[%s3] sm:$0xff]
  %v24 = vld [vmem:[%s3 + $0x8] sm:$0xff]
  %v25 = vld [vmem:[%s3 + $0x10] sm:$0xff]
  %v26 = vld [vmem:[%s3 + $0x18] sm:$0xff]
  %v27 = vld [vmem:[%s4] sm:$0x1]
  %v28 = vld [vmem:[%s0] sm:$0xff]
  %v29 = vld [vmem:[%s0 + $0x8] sm:$0xff]
  %v30 = vld [vmem:[%s0 + $0x10] sm:$0xff]
  %v31 = vld [vmem:[%s0 + $0x18] sm:$0x3f]
  %v33 = vlaneseq
  %v34 = vshrl.u32 %v33, 7
  %v35 = vsub.s32 0, %v34
  %v36 = vrot.slane %v22, %v35
  %vm38 = vcmask 130048
  %v40 = vsel %vm38, %v28, 0
  %v43 = vsel %vm38, %v29, 0
  %v46 = vsel %vm38, %v30, 0
  %v49 = vsel %vm38, %v31, 0
  %51 = vmatprep.subr.mxu0 0.0
  %52 = vmatpush1.msra.mxu0 %v20
  %53 = vmatprep.subr.mxu0 0.0
  %54 = vmatpush1.msra.mxu0 %v21
  %55 = vmatprep.subr.mxu0 0.0
  %56 = vmatpush1.msra.mxu0 0.0
  %57 = vmatprep.subr.mxu0 0.0
  %58 = vmatpush1.msra.mxu0 0.0
  %59 = vmatprep.subr.mxu0 0.0
  %60 = vmatpush1.msra.mxu0 0.0
  %61 = vmatprep.subr.mxu0 0.0
  %62 = vmatpush1.msra.mxu0 0.0
  %63 = vmatprep.subr.mxu0 0.0
  %64 = vmatpush1.msra.mxu0 0.0
  %65 = vmatprep.subr.mxu0 0.0
  %66 = vmatpush1.msra.mxu0 0.0
  %67 = vmatprep.subr.mxu0 0.0
  %68 = vmatpush1.msra.mxu0 0.0
  %69 = vmatprep.subr.mxu0 0.0
  %70 = vmatpush1.msra.mxu0 0.0
  %71 = vmatprep.subr.mxu0 0.0
  %72 = vmatpush1.msra.mxu0 0.0
  %73 = vmatprep.subr.mxu0 0.0
  %74 = vmatpush1.msra.mxu0 0.0
  %75 = vmatprep.subr.mxu0 0.0
  %76 = vmatpush1.msra.mxu0 0.0
  %77 = vmatprep.subr.mxu0 0.0
  %78 = vmatpush1.msra.mxu0 0.0
  %79 = vmatprep.subr.mxu0 0.0
  %80 = vmatpush1.msra.mxu0 0.0
  %81 = vmatprep.subr.mxu0 0.0
  %82 = vmatpush1.msra.mxu0 0.0
  %83 = vmatprep.subr.mxu0 0.0
  %84 = vmatpush1.msra.mxu0 0.0
  %85 = vmatprep.subr.mxu0 0.0
  %86 = vmatpush1.msra.mxu0 0.0
  %87 = vmatprep.subr.mxu0 0.0
  %88 = vmatpush1.msra.mxu0 0.0
  %89 = vmatprep.subr.mxu0 0.0
  %90 = vmatpush1.msra.mxu0 0.0
  %91 = vmatprep.subr.mxu0 0.0
  %92 = vmatpush1.msra.mxu0 0.0
  %93 = vmatprep.subr.mxu0 0.0
  %94 = vmatpush1.msra.mxu0 0.0
  %95 = vmatprep.subr.mxu0 0.0
  %96 = vmatpush1.msra.mxu0 0.0
  %97 = vmatprep.subr.mxu0 0.0
  %98 = vmatpush1.msra.mxu0 0.0
  %99 = vmatprep.subr.mxu0 0.0
  %100 = vmatpush1.msra.mxu0 0.0
  %101 = vmatprep.subr.mxu0 0.0
  %102 = vmatpush1.msra.mxu0 0.0
  %103 = vmatprep.subr.mxu0 0.0
  %104 = vmatpush1.msra.mxu0 0.0
  %105 = vmatprep.subr.mxu0 0.0
  %106 = vmatpush1.msra.mxu0 0.0
  %107 = vmatprep.subr.mxu0 0.0
  %108 = vmatpush1.msra.mxu0 0.0
  %109 = vmatprep.subr.mxu0 0.0
  %110 = vmatpush1.msra.mxu0 0.0
  %111 = vmatprep.subr.mxu0 0.0
  %112 = vmatpush1.msra.mxu0 0.0
  %113 = vmatprep.subr.mxu0 0.0
  %114 = vmatpush1.msra.mxu0 0.0
  %115 = vmatprep.mubr.f32.mxu0 0.0
  %116 = vmatmul.mubr.f32.gmra.mrb[0].mxu0 %v40
  %v117 = vpop.f32.mrb[0].mxu0
  %v118 = vadd.f32 %v36, %v117
  %v119 = vpop.f32.mrb[0].mxu0
  %120 = vmatprep.mubr.f32.mxu0 0.0
  %121 = vmatmul.mubr.f32.gmra.mrb[0].mxu0 %v43
  %v122 = vpop.f32.mrb[0].mxu0
  %v123 = vadd.f32 %v36, %v122
  %v124 = vpop.f32.mrb[0].mxu0
  %125 = vmatprep.mubr.f32.mxu0 0.0
  %126 = vmatmul.mubr.f32.gmra.mrb[0].mxu0 %v46
  %v127 = vpop.f32.mrb[0].mxu0
  %v128 = vadd.f32 %v36, %v127
  %v129 = vpop.f32.mrb[0].mxu0
  %130 = vmatprep.mubr.f32.mxu0 0.0
  %131 = vmatmul.mubr.f32.gmra.mrb[0].mxu0 %v49
  %v132 = vpop.f32.mrb[0].mxu0
  %v133 = vadd.f32 %v36, %v132
  %v134 = vpop.f32.mrb[0].mxu0
  %135 = vdwg.mxu0
  %136 = vst [vmem:[#allocation2] sm:$0xff] %v118
  %137 = vst [vmem:[#allocation2 + $0x8] sm:$0xff] %v123
  %138 = vst [vmem:[#allocation2 + $0x10] sm:$0xff] %v128
  %139 = vst [vmem:[#allocation2 + $0x18] sm:$0x3f] %v133
  %s140 = scalar_lea.vmem %s0, 32
  %v141 = vld [vmem:[%s140] sm:$0xff]
  %v142 = vld [vmem:[%s140 + $0x8] sm:$0xff]
  %v143 = vld [vmem:[%s140 + $0x10] sm:$0xff]
  %v144 = vld [vmem:[%s140 + $0x18] sm:$0x3f]
  %v146 = vsel %vm38, %v141, 0
  %v149 = vsel %vm38, %v142, 0
  %v152 = vsel %vm38, %v143, 0
  %v155 = vsel %vm38, %v144, 0
  %157 = vmatprep.subr.mxu0 0.0
  %158 = vmatpush1.msra.mxu0 %v20
  %159 = vmatprep.subr.mxu0 0.0
  %160 = vmatpush1.msra.mxu0 %v21
  %161 = vmatprep.subr.mxu0 0.0
  %162 = vmatpush1.msra.mxu0 0.0
  %163 = vmatprep.subr.mxu0 0.0
  %164 = vmatpush1.msra.mxu0 0.0
  %165 = vmatprep.subr.mxu0 0.0
  %166 = vmatpush1.msra.mxu0 0.0
  %167 = vmatprep.subr.mxu0 0.0
  %168 = vmatpush1.msra.mxu0 0.0
  %169 = vmatprep.subr.mxu0 0.0
  %170 = vmatpush1.msra.mxu0 0.0
  %171 = vmatprep.subr.mxu0 0.0
  %172 = vmatpush1.msra.mxu0 0.0
  %173 = vmatprep.subr.mxu0 0.0
  %174 = vmatpush1.msra.mxu0 0.0
  %175 = vmatprep.subr.mxu0 0.0
  %176 = vmatpush1.msra.mxu0 0.0
  %177 = vmatprep.subr.mxu0 0.0
  %178 = vmatpush1.msra.mxu0 0.0
  %179 = vmatprep.subr.mxu0 0.0
  %180 = vmatpush1.msra.mxu0 0.0
  %181 = vmatprep.subr.mxu0 0.0
  %182 = vmatpush1.msra.mxu0 0.0
  %183 = vmatprep.subr.mxu0 0.0
  %184 = vmatpush1.msra.mxu0 0.0
  %185 = vmatprep.subr.mxu0 0.0
  %186 = vmatpush1.msra.mxu0 0.0
  %187 = vmatprep.subr.mxu0 0.0
  %188 = vmatpush1.msra.mxu0 0.0
  %189 = vmatprep.subr.mxu0 0.0
  %190 = vmatpush1.msra.mxu0 0.0
  %191 = vmatprep.subr.mxu0 0.0
  %192 = vmatpush1.msra.mxu0 0.0
  %193 = vmatprep.subr.mxu0 0.0
  %194 = vmatpush1.msra.mxu0 0.0
  %195 = vmatprep.subr.mxu0 0.0
  %196 = vmatpush1.msra.mxu0 0.0
  %197 = vmatprep.subr.mxu0 0.0
  %198 = vmatpush1.msra.mxu0 0.0
  %199 = vmatprep.subr.mxu0 0.0
  %200 = vmatpush1.msra.mxu0 0.0
  %201 = vmatprep.subr.mxu0 0.0
  %202 = vmatpush1.msra.mxu0 0.0
  %203 = vmatprep.subr.mxu0 0.0
  %204 = vmatpush1.msra.mxu0 0.0
  %205 = vmatprep.subr.mxu0 0.0
  %206 = vmatpush1.msra.mxu0 0.0
  %207 = vmatprep.subr.mxu0 0.0
  %208 = vmatpush1.msra.mxu0 0.0
  %209 = vmatprep.subr.mxu0 0.0
  %210 = vmatpush1.msra.mxu0 0.0
  %211 = vmatprep.subr.mxu0 0.0
  %212 = vmatpush1.msra.mxu0 0.0
  %213 = vmatprep.subr.mxu0 0.0
  %214 = vmatpush1.msra.mxu0 0.0
  %215 = vmatprep.subr.mxu0 0.0
  %216 = vmatpush1.msra.mxu0 0.0
  %217 = vmatprep.subr.mxu0 0.0
  %218 = vmatpush1.msra.mxu0 0.0
  %219 = vmatprep.subr.mxu0 0.0
  %220 = vmatpush1.msra.mxu0 0.0
  %221 = vmatprep.mubr.f32.mxu0 0.0
  %222 = vmatmul.mubr.f32.gmra.mrb[0].mxu0 %v146
  %v223 = vpop.f32.mrb[0].mxu0
  %v224 = vadd.f32 %v36, %v223
  %v225 = vpop.f32.mrb[0].mxu0
  %226 = vmatprep.mubr.f32.mxu0 0.0
  %227 = vmatmul.mubr.f32.gmra.mrb[0].mxu0 %v149
  %v228 = vpop.f32.mrb[0].mxu0
  %v229 = vadd.f32 %v36, %v228
  %v230 = vpop.f32.mrb[0].mxu0
  %231 = vmatprep.mubr.f32.mxu0 0.0
  %232 = vmatmul.mubr.f32.gmra.mrb[0].mxu0 %v152
  %v233 = vpop.f32.mrb[0].mxu0
  %v234 = vadd.f32 %v36, %v233
  %v235 = vpop.f32.mrb[0].mxu0
  %236 = vmatprep.mubr.f32.mxu0 0.0
  %237 = vmatmul.mubr.f32.gmra.mrb[0].mxu0 %v155
  %v238 = vpop.f32.mrb[0].mxu0
  %v239 = vadd.f32 %v36, %v238
  %v240 = vpop.f32.mrb[0].mxu0
  %241 = vdwg.mxu0
  %s242 = scalar_lea.vmem [#allocation2], 32
  %243 = vst [vmem:[%s242] sm:$0xff] %v224
  %244 = vst [vmem:[%s242 + $0x8] sm:$0xff] %v229
  %245 = vst [vmem:[%s242 + $0x10] sm:$0xff] %v234
  %246 = vst [vmem:[%s242 + $0x18] sm:$0x3f] %v239
  %v248 = vlaneseq
  %v249 = vshrl.u32 %v248, 7
  %v250 = vsub.s32 0, %v249
  %v251 = vrot.slane %v27, %v250
  %vm253 = vcmask 261120
  %v255 = vsel %vm253, 0.0, 0
  %257 = vmatprep.subr.mxu0 0.0
  %258 = vmatpush1.msra.mxu0 %v23
  %259 = vmatprep.subr.mxu0 0.0
  %260 = vmatpush1.msra.mxu0 %v24
  %261 = vmatprep.subr.mxu0 0.0
  %262 = vmatpush1.msra.mxu0 %v25
  %263 = vmatprep.subr.mxu0 0.0
  %264 = vmatpush1.msra.mxu0 %v26
  %265 = vmatprep.subr.mxu0 0.0
  %266 = vmatpush1.msra.mxu0 0.0
  %267 = vmatprep.subr.mxu0 0.0
  %268 = vmatpush1.msra.mxu0 0.0
  %269 = vmatprep.subr.mxu0 0.0
  %270 = vmatpush1.msra.mxu0 0.0
  %271 = vmatprep.subr.mxu0 0.0
  %272 = vmatpush1.msra.mxu0 0.0
  %273 = vmatprep.subr.mxu0 0.0
  %274 = vmatpush1.msra.mxu0 0.0
  %275 = vmatprep.subr.mxu0 0.0
  %276 = vmatpush1.msra.mxu0 0.0
  %277 = vmatprep.subr.mxu0 0.0
  %278 = vmatpush1.msra.mxu0 0.0
  %279 = vmatprep.subr.mxu0 0.0
  %280 = vmatpush1.msra.mxu0 0.0
  %281 = vmatprep.subr.mxu0 0.0
  %282 = vmatpush1.msra.mxu0 0.0
  %283 = vmatprep.subr.mxu0 0.0
  %284 = vmatpush1.msra.mxu0 0.0
  %285 = vmatprep.subr.mxu0 0.0
  %286 = vmatpush1.msra.mxu0 0.0
  %287 = vmatprep.subr.mxu0 0.0
  %288 = vmatpush1.msra.mxu0 0.0
  %289 = vmatprep.subr.mxu0 0.0
  %290 = vmatpush1.msra.mxu0 0.0
  %291 = vmatprep.subr.mxu0 0.0
  %292 = vmatpush1.msra.mxu0 0.0
  %293 = vmatprep.subr.mxu0 0.0
  %294 = vmatpush1.msra.mxu0 0.0
  %295 = vmatprep.subr.mxu0 0.0
  %296 = vmatpush1.msra.mxu0 0.0
  %297 = vmatprep.subr.mxu0 0.0
  %298 = vmatpush1.msra.mxu0 0.0
  %299 = vmatprep.subr.mxu0 0.0
  %300 = vmatpush1.msra.mxu0 0.0
  %301 = vmatprep.subr.mxu0 0.0
  %302 = vmatpush1.msra.mxu0 0.0
  %303 = vmatprep.subr.mxu0 0.0
  %304 = vmatpush1.msra.mxu0 0.0
  %305 = vmatprep.subr.mxu0 0.0
  %306 = vmatpush1.msra.mxu0 0.0
  %307 = vmatprep.subr.mxu0 0.0
  %308 = vmatpush1.msra.mxu0 0.0
  %309 = vmatprep.subr.mxu0 0.0
  %310 = vmatpush1.msra.mxu0 0.0
  %311 = vmatprep.subr.mxu0 0.0
  %312 = vmatpush1.msra.mxu0 0.0
  %313 = vmatprep.subr.mxu0 0.0
  %314 = vmatpush1.msra.mxu0 0.0
  %315 = vmatprep.subr.mxu0 0.0
  %316 = vmatpush1.msra.mxu0 0.0
  %317 = vmatprep.subr.mxu0 0.0
  %318 = vmatpush1.msra.mxu0 0.0
  %319 = vmatprep.subr.mxu0 0.0
  %320 = vmatpush1.msra.mxu0 0.0
  %321 = vmatprep.mubr.f32.mxu0 0.0
  %322 = vmatmul.mubr.f32.gmra.mrb[0].mxu0 %v255
  %v323 = vpop.f32.mrb[0].mxu0
  %v324 = vadd.f32 %v251, %v323
  %v325 = vpop.f32.mrb[0].mxu0
  %326 = vdwg.mxu0
  %v327 = vld [vmem:[#allocation2] sm:$0x1]
  %v328 = vld [vmem:[#allocation2 + $0x20] sm:$0x1]
  %v330 = vrot.slane %v324, 1
  %v333 = vadd.f32 %v327, %v324
  %v334 = vadd.f32 %v328, %v330
  %v335 = vxor.u32 %v333, 2147483648
  %v336 = vxor.u32 %v334, 2147483648
  %v337 = vmul.f32 %v335, 1.442695
  %v338 = vpow.pop %v337
  %v339 = vmul.f32 %v336, 1.442695
  %v340 = vpow.pop %v339
  %v341 = vadd.f32 %v338, 1.0
  %v342 = vadd.f32 %v340, 1.0
  %v343 = vrcp.pop %v341
  %v344 = vmul.f32 1.0, %v343
  %v345 = vrcp.pop %v342
  %v346 = vmul.f32 1.0, %v345
  %347 = vrot.lane.b32.xlu0 %v324, 64
  %v348 = vpop.permute.xlu0 %347
  %349 = vrot.lane.b32.xlu0 %v330, 64
  %v350 = vpop.permute.xlu0 %349
  %v353 = vmul.f32 %v344, %v348
  %v354 = vmul.f32 %v346, %v350
  %357 = vrot.lane.b32.xlu0 %v353, 64
  %v358 = vpop.permute.xlu0 %357
  %359 = vrot.lane.b32.xlu0 %v354, 64
  %v360 = vpop.permute.xlu0 %359
  %v363 = vadd.f32 %v327, %v358
  %v364 = vadd.f32 %v328, %v360
  %v365 = vtanh.pop %v363
  %v366 = vtanh.pop %v364
  %v367 = vsub.f32 0.0, %v365
  %v368 = vsub.f32 0.0, %v366
  %371 = vrot.lane.b32.xlu0 %v367, 96
  %v372 = vpop.permute.xlu0 %371
  %373 = vrot.lane.b32.xlu0 %v368, 96
  %v374 = vpop.permute.xlu0 %373
  %v377 = vmul.f32 %v344, %v372
  %v378 = vmul.f32 %v346, %v374
  %381 = vrot.lane.b32.xlu0 %v377, 32
  %v382 = vpop.permute.xlu0 %381
  %383 = vrot.lane.b32.xlu0 %v378, 32
  %v384 = vpop.permute.xlu0 %383
  %v387 = vadd.f32 %v365, %v382
  %v388 = vadd.f32 %v366, %v384
  %391 = vrot.lane.b32.xlu0 %v387, 64
  %v392 = vpop.permute.xlu0 %391
  %393 = vrot.lane.b32.xlu0 %v388, 64
  %v394 = vpop.permute.xlu0 %393
  %vm397 = vcmask 253952
  %398 = vst.msk [vmem:[%s5] sm:$0x1] %vm397, %v392
  %399 = vst.msk [vmem:[%s5 + $0x20] sm:$0x1] %vm397, %v394
  %v400 = vrot.slane %v388, 7
  %vm401 = vcmask 1041409
  %v402 = vsel %vm401, %v400, %v387
  %403 = vrot.lane.b32.xlu0 %v402, 64
  %v404 = vpop.permute.xlu0 %403
  %v405 = vsel %vm253, %v404, 0
  %407 = vmatprep.subr.mxu0 0.0
  %408 = vmatpush1.msra.mxu0 %v23
  %409 = vmatprep.subr.mxu0 0.0
  %410 = vmatpush1.msra.mxu0 %v24
  %411 = vmatprep.subr.mxu0 0.0
  %412 = vmatpush1.msra.mxu0 %v25
  %413 = vmatprep.subr.mxu0 0.0
  %414 = vmatpush1.msra.mxu0 %v26
  %415 = vmatprep.subr.mxu0 0.0
  %416 = vmatpush1.msra.mxu0 0.0
  %417 = vmatprep.subr.mxu0 0.0
  %418 = vmatpush1.msra.mxu0 0.0
  %419 = vmatprep.subr.mxu0 0.0
  %420 = vmatpush1.msra.mxu0 0.0
  %421 = vmatprep.subr.mxu0 0.0
  %422 = vmatpush1.msra.mxu0 0.0
  %423 = vmatprep.subr.mxu0 0.0
  %424 = vmatpush1.msra.mxu0 0.0
  %425 = vmatprep.subr.mxu0 0.0
  %426 = vmatpush1.msra.mxu0 0.0
  %427 = vmatprep.subr.mxu0 0.0
  %428 = vmatpush1.msra.mxu0 0.0
  %429 = vmatprep.subr.mxu0 0.0
  %430 = vmatpush1.msra.mxu0 0.0
  %431 = vmatprep.subr.mxu0 0.0
  %432 = vmatpush1.msra.mxu0 0.0
  %433 = vmatprep.subr.mxu0 0.0
  %434 = vmatpush1.msra.mxu0 0.0
  %435 = vmatprep.subr.mxu0 0.0
  %436 = vmatpush1.msra.mxu0 0.0
  %437 = vmatprep.subr.mxu0 0.0
  %438 = vmatpush1.msra.mxu0 0.0
  %439 = vmatprep.subr.mxu0 0.0
  %440 = vmatpush1.msra.mxu0 0.0
  %441 = vmatprep.subr.mxu0 0.0
  %442 = vmatpush1.msra.mxu0 0.0
  %443 = vmatprep.subr.mxu0 0.0
  %444 = vmatpush1.msra.mxu0 0.0
  %445 = vmatprep.subr.mxu0 0.0
  %446 = vmatpush1.msra.mxu0 0.0
  %447 = vmatprep.subr.mxu0 0.0
  %448 = vmatpush1.msra.mxu0 0.0
  %449 = vmatprep.subr.mxu0 0.0
  %450 = vmatpush1.msra.mxu0 0.0
  %451 = vmatprep.subr.mxu0 0.0
  %452 = vmatpush1.msra.mxu0 0.0
  %453 = vmatprep.subr.mxu0 0.0
  %454 = vmatpush1.msra.mxu0 0.0
  %455 = vmatprep.subr.mxu0 0.0
  %456 = vmatpush1.msra.mxu0 0.0
  %457 = vmatprep.subr.mxu0 0.0
  %458 = vmatpush1.msra.mxu0 0.0
  %459 = vmatprep.subr.mxu0 0.0
  %460 = vmatpush1.msra.mxu0 0.0
  %461 = vmatprep.subr.mxu0 0.0
  %462 = vmatpush1.msra.mxu0 0.0
  %463 = vmatprep.subr.mxu0 0.0
  %464 = vmatpush1.msra.mxu0 0.0
  %465 = vmatprep.subr.mxu0 0.0
  %466 = vmatpush1.msra.mxu0 0.0
  %467 = vmatprep.subr.mxu0 0.0
  %468 = vmatpush1.msra.mxu0 0.0
  %469 = vmatprep.subr.mxu0 0.0
  %470 = vmatpush1.msra.mxu0 0.0
  %471 = vmatprep.mubr.f32.mxu0 0.0
  %472 = vmatmul.mubr.f32.gmra.mrb[0].mxu0 %v405
  %v473 = vpop.f32.mrb[0].mxu0
  %v474 = vadd.f32 %v251, %v473
  %v475 = vpop.f32.mrb[0].mxu0
  %476 = vdwg.mxu0
  %v477 = vld [vmem:[#allocation2 + $0x1] sm:$0x1]
  %v478 = vld [vmem:[#allocation2 + $0x21] sm:$0x1]
  %v480 = vrot.slane %v474, 1
  %v483 = vadd.f32 %v477, %v474
  %v484 = vadd.f32 %v478, %v480
  %v485 = vxor.u32 %v483, 2147483648
  %v486 = vxor.u32 %v484, 2147483648
  %v487 = vmul.f32 %v485, 1.442695
  %v488 = vpow.pop %v487
  %v489 = vmul.f32 %v486, 1.442695
  %v490 = vpow.pop %v489
  %v491 = vadd.f32 %v488, 1.0
  %v492 = vadd.f32 %v490, 1.0
  %v493 = vrcp.pop %v491
  %v494 = vmul.f32 1.0, %v493
  %v495 = vrcp.pop %v492
  %v496 = vmul.f32 1.0, %v495
  %497 = vrot.lane.b32.xlu0 %v474, 64
  %v498 = vpop.permute.xlu0 %497
  %499 = vrot.lane.b32.xlu0 %v480, 64
  %v500 = vpop.permute.xlu0 %499
  %v503 = vmul.f32 %v494, %v498
  %v504 = vmul.f32 %v496, %v500
  %507 = vrot.lane.b32.xlu0 %v503, 64
  %v508 = vpop.permute.xlu0 %507
  %509 = vrot.lane.b32.xlu0 %v504, 64
  %v510 = vpop.permute.xlu0 %509
  %v513 = vadd.f32 %v477, %v508
  %v514 = vadd.f32 %v478, %v510
  %v515 = vtanh.pop %v513
  %v516 = vtanh.pop %v514
  %v517 = vsub.f32 %v387, %v515
  %v518 = vsub.f32 %v388, %v516
  %521 = vrot.lane.b32.xlu0 %v517, 96
  %v522 = vpop.permute.xlu0 %521
  %523 = vrot.lane.b32.xlu0 %v518, 96
  %v524 = vpop.permute.xlu0 %523
  %v527 = vmul.f32 %v494, %v522
  %v528 = vmul.f32 %v496, %v524
  %531 = vrot.lane.b32.xlu0 %v527, 32
  %v532 = vpop.permute.xlu0 %531
  %533 = vrot.lane.b32.xlu0 %v528, 32
  %v534 = vpop.permute.xlu0 %533
  %v537 = vadd.f32 %v515, %v532
  %v538 = vadd.f32 %v516, %v534
  %541 = vrot.lane.b32.xlu0 %v537, 64
  %v542 = vpop.permute.xlu0 %541
  %543 = vrot.lane.b32.xlu0 %v538, 64
  %v544 = vpop.permute.xlu0 %543
  %547 = vst.msk [vmem:[%s5 + $0x1] sm:$0x1] %vm397, %v542
  %548 = vst.msk [vmem:[%s5 + $0x21] sm:$0x1] %vm397, %v544
  %v549 = vrot.slane %v538, 7
  %v550 = vsel %vm401, %v549, %v537
  %551 = vrot.lane.b32.xlu0 %v550, 64
  %v552 = vpop.permute.xlu0 %551
  %v553 = vsel %vm253, %v552, 0
  %555 = vmatprep.subr.mxu0 0.0
  %556 = vmatpush1.msra.mxu0 %v23
  %557 = vmatprep.subr.mxu0 0.0
  %558 = vmatpush1.msra.mxu0 %v24
  %559 = vmatprep.subr.mxu0 0.0
  %560 = vmatpush1.msra.mxu0 %v25
  %561 = vmatprep.subr.mxu0 0.0
  %562 = vmatpush1.msra.mxu0 %v26
  %563 = vmatprep.subr.mxu0 0.0
  %564 = vmatpush1.msra.mxu0 0.0
  %565 = vmatprep.subr.mxu0 0.0
  %566 = vmatpush1.msra.mxu0 0.0
  %567 = vmatprep.subr.mxu0 0.0
  %568 = vmatpush1.msra.mxu0 0.0
  %569 = vmatprep.subr.mxu0 0.0
  %570 = vmatpush1.msra.mxu0 0.0
  %571 = vmatprep.subr.mxu0 0.0
  %572 = vmatpush1.msra.mxu0 0.0
  %573 = vmatprep.subr.mxu0 0.0
  %574 = vmatpush1.msra.mxu0 0.0
  %575 = vmatprep.subr.mxu0 0.0
  %576 = vmatpush1.msra.mxu0 0.0
  %577 = vmatprep.subr.mxu0 0.0
  %578 = vmatpush1.msra.mxu0 0.0
  %579 = vmatprep.subr.mxu0 0.0
  %580 = vmatpush1.msra.mxu0 0.0
  %581 = vmatprep.subr.mxu0 0.0
  %582 = vmatpush1.msra.mxu0 0.0
  %583 = vmatprep.subr.mxu0 0.0
  %584 = vmatpush1.msra.mxu0 0.0
  %585 = vmatprep.subr.mxu0 0.0
  %586 = vmatpush1.msra.mxu0 0.0
  %587 = vmatprep.subr.mxu0 0.0
  %588 = vmatpush1.msra.mxu0 0.0
  %589 = vmatprep.subr.mxu0 0.0
  %590 = vmatpush1.msra.mxu0 0.0
  %591 = vmatprep.subr.mxu0 0.0
  %592 = vmatpush1.msra.mxu0 0.0
  %593 = vmatprep.subr.mxu0 0.0
  %594 = vmatpush1.msra.mxu0 0.0
  %595 = vmatprep.subr.mxu0 0.0
  %596 = vmatpush1.msra.mxu0 0.0
  %597 = vmatprep.subr.mxu0 0.0
  %598 = vmatpush1.msra.mxu0 0.0
  %599 = vmatprep.subr.mxu0 0.0
  %600 = vmatpush1.msra.mxu0 0.0
  %601 = vmatprep.subr.mxu0 0.0
  %602 = vmatpush1.msra.mxu0 0.0
  %603 = vmatprep.subr.mxu0 0.0
  %604 = vmatpush1.msra.mxu0 0.0
  %605 = vmatprep.subr.mxu0 0.0
  %606 = vmatpush1.msra.mxu0 0.0
  %607 = vmatprep.subr.mxu0 0.0
  %608 = vmatpush1.msra.mxu0 0.0
  %609 = vmatprep.subr.mxu0 0.0
  %610 = vmatpush1.msra.mxu0 0.0
  %611 = vmatprep.subr.mxu0 0.0
  %612 = vmatpush1.msra.mxu0 0.0
  %613 = vmatprep.subr.mxu0 0.0
  %614 = vmatpush1.msra.mxu0 0.0
  %615 = vmatprep.subr.mxu0 0.0
  %616 = vmatpush1.msra.mxu0 0.0
  %617 = vmatprep.subr.mxu0 0.0
  %618 = vmatpush1.msra.mxu0 0.0
  %619 = vmatprep.mubr.f32.mxu0 0.0
  %620 = vmatmul.mubr.f32.gmra.mrb[0].mxu0 %v553
  %v621 = vpop.f32.mrb[0].mxu0
  %v622 = vadd.f32 %v251, %v621
  %v623 = vpop.f32.mrb[0].mxu0
  %624 = vdwg.mxu0
  %v625 = vld [vmem:[#allocation2 + $0x2] sm:$0x1]
  %v626 = vld [vmem:[#allocation2 + $0x22] sm:$0x1]
  %v628 = vrot.slane %v622, 1
  %v631 = vadd.f32 %v625, %v622
  %v632 = vadd.f32 %v626, %v628
  %v633 = vxor.u32 %v631, 2147483648
  %v634 = vxor.u32 %v632, 2147483648
  %v635 = vmul.f32 %v633, 1.442695
  %v636 = vpow.pop %v635
  %v637 = vmul.f32 %v634, 1.442695
  %v638 = vpow.pop %v637
  %v639 = vadd.f32 %v636, 1.0
  %v640 = vadd.f32 %v638, 1.0
  %v641 = vrcp.pop %v639
  %v642 = vmul.f32 1.0, %v641
  %v643 = vrcp.pop %v640
  %v644 = vmul.f32 1.0, %v643
  %645 = vrot.lane.b32.xlu0 %v622, 64
  %v646 = vpop.permute.xlu0 %645
  %647 = vrot.lane.b32.xlu0 %v628, 64
  %v648 = vpop.permute.xlu0 %647
  %v651 = vmul.f32 %v642, %v646
  %v652 = vmul.f32 %v644, %v648
  %655 = vrot.lane.b32.xlu0 %v651, 64
  %v656 = vpop.permute.xlu0 %655
  %657 = vrot.lane.b32.xlu0 %v652, 64
  %v658 = vpop.permute.xlu0 %657
  %v661 = vadd.f32 %v625, %v656
  %v662 = vadd.f32 %v626, %v658
  %v663 = vtanh.pop %v661
  %v664 = vtanh.pop %v662
  %v665 = vsub.f32 %v537, %v663
  %v666 = vsub.f32 %v538, %v664
  %669 = vrot.lane.b32.xlu0 %v665, 96
  %v670 = vpop.permute.xlu0 %669
  %671 = vrot.lane.b32.xlu0 %v666, 96
  %v672 = vpop.permute.xlu0 %671
  %v675 = vmul.f32 %v642, %v670
  %v676 = vmul.f32 %v644, %v672
  %679 = vrot.lane.b32.xlu0 %v675, 32
  %v680 = vpop.permute.xlu0 %679
  %681 = vrot.lane.b32.xlu0 %v676, 32
  %v682 = vpop.permute.xlu0 %681
  %v685 = vadd.f32 %v663, %v680
  %v686 = vadd.f32 %v664, %v682
  %689 = vrot.lane.b32.xlu0 %v685, 64
  %v690 = vpop.permute.xlu0 %689
  %691 = vrot.lane.b32.xlu0 %v686, 64
  %v692 = vpop.permute.xlu0 %691
  %695 = vst.msk [vmem:[%s5 + $0x2] sm:$0x1] %vm397, %v690
  %696 = vst.msk [vmem:[%s5 + $0x22] sm:$0x1] %vm397, %v692
  %v697 = vrot.slane %v686, 7
  %v698 = vsel %vm401, %v697, %v685
  %699 = vrot.lane.b32.xlu0 %v698, 64
  %v700 = vpop.permute.xlu0 %699
  %v701 = vsel %vm253, %v700, 0
  %703 = vmatprep.subr.mxu0 0.0
  %704 = vmatpush1.msra.mxu0 %v23
  %705 = vmatprep.subr.mxu0 0.0
  %706 = vmatpush1.msra.mxu0 %v24
  %707 = vmatprep.subr.mxu0 0.0
  %708 = vmatpush1.msra.mxu0 %v25
  %709 = vmatprep.subr.mxu0 0.0
  %710 = vmatpush1.msra.mxu0 %v26
  %711 = vmatprep.subr.mxu0 0.0
  %712 = vmatpush1.msra.mxu0 0.0
  %713 = vmatprep.subr.mxu0 0.0
  %714 = vmatpush1.msra.mxu0 0.0
  %715 = vmatprep.subr.mxu0 0.0
  %716 = vmatpush1.msra.mxu0 0.0
  %717 = vmatprep.subr.mxu0 0.0
  %718 = vmatpush1.msra.mxu0 0.0
  %719 = vmatprep.subr.mxu0 0.0
  %720 = vmatpush1.msra.mxu0 0.0
  %721 = vmatprep.subr.mxu0 0.0
  %722 = vmatpush1.msra.mxu0 0.0
  %723 = vmatprep.subr.mxu0 0.0
  %724 = vmatpush1.msra.mxu0 0.0
  %725 = vmatprep.subr.mxu0 0.0
  %726 = vmatpush1.msra.mxu0 0.0
  %727 = vmatprep.subr.mxu0 0.0
  %728 = vmatpush1.msra.mxu0 0.0
  %729 = vmatprep.subr.mxu0 0.0
  %730 = vmatpush1.msra.mxu0 0.0
  %731 = vmatprep.subr.mxu0 0.0
  %732 = vmatpush1.msra.mxu0 0.0
  %733 = vmatprep.subr.mxu0 0.0
  %734 = vmatpush1.msra.mxu0 0.0
  %735 = vmatprep.subr.mxu0 0.0
  %736 = vmatpush1.msra.mxu0 0.0
  %737 = vmatprep.subr.mxu0 0.0
  %738 = vmatpush1.msra.mxu0 0.0
  %739 = vmatprep.subr.mxu0 0.0
  %740 = vmatpush1.msra.mxu0 0.0
  %741 = vmatprep.subr.mxu0 0.0
  %742 = vmatpush1.msra.mxu0 0.0
  %743 = vmatprep.subr.mxu0 0.0
  %744 = vmatpush1.msra.mxu0 0.0
  %745 = vmatprep.subr.mxu0 0.0
  %746 = vmatpush1.msra.mxu0 0.0
  %747 = vmatprep.subr.mxu0 0.0
  %748 = vmatpush1.msra.mxu0 0.0
  %749 = vmatprep.subr.mxu0 0.0
  %750 = vmatpush1.msra.mxu0 0.0
  %751 = vmatprep.subr.mxu0 0.0
  %752 = vmatpush1.msra.mxu0 0.0
  %753 = vmatprep.subr.mxu0 0.0
  %754 = vmatpush1.msra.mxu0 0.0
  %755 = vmatprep.subr.mxu0 0.0
  %756 = vmatpush1.msra.mxu0 0.0
  %757 = vmatprep.subr.mxu0 0.0
  %758 = vmatpush1.msra.mxu0 0.0
  %759 = vmatprep.subr.mxu0 0.0
  %760 = vmatpush1.msra.mxu0 0.0
  %761 = vmatprep.subr.mxu0 0.0
  %762 = vmatpush1.msra.mxu0 0.0
  %763 = vmatprep.subr.mxu0 0.0
  %764 = vmatpush1.msra.mxu0 0.0
  %765 = vmatprep.subr.mxu0 0.0
  %766 = vmatpush1.msra.mxu0 0.0
  %767 = vmatprep.mubr.f32.mxu0 0.0
  %768 = vmatmul.mubr.f32.gmra.mrb[0].mxu0 %v701
  %v769 = vpop.f32.mrb[0].mxu0
  %v770 = vadd.f32 %v251, %v769
  %v771 = vpop.f32.mrb[0].mxu0
  %772 = vdwg.mxu0
  %v773 = vld [vmem:[#allocation2 + $0x3] sm:$0x1]
  %v774 = vld [vmem:[#allocation2 + $0x23] sm:$0x1]
  %v776 = vrot.slane %v770, 1
  %v779 = vadd.f32 %v773, %v770
  %v780 = vadd.f32 %v774, %v776
  %v781 = vxor.u32 %v779, 2147483648
  %v782 = vxor.u32 %v780, 2147483648
  %v783 = vmul.f32 %v781, 1.442695
  %v784 = vpow.pop %v783
  %v785 = vmul.f32 %v782, 1.442695
  %v786 = vpow.pop %v785
  %v787 = vadd.f32 %v784, 1.0
  %v788 = vadd.f32 %v786, 1.0
  %v789 = vrcp.pop %v787
  %v790 = vmul.f32 1.0, %v789
  %v791 = vrcp.pop %v788
  %v792 = vmul.f32 1.0, %v791
  %793 = vrot.lane.b32.xlu0 %v770, 64
  %v794 = vpop.permute.xlu0 %793
  %795 = vrot.lane.b32.xlu0 %v776, 64
  %v796 = vpop.permute.xlu0 %795
  %v799 = vmul.f32 %v790, %v794
  %v800 = vmul.f32 %v792, %v796
  %803 = vrot.lane.b32.xlu0 %v799, 64
  %v804 = vpop.permute.xlu0 %803
  %805 = vrot.lane.b32.xlu0 %v800, 64
  %v806 = vpop.permute.xlu0 %805
  %v809 = vadd.f32 %v773, %v804
  %v810 = vadd.f32 %v774, %v806
  %v811 = vtanh.pop %v809
  %v812 = vtanh.pop %v810
  %v813 = vsub.f32 %v685, %v811
  %v814 = vsub.f32 %v686, %v812
  %817 = vrot.lane.b32.xlu0 %v813, 96
  %v818 = vpop.permute.xlu0 %817
  %819 = vrot.lane.b32.xlu0 %v814, 96
  %v820 = vpop.permute.xlu0 %819
  %v823 = vmul.f32 %v790, %v818
  %v824 = vmul.f32 %v792, %v820
  %827 = vrot.lane.b32.xlu0 %v823, 32
  %v828 = vpop.permute.xlu0 %827
  %829 = vrot.lane.b32.xlu0 %v824, 32
  %v830 = vpop.permute.xlu0 %829
  %v833 = vadd.f32 %v811, %v828
  %v834 = vadd.f32 %v812, %v830
  %837 = vrot.lane.b32.xlu0 %v833, 64
  %v838 = vpop.permute.xlu0 %837
  %839 = vrot.lane.b32.xlu0 %v834, 64
  %v840 = vpop.permute.xlu0 %839
  %843 = vst.msk [vmem:[%s5 + $0x3] sm:$0x1] %vm397, %v838
  %844 = vst.msk [vmem:[%s5 + $0x23] sm:$0x1] %vm397, %v840
  %v845 = vrot.slane %v834, 7
  %v846 = vsel %vm401, %v845, %v833
  %847 = vrot.lane.b32.xlu0 %v846, 64
  %v848 = vpop.permute.xlu0 %847
  %v849 = vsel %vm253, %v848, 0
  %851 = vmatprep.subr.mxu0 0.0
  %852 = vmatpush1.msra.mxu0 %v23
  %853 = vmatprep.subr.mxu0 0.0
  %854 = vmatpush1.msra.mxu0 %v24
  %855 = vmatprep.subr.mxu0 0.0
  %856 = vmatpush1.msra.mxu0 %v25
  %857 = vmatprep.subr.mxu0 0.0
  %858 = vmatpush1.msra.mxu0 %v26
  %859 = vmatprep.subr.mxu0 0.0
  %860 = vmatpush1.msra.mxu0 0.0
  %861 = vmatprep.subr.mxu0 0.0
  %862 = vmatpush1.msra.mxu0 0.0
  %863 = vmatprep.subr.mxu0 0.0
  %864 = vmatpush1.msra.mxu0 0.0
  %865 = vmatprep.subr.mxu0 0.0
  %866 = vmatpush1.msra.mxu0 0.0
  %867 = vmatprep.subr.mxu0 0.0
  %868 = vmatpush1.msra.mxu0 0.0
  %869 = vmatprep.subr.mxu0 0.0
  %870 = vmatpush1.msra.mxu0 0.0
  %871 = vmatprep.subr.mxu0 0.0
  %872 = vmatpush1.msra.mxu0 0.0
  %873 = vmatprep.subr.mxu0 0.0
  %874 = vmatpush1.msra.mxu0 0.0
  %875 = vmatprep.subr.mxu0 0.0
  %876 = vmatpush1.msra.mxu0 0.0
  %877 = vmatprep.subr.mxu0 0.0
  %878 = vmatpush1.msra.mxu0 0.0
  %879 = vmatprep.subr.mxu0 0.0
  %880 = vmatpush1.msra.mxu0 0.0
  %881 = vmatprep.subr.mxu0 0.0
  %882 = vmatpush1.msra.mxu0 0.0
  %883 = vmatprep.subr.mxu0 0.0
  %884 = vmatpush1.msra.mxu0 0.0
  %885 = vmatprep.subr.mxu0 0.0
  %886 = vmatpush1.msra.mxu0 0.0
  %887 = vmatprep.subr.mxu0 0.0
  %888 = vmatpush1.msra.mxu0 0.0
  %889 = vmatprep.subr.mxu0 0.0
  %890 = vmatpush1.msra.mxu0 0.0
  %891 = vmatprep.subr.mxu0 0.0
  %892 = vmatpush1.msra.mxu0 0.0
  %893 = vmatprep.subr.mxu0 0.0
  %894 = vmatpush1.msra.mxu0 0.0
  %895 = vmatprep.subr.mxu0 0.0
  %896 = vmatpush1.msra.mxu0 0.0
  %897 = vmatprep.subr.mxu0 0.0
  %898 = vmatpush1.msra.mxu0 0.0
  %899 = vmatprep.subr.mxu0 0.0
  %900 = vmatpush1.msra.mxu0 0.0
  %901 = vmatprep.subr.mxu0 0.0
  %902 = vmatpush1.msra.mxu0 0.0
  %903 = vmatprep.subr.mxu0 0.0
  %904 = vmatpush1.msra.mxu0 0.0
  %905 = vmatprep.subr.mxu0 0.0
  %906 = vmatpush1.msra.mxu0 0.0
  %907 = vmatprep.subr.mxu0 0.0
  %908 = vmatpush1.msra.mxu0 0.0
  %909 = vmatprep.subr.mxu0 0.0
  %910 = vmatpush1.msra.mxu0 0.0
  %911 = vmatprep.subr.mxu0 0.0
  %912 = vmatpush1.msra.mxu0 0.0
  %913 = vmatprep.subr.mxu0 0.0
  %914 = vmatpush1.msra.mxu0 0.0
  %915 = vmatprep.mubr.f32.mxu0 0.0
  %916 = vmatmul.mubr.f32.gmra.mrb[0].mxu0 %v849
  %v917 = vpop.f32.mrb[0].mxu0
  %v918 = vadd.f32 %v251, %v917
  %v919 = vpop.f32.mrb[0].mxu0
  %920 = vdwg.mxu0
  %v921 = vld [vmem:[#allocation2 + $0x4] sm:$0x1]
  %v922 = vld [vmem:[#allocation2 + $0x24] sm:$0x1]
  %v924 = vrot.slane %v918, 1
  %v927 = vadd.f32 %v921, %v918
  %v928 = vadd.f32 %v922, %v924
  %v929 = vxor.u32 %v927, 2147483648
  %v930 = vxor.u32 %v928, 2147483648
  %v931 = vmul.f32 %v929, 1.442695
  %v932 = vpow.pop %v931
  %v933 = vmul.f32 %v930, 1.442695
  %v934 = vpow.pop %v933
  %v935 = vadd.f32 %v932, 1.0
  %v936 = vadd.f32 %v934, 1.0
  %v937 = vrcp.pop %v935
  %v938 = vmul.f32 1.0, %v937
  %v939 = vrcp.pop %v936
  %v940 = vmul.f32 1.0, %v939
  %941 = vrot.lane.b32.xlu0 %v918, 64
  %v942 = vpop.permute.xlu0 %941
  %943 = vrot.lane.b32.xlu0 %v924, 64
  %v944 = vpop.permute.xlu0 %943
  %v947 = vmul.f32 %v938, %v942
  %v948 = vmul.f32 %v940, %v944
  %951 = vrot.lane.b32.xlu0 %v947, 64
  %v952 = vpop.permute.xlu0 %951
  %953 = vrot.lane.b32.xlu0 %v948, 64
  %v954 = vpop.permute.xlu0 %953
  %v957 = vadd.f32 %v921, %v952
  %v958 = vadd.f32 %v922, %v954
  %v959 = vtanh.pop %v957
  %v960 = vtanh.pop %v958
  %v961 = vsub.f32 %v833, %v959
  %v962 = vsub.f32 %v834, %v960
  %965 = vrot.lane.b32.xlu0 %v961, 96
  %v966 = vpop.permute.xlu0 %965
  %967 = vrot.lane.b32.xlu0 %v962, 96
  %v968 = vpop.permute.xlu0 %967
  %v971 = vmul.f32 %v938, %v966
  %v972 = vmul.f32 %v940, %v968
  %975 = vrot.lane.b32.xlu0 %v971, 32
  %v976 = vpop.permute.xlu0 %975
  %977 = vrot.lane.b32.xlu0 %v972, 32
  %v978 = vpop.permute.xlu0 %977
  %v981 = vadd.f32 %v959, %v976
  %v982 = vadd.f32 %v960, %v978
  %985 = vrot.lane.b32.xlu0 %v981, 64
  %v986 = vpop.permute.xlu0 %985
  %987 = vrot.lane.b32.xlu0 %v982, 64
  %v988 = vpop.permute.xlu0 %987
  %991 = vst.msk [vmem:[%s5 + $0x4] sm:$0x1] %vm397, %v986
  %992 = vst.msk [vmem:[%s5 + $0x24] sm:$0x1] %vm397, %v988
  %v993 = vrot.slane %v982, 7
  %v994 = vsel %vm401, %v993, %v981
  %995 = vrot.lane.b32.xlu0 %v994, 64
  %v996 = vpop.permute.xlu0 %995
  %v997 = vsel %vm253, %v996, 0
  %999 = vmatprep.subr.mxu0 0.0
  %1000 = vmatpush1.msra.mxu0 %v23
  %1001 = vmatprep.subr.mxu0 0.0
  %1002 = vmatpush1.msra.mxu0 %v24
  %1003 = vmatprep.subr.mxu0 0.0
  %1004 = vmatpush1.msra.mxu0 %v25
  %1005 = vmatprep.subr.mxu0 0.0
  %1006 = vmatpush1.msra.mxu0 %v26
  %1007 = vmatprep.subr.mxu0 0.0
  %1008 = vmatpush1.msra.mxu0 0.0
  %1009 = vmatprep.subr.mxu0 0.0
  %1010 = vmatpush1.msra.mxu0 0.0
  %1011 = vmatprep.subr.mxu0 0.0
  %1012 = vmatpush1.msra.mxu0 0.0
  %1013 = vmatprep.subr.mxu0 0.0
  %1014 = vmatpush1.msra.mxu0 0.0
  %1015 = vmatprep.subr.mxu0 0.0
  %1016 = vmatpush1.msra.mxu0 0.0
  %1017 = vmatprep.subr.mxu0 0.0
  %1018 = vmatpush1.msra.mxu0 0.0
  %1019 = vmatprep.subr.mxu0 0.0
  %1020 = vmatpush1.msra.mxu0 0.0
  %1021 = vmatprep.subr.mxu0 0.0
  %1022 = vmatpush1.msra.mxu0 0.0
  %1023 = vmatprep.subr.mxu0 0.0
  %1024 = vmatpush1.msra.mxu0 0.0
  %1025 = vmatprep.subr.mxu0 0.0
  %1026 = vmatpush1.msra.mxu0 0.0
  %1027 = vmatprep.subr.mxu0 0.0
  %1028 = vmatpush1.msra.mxu0 0.0
  %1029 = vmatprep.subr.mxu0 0.0
  %1030 = vmatpush1.msra.mxu0 0.0
  %1031 = vmatprep.subr.mxu0 0.0
  %1032 = vmatpush1.msra.mxu0 0.0
  %1033 = vmatprep.subr.mxu0 0.0
  %1034 = vmatpush1.msra.mxu0 0.0
  %1035 = vmatprep.subr.mxu0 0.0
  %1036 = vmatpush1.msra.mxu0 0.0
  %1037 = vmatprep.subr.mxu0 0.0
  %1038 = vmatpush1.msra.mxu0 0.0
  %1039 = vmatprep.subr.mxu0 0.0
  %1040 = vmatpush1.msra.mxu0 0.0
  %1041 = vmatprep.subr.mxu0 0.0
  %1042 = vmatpush1.msra.mxu0 0.0
  %1043 = vmatprep.subr.mxu0 0.0
  %1044 = vmatpush1.msra.mxu0 0.0
  %1045 = vmatprep.subr.mxu0 0.0
  %1046 = vmatpush1.msra.mxu0 0.0
  %1047 = vmatprep.subr.mxu0 0.0
  %1048 = vmatpush1.msra.mxu0 0.0
  %1049 = vmatprep.subr.mxu0 0.0
  %1050 = vmatpush1.msra.mxu0 0.0
  %1051 = vmatprep.subr.mxu0 0.0
  %1052 = vmatpush1.msra.mxu0 0.0
  %1053 = vmatprep.subr.mxu0 0.0
  %1054 = vmatpush1.msra.mxu0 0.0
  %1055 = vmatprep.subr.mxu0 0.0
  %1056 = vmatpush1.msra.mxu0 0.0
  %1057 = vmatprep.subr.mxu0 0.0
  %1058 = vmatpush1.msra.mxu0 0.0
  %1059 = vmatprep.subr.mxu0 0.0
  %1060 = vmatpush1.msra.mxu0 0.0
  %1061 = vmatprep.subr.mxu0 0.0
  %1062 = vmatpush1.msra.mxu0 0.0
  %1063 = vmatprep.mubr.f32.mxu0 0.0
  %1064 = vmatmul.mubr.f32.gmra.mrb[0].mxu0 %v997
  %v1065 = vpop.f32.mrb[0].mxu0
  %v1066 = vadd.f32 %v251, %v1065
  %v1067 = vpop.f32.mrb[0].mxu0
  %1068 = vdwg.mxu0
  %v1069 = vld [vmem:[#allocation2 + $0x5] sm:$0x1]
  %v1070 = vld [vmem:[#allocation2 + $0x25] sm:$0x1]
  %v1072 = vrot.slane %v1066, 1
  %v1075 = vadd.f32 %v1069, %v1066
  %v1076 = vadd.f32 %v1070, %v1072
  %v1077 = vxor.u32 %v1075, 2147483648
  %v1078 = vxor.u32 %v1076, 2147483648
  %v1079 = vmul.f32 %v1077, 1.442695
  %v1080 = vpow.pop %v1079
  %v1081 = vmul.f32 %v1078, 1.442695
  %v1082 = vpow.pop %v1081
  %v1083 = vadd.f32 %v1080, 1.0
  %v1084 = vadd.f32 %v1082, 1.0
  %v1085 = vrcp.pop %v1083
  %v1086 = vmul.f32 1.0, %v1085
  %v1087 = vrcp.pop %v1084
  %v1088 = vmul.f32 1.0, %v1087
  %1089 = vrot.lane.b32.xlu0 %v1066, 64
  %v1090 = vpop.permute.xlu0 %1089
  %1091 = vrot.lane.b32.xlu0 %v1072, 64
  %v1092 = vpop.permute.xlu0 %1091
  %v1095 = vmul.f32 %v1086, %v1090
  %v1096 = vmul.f32 %v1088, %v1092
  %1099 = vrot.lane.b32.xlu0 %v1095, 64
  %v1100 = vpop.permute.xlu0 %1099
  %1101 = vrot.lane.b32.xlu0 %v1096, 64
  %v1102 = vpop.permute.xlu0 %1101
  %v1105 = vadd.f32 %v1069, %v1100
  %v1106 = vadd.f32 %v1070, %v1102
  %v1107 = vtanh.pop %v1105
  %v1108 = vtanh.pop %v1106
  %v1109 = vsub.f32 %v981, %v1107
  %v1110 = vsub.f32 %v982, %v1108
  %1113 = vrot.lane.b32.xlu0 %v1109, 96
  %v1114 = vpop.permute.xlu0 %1113
  %1115 = vrot.lane.b32.xlu0 %v1110, 96
  %v1116 = vpop.permute.xlu0 %1115
  %v1119 = vmul.f32 %v1086, %v1114
  %v1120 = vmul.f32 %v1088, %v1116
  %1123 = vrot.lane.b32.xlu0 %v1119, 32
  %v1124 = vpop.permute.xlu0 %1123
  %1125 = vrot.lane.b32.xlu0 %v1120, 32
  %v1126 = vpop.permute.xlu0 %1125
  %v1129 = vadd.f32 %v1107, %v1124
  %v1130 = vadd.f32 %v1108, %v1126
  %1133 = vrot.lane.b32.xlu0 %v1129, 64
  %v1134 = vpop.permute.xlu0 %1133
  %1135 = vrot.lane.b32.xlu0 %v1130, 64
  %v1136 = vpop.permute.xlu0 %1135
  %1139 = vst.msk [vmem:[%s5 + $0x5] sm:$0x1] %vm397, %v1134
  %1140 = vst.msk [vmem:[%s5 + $0x25] sm:$0x1] %vm397, %v1136
  %v1141 = vrot.slane %v1130, 7
  %v1142 = vsel %vm401, %v1141, %v1129
  %1143 = vrot.lane.b32.xlu0 %v1142, 64
  %v1144 = vpop.permute.xlu0 %1143
  %v1145 = vsel %vm253, %v1144, 0
  %1147 = vmatprep.subr.mxu0 0.0
  %1148 = vmatpush1.msra.mxu0 %v23
  %1149 = vmatprep.subr.mxu0 0.0
  %1150 = vmatpush1.msra.mxu0 %v24
  %1151 = vmatprep.subr.mxu0 0.0
  %1152 = vmatpush1.msra.mxu0 %v25
  %1153 = vmatprep.subr.mxu0 0.0
  %1154 = vmatpush1.msra.mxu0 %v26
  %1155 = vmatprep.subr.mxu0 0.0
  %1156 = vmatpush1.msra.mxu0 0.0
  %1157 = vmatprep.subr.mxu0 0.0
  %1158 = vmatpush1.msra.mxu0 0.0
  %1159 = vmatprep.subr.mxu0 0.0
  %1160 = vmatpush1.msra.mxu0 0.0
  %1161 = vmatprep.subr.mxu0 0.0
  %1162 = vmatpush1.msra.mxu0 0.0
  %1163 = vmatprep.subr.mxu0 0.0
  %1164 = vmatpush1.msra.mxu0 0.0
  %1165 = vmatprep.subr.mxu0 0.0
  %1166 = vmatpush1.msra.mxu0 0.0
  %1167 = vmatprep.subr.mxu0 0.0
  %1168 = vmatpush1.msra.mxu0 0.0
  %1169 = vmatprep.subr.mxu0 0.0
  %1170 = vmatpush1.msra.mxu0 0.0
  %1171 = vmatprep.subr.mxu0 0.0
  %1172 = vmatpush1.msra.mxu0 0.0
  %1173 = vmatprep.subr.mxu0 0.0
  %1174 = vmatpush1.msra.mxu0 0.0
  %1175 = vmatprep.subr.mxu0 0.0
  %1176 = vmatpush1.msra.mxu0 0.0
  %1177 = vmatprep.subr.mxu0 0.0
  %1178 = vmatpush1.msra.mxu0 0.0
  %1179 = vmatprep.subr.mxu0 0.0
  %1180 = vmatpush1.msra.mxu0 0.0
  %1181 = vmatprep.subr.mxu0 0.0
  %1182 = vmatpush1.msra.mxu0 0.0
  %1183 = vmatprep.subr.mxu0 0.0
  %1184 = vmatpush1.msra.mxu0 0.0
  %1185 = vmatprep.subr.mxu0 0.0
  %1186 = vmatpush1.msra.mxu0 0.0
  %1187 = vmatprep.subr.mxu0 0.0
  %1188 = vmatpush1.msra.mxu0 0.0
  %1189 = vmatprep.subr.mxu0 0.0
  %1190 = vmatpush1.msra.mxu0 0.0
  %1191 = vmatprep.subr.mxu0 0.0
  %1192 = vmatpush1.msra.mxu0 0.0
  %1193 = vmatprep.subr.mxu0 0.0
  %1194 = vmatpush1.msra.mxu0 0.0
  %1195 = vmatprep.subr.mxu0 0.0
  %1196 = vmatpush1.msra.mxu0 0.0
  %1197 = vmatprep.subr.mxu0 0.0
  %1198 = vmatpush1.msra.mxu0 0.0
  %1199 = vmatprep.subr.mxu0 0.0
  %1200 = vmatpush1.msra.mxu0 0.0
  %1201 = vmatprep.subr.mxu0 0.0
  %1202 = vmatpush1.msra.mxu0 0.0
  %1203 = vmatprep.subr.mxu0 0.0
  %1204 = vmatpush1.msra.mxu0 0.0
  %1205 = vmatprep.subr.mxu0 0.0
  %1206 = vmatpush1.msra.mxu0 0.0
  %1207 = vmatprep.subr.mxu0 0.0
  %1208 = vmatpush1.msra.mxu0 0.0
  %1209 = vmatprep.subr.mxu0 0.0
  %1210 = vmatpush1.msra.mxu0 0.0
  %1211 = vmatprep.mubr.f32.mxu0 0.0
  %1212 = vmatmul.mubr.f32.gmra.mrb[0].mxu0 %v1145
  %v1213 = vpop.f32.mrb[0].mxu0
  %v1214 = vadd.f32 %v251, %v1213
  %v1215 = vpop.f32.mrb[0].mxu0
  %1216 = vdwg.mxu0
  %v1217 = vld [vmem:[#allocation2 + $0x6] sm:$0x1]
  %v1218 = vld [vmem:[#allocation2 + $0x26] sm:$0x1]
  %v1220 = vrot.slane %v1214, 1
  %v1223 = vadd.f32 %v1217, %v1214
  %v1224 = vadd.f32 %v1218, %v1220
  %v1225 = vxor.u32 %v1223, 2147483648
  %v1226 = vxor.u32 %v1224, 2147483648
  %v1227 = vmul.f32 %v1225, 1.442695
  %v1228 = vpow.pop %v1227
  %v1229 = vmul.f32 %v1226, 1.442695
  %v1230 = vpow.pop %v1229
  %v1231 = vadd.f32 %v1228, 1.0
  %v1232 = vadd.f32 %v1230, 1.0
  %v1233 = vrcp.pop %v1231
  %v1234 = vmul.f32 1.0, %v1233
  %v1235 = vrcp.pop %v1232
  %v1236 = vmul.f32 1.0, %v1235
  %1237 = vrot.lane.b32.xlu0 %v1214, 64
  %v1238 = vpop.permute.xlu0 %1237
  %1239 = vrot.lane.b32.xlu0 %v1220, 64
  %v1240 = vpop.permute.xlu0 %1239
  %v1243 = vmul.f32 %v1234, %v1238
  %v1244 = vmul.f32 %v1236, %v1240
  %1247 = vrot.lane.b32.xlu0 %v1243, 64
  %v1248 = vpop.permute.xlu0 %1247
  %1249 = vrot.lane.b32.xlu0 %v1244, 64
  %v1250 = vpop.permute.xlu0 %1249
  %v1253 = vadd.f32 %v1217, %v1248
  %v1254 = vadd.f32 %v1218, %v1250
  %v1255 = vtanh.pop %v1253
  %v1256 = vtanh.pop %v1254
  %v1257 = vsub.f32 %v1129, %v1255
  %v1258 = vsub.f32 %v1130, %v1256
  %1261 = vrot.lane.b32.xlu0 %v1257, 96
  %v1262 = vpop.permute.xlu0 %1261
  %1263 = vrot.lane.b32.xlu0 %v1258, 96
  %v1264 = vpop.permute.xlu0 %1263
  %v1267 = vmul.f32 %v1234, %v1262
  %v1268 = vmul.f32 %v1236, %v1264
  %1271 = vrot.lane.b32.xlu0 %v1267, 32
  %v1272 = vpop.permute.xlu0 %1271
  %1273 = vrot.lane.b32.xlu0 %v1268, 32
  %v1274 = vpop.permute.xlu0 %1273
  %v1277 = vadd.f32 %v1255, %v1272
  %v1278 = vadd.f32 %v1256, %v1274
  %1281 = vrot.lane.b32.xlu0 %v1277, 64
  %v1282 = vpop.permute.xlu0 %1281
  %1283 = vrot.lane.b32.xlu0 %v1278, 64
  %v1284 = vpop.permute.xlu0 %1283
  %1287 = vst.msk [vmem:[%s5 + $0x6] sm:$0x1] %vm397, %v1282
  %1288 = vst.msk [vmem:[%s5 + $0x26] sm:$0x1] %vm397, %v1284
  %v1289 = vrot.slane %v1278, 7
  %v1290 = vsel %vm401, %v1289, %v1277
  %1291 = vrot.lane.b32.xlu0 %v1290, 64
  %v1292 = vpop.permute.xlu0 %1291
  %v1293 = vsel %vm253, %v1292, 0
  %1295 = vmatprep.subr.mxu0 0.0
  %1296 = vmatpush1.msra.mxu0 %v23
  %1297 = vmatprep.subr.mxu0 0.0
  %1298 = vmatpush1.msra.mxu0 %v24
  %1299 = vmatprep.subr.mxu0 0.0
  %1300 = vmatpush1.msra.mxu0 %v25
  %1301 = vmatprep.subr.mxu0 0.0
  %1302 = vmatpush1.msra.mxu0 %v26
  %1303 = vmatprep.subr.mxu0 0.0
  %1304 = vmatpush1.msra.mxu0 0.0
  %1305 = vmatprep.subr.mxu0 0.0
  %1306 = vmatpush1.msra.mxu0 0.0
  %1307 = vmatprep.subr.mxu0 0.0
  %1308 = vmatpush1.msra.mxu0 0.0
  %1309 = vmatprep.subr.mxu0 0.0
  %1310 = vmatpush1.msra.mxu0 0.0
  %1311 = vmatprep.subr.mxu0 0.0
  %1312 = vmatpush1.msra.mxu0 0.0
  %1313 = vmatprep.subr.mxu0 0.0
  %1314 = vmatpush1.msra.mxu0 0.0
  %1315 = vmatprep.subr.mxu0 0.0
  %1316 = vmatpush1.msra.mxu0 0.0
  %1317 = vmatprep.subr.mxu0 0.0
  %1318 = vmatpush1.msra.mxu0 0.0
  %1319 = vmatprep.subr.mxu0 0.0
  %1320 = vmatpush1.msra.mxu0 0.0
  %1321 = vmatprep.subr.mxu0 0.0
  %1322 = vmatpush1.msra.mxu0 0.0
  %1323 = vmatprep.subr.mxu0 0.0
  %1324 = vmatpush1.msra.mxu0 0.0
  %1325 = vmatprep.subr.mxu0 0.0
  %1326 = vmatpush1.msra.mxu0 0.0
  %1327 = vmatprep.subr.mxu0 0.0
  %1328 = vmatpush1.msra.mxu0 0.0
  %1329 = vmatprep.subr.mxu0 0.0
  %1330 = vmatpush1.msra.mxu0 0.0
  %1331 = vmatprep.subr.mxu0 0.0
  %1332 = vmatpush1.msra.mxu0 0.0
  %1333 = vmatprep.subr.mxu0 0.0
  %1334 = vmatpush1.msra.mxu0 0.0
  %1335 = vmatprep.subr.mxu0 0.0
  %1336 = vmatpush1.msra.mxu0 0.0
  %1337 = vmatprep.subr.mxu0 0.0
  %1338 = vmatpush1.msra.mxu0 0.0
  %1339 = vmatprep.subr.mxu0 0.0
  %1340 = vmatpush1.msra.mxu0 0.0
  %1341 = vmatprep.subr.mxu0 0.0
  %1342 = vmatpush1.msra.mxu0 0.0
  %1343 = vmatprep.subr.mxu0 0.0
  %1344 = vmatpush1.msra.mxu0 0.0
  %1345 = vmatprep.subr.mxu0 0.0
  %1346 = vmatpush1.msra.mxu0 0.0
  %1347 = vmatprep.subr.mxu0 0.0
  %1348 = vmatpush1.msra.mxu0 0.0
  %1349 = vmatprep.subr.mxu0 0.0
  %1350 = vmatpush1.msra.mxu0 0.0
  %1351 = vmatprep.subr.mxu0 0.0
  %1352 = vmatpush1.msra.mxu0 0.0
  %1353 = vmatprep.subr.mxu0 0.0
  %1354 = vmatpush1.msra.mxu0 0.0
  %1355 = vmatprep.subr.mxu0 0.0
  %1356 = vmatpush1.msra.mxu0 0.0
  %1357 = vmatprep.subr.mxu0 0.0
  %1358 = vmatpush1.msra.mxu0 0.0
  %1359 = vmatprep.mubr.f32.mxu0 0.0
  %1360 = vmatmul.mubr.f32.gmra.mrb[0].mxu0 %v1293
  %v1361 = vpop.f32.mrb[0].mxu0
  %v1362 = vadd.f32 %v251, %v1361
  %v1363 = vpop.f32.mrb[0].mxu0
  %1364 = vdwg.mxu0
  %v1365 = vld [vmem:[#allocation2 + $0x7] sm:$0x1]
  %v1366 = vld [vmem:[#allocation2 + $0x27] sm:$0x1]
  %v1368 = vrot.slane %v1362, 1
  %v1371 = vadd.f32 %v1365, %v1362
  %v1372 = vadd.f32 %v1366, %v1368
  %v1373 = vxor.u32 %v1371, 2147483648
  %v1374 = vxor.u32 %v1372, 2147483648
  %v1375 = vmul.f32 %v1373, 1.442695
  %v1376 = vpow.pop %v1375
  %v1377 = vmul.f32 %v1374, 1.442695
  %v1378 = vpow.pop %v1377
  %v1379 = vadd.f32 %v1376, 1.0
  %v1380 = vadd.f32 %v1378, 1.0
  %v1381 = vrcp.pop %v1379
  %v1382 = vmul.f32 1.0, %v1381
  %v1383 = vrcp.pop %v1380
  %v1384 = vmul.f32 1.0, %v1383
  %1385 = vrot.lane.b32.xlu0 %v1362, 64
  %v1386 = vpop.permute.xlu0 %1385
  %1387 = vrot.lane.b32.xlu0 %v1368, 64
  %v1388 = vpop.permute.xlu0 %1387
  %v1391 = vmul.f32 %v1382, %v1386
  %v1392 = vmul.f32 %v1384, %v1388
  %1395 = vrot.lane.b32.xlu0 %v1391, 64
  %v1396 = vpop.permute.xlu0 %1395
  %1397 = vrot.lane.b32.xlu0 %v1392, 64
  %v1398 = vpop.permute.xlu0 %1397
  %v1401 = vadd.f32 %v1365, %v1396
  %v1402 = vadd.f32 %v1366, %v1398
  %v1403 = vtanh.pop %v1401
  %v1404 = vtanh.pop %v1402
  %v1405 = vsub.f32 %v1277, %v1403
  %v1406 = vsub.f32 %v1278, %v1404
  %1409 = vrot.lane.b32.xlu0 %v1405, 96
  %v1410 = vpop.permute.xlu0 %1409
  %1411 = vrot.lane.b32.xlu0 %v1406, 96
  %v1412 = vpop.permute.xlu0 %1411
  %v1415 = vmul.f32 %v1382, %v1410
  %v1416 = vmul.f32 %v1384, %v1412
  %1419 = vrot.lane.b32.xlu0 %v1415, 32
  %v1420 = vpop.permute.xlu0 %1419
  %1421 = vrot.lane.b32.xlu0 %v1416, 32
  %v1422 = vpop.permute.xlu0 %1421
  %v1425 = vadd.f32 %v1403, %v1420
  %v1426 = vadd.f32 %v1404, %v1422
  %1429 = vrot.lane.b32.xlu0 %v1425, 64
  %v1430 = vpop.permute.xlu0 %1429
  %1431 = vrot.lane.b32.xlu0 %v1426, 64
  %v1432 = vpop.permute.xlu0 %1431
  %1435 = vst.msk [vmem:[%s5 + $0x7] sm:$0x1] %vm397, %v1430
  %1436 = vst.msk [vmem:[%s5 + $0x27] sm:$0x1] %vm397, %v1432
  %v1437 = vrot.slane %v1426, 7
  %v1438 = vsel %vm401, %v1437, %v1425
  %1439 = vrot.lane.b32.xlu0 %v1438, 64
  %v1440 = vpop.permute.xlu0 %1439
  %v1441 = vsel %vm253, %v1440, 0
  %1443 = vmatprep.subr.mxu0 0.0
  %1444 = vmatpush1.msra.mxu0 %v23
  %1445 = vmatprep.subr.mxu0 0.0
  %1446 = vmatpush1.msra.mxu0 %v24
  %1447 = vmatprep.subr.mxu0 0.0
  %1448 = vmatpush1.msra.mxu0 %v25
  %1449 = vmatprep.subr.mxu0 0.0
  %1450 = vmatpush1.msra.mxu0 %v26
  %1451 = vmatprep.subr.mxu0 0.0
  %1452 = vmatpush1.msra.mxu0 0.0
  %1453 = vmatprep.subr.mxu0 0.0
  %1454 = vmatpush1.msra.mxu0 0.0
  %1455 = vmatprep.subr.mxu0 0.0
  %1456 = vmatpush1.msra.mxu0 0.0
  %1457 = vmatprep.subr.mxu0 0.0
  %1458 = vmatpush1.msra.mxu0 0.0
  %1459 = vmatprep.subr.mxu0 0.0
  %1460 = vmatpush1.msra.mxu0 0.0
  %1461 = vmatprep.subr.mxu0 0.0
  %1462 = vmatpush1.msra.mxu0 0.0
  %1463 = vmatprep.subr.mxu0 0.0
  %1464 = vmatpush1.msra.mxu0 0.0
  %1465 = vmatprep.subr.mxu0 0.0
  %1466 = vmatpush1.msra.mxu0 0.0
  %1467 = vmatprep.subr.mxu0 0.0
  %1468 = vmatpush1.msra.mxu0 0.0
  %1469 = vmatprep.subr.mxu0 0.0
  %1470 = vmatpush1.msra.mxu0 0.0
  %1471 = vmatprep.subr.mxu0 0.0
  %1472 = vmatpush1.msra.mxu0 0.0
  %1473 = vmatprep.subr.mxu0 0.0
  %1474 = vmatpush1.msra.mxu0 0.0
  %1475 = vmatprep.subr.mxu0 0.0
  %1476 = vmatpush1.msra.mxu0 0.0
  %1477 = vmatprep.subr.mxu0 0.0
  %1478 = vmatpush1.msra.mxu0 0.0
  %1479 = vmatprep.subr.mxu0 0.0
  %1480 = vmatpush1.msra.mxu0 0.0
  %1481 = vmatprep.subr.mxu0 0.0
  %1482 = vmatpush1.msra.mxu0 0.0
  %1483 = vmatprep.subr.mxu0 0.0
  %1484 = vmatpush1.msra.mxu0 0.0
  %1485 = vmatprep.subr.mxu0 0.0
  %1486 = vmatpush1.msra.mxu0 0.0
  %1487 = vmatprep.subr.mxu0 0.0
  %1488 = vmatpush1.msra.mxu0 0.0
  %1489 = vmatprep.subr.mxu0 0.0
  %1490 = vmatpush1.msra.mxu0 0.0
  %1491 = vmatprep.subr.mxu0 0.0
  %1492 = vmatpush1.msra.mxu0 0.0
  %1493 = vmatprep.subr.mxu0 0.0
  %1494 = vmatpush1.msra.mxu0 0.0
  %1495 = vmatprep.subr.mxu0 0.0
  %1496 = vmatpush1.msra.mxu0 0.0
  %1497 = vmatprep.subr.mxu0 0.0
  %1498 = vmatpush1.msra.mxu0 0.0
  %1499 = vmatprep.subr.mxu0 0.0
  %1500 = vmatpush1.msra.mxu0 0.0
  %1501 = vmatprep.subr.mxu0 0.0
  %1502 = vmatpush1.msra.mxu0 0.0
  %1503 = vmatprep.subr.mxu0 0.0
  %1504 = vmatpush1.msra.mxu0 0.0
  %1505 = vmatprep.subr.mxu0 0.0
  %1506 = vmatpush1.msra.mxu0 0.0
  %1507 = vmatprep.mubr.f32.mxu0 0.0
  %1508 = vmatmul.mubr.f32.gmra.mrb[0].mxu0 %v1441
  %v1509 = vpop.f32.mrb[0].mxu0
  %v1510 = vadd.f32 %v251, %v1509
  %v1511 = vpop.f32.mrb[0].mxu0
  %1512 = vdwg.mxu0
  %v1513 = vld [vmem:[#allocation2 + $0x8] sm:$0x1]
  %v1514 = vld [vmem:[#allocation2 + $0x28] sm:$0x1]
  %v1516 = vrot.slane %v1510, 1
  %v1519 = vadd.f32 %v1513, %v1510
  %v1520 = vadd.f32 %v1514, %v1516
  %v1521 = vxor.u32 %v1519, 2147483648
  %v1522 = vxor.u32 %v1520, 2147483648
  %v1523 = vmul.f32 %v1521, 1.442695
  %v1524 = vpow.pop %v1523
  %v1525 = vmul.f32 %v1522, 1.442695
  %v1526 = vpow.pop %v1525
  %v1527 = vadd.f32 %v1524, 1.0
  %v1528 = vadd.f32 %v1526, 1.0
  %v1529 = vrcp.pop %v1527
  %v1530 = vmul.f32 1.0, %v1529
  %v1531 = vrcp.pop %v1528
  %v1532 = vmul.f32 1.0, %v1531
  %1533 = vrot.lane.b32.xlu0 %v1510, 64
  %v1534 = vpop.permute.xlu0 %1533
  %1535 = vrot.lane.b32.xlu0 %v1516, 64
  %v1536 = vpop.permute.xlu0 %1535
  %v1539 = vmul.f32 %v1530, %v1534
  %v1540 = vmul.f32 %v1532, %v1536
  %1543 = vrot.lane.b32.xlu0 %v1539, 64
  %v1544 = vpop.permute.xlu0 %1543
  %1545 = vrot.lane.b32.xlu0 %v1540, 64
  %v1546 = vpop.permute.xlu0 %1545
  %v1549 = vadd.f32 %v1513, %v1544
  %v1550 = vadd.f32 %v1514, %v1546
  %v1551 = vtanh.pop %v1549
  %v1552 = vtanh.pop %v1550
  %v1553 = vsub.f32 %v1425, %v1551
  %v1554 = vsub.f32 %v1426, %v1552
  %1557 = vrot.lane.b32.xlu0 %v1553, 96
  %v1558 = vpop.permute.xlu0 %1557
  %1559 = vrot.lane.b32.xlu0 %v1554, 96
  %v1560 = vpop.permute.xlu0 %1559
  %v1563 = vmul.f32 %v1530, %v1558
  %v1564 = vmul.f32 %v1532, %v1560
  %1567 = vrot.lane.b32.xlu0 %v1563, 32
  %v1568 = vpop.permute.xlu0 %1567
  %1569 = vrot.lane.b32.xlu0 %v1564, 32
  %v1570 = vpop.permute.xlu0 %1569
  %v1573 = vadd.f32 %v1551, %v1568
  %v1574 = vadd.f32 %v1552, %v1570
  %1577 = vrot.lane.b32.xlu0 %v1573, 64
  %v1578 = vpop.permute.xlu0 %1577
  %1579 = vrot.lane.b32.xlu0 %v1574, 64
  %v1580 = vpop.permute.xlu0 %1579
  %1583 = vst.msk [vmem:[%s5 + $0x8] sm:$0x1] %vm397, %v1578
  %1584 = vst.msk [vmem:[%s5 + $0x28] sm:$0x1] %vm397, %v1580
  %v1585 = vrot.slane %v1574, 7
  %v1586 = vsel %vm401, %v1585, %v1573
  %1587 = vrot.lane.b32.xlu0 %v1586, 64
  %v1588 = vpop.permute.xlu0 %1587
  %v1589 = vsel %vm253, %v1588, 0
  %1591 = vmatprep.subr.mxu0 0.0
  %1592 = vmatpush1.msra.mxu0 %v23
  %1593 = vmatprep.subr.mxu0 0.0
  %1594 = vmatpush1.msra.mxu0 %v24
  %1595 = vmatprep.subr.mxu0 0.0
  %1596 = vmatpush1.msra.mxu0 %v25
  %1597 = vmatprep.subr.mxu0 0.0
  %1598 = vmatpush1.msra.mxu0 %v26
  %1599 = vmatprep.subr.mxu0 0.0
  %1600 = vmatpush1.msra.mxu0 0.0
  %1601 = vmatprep.subr.mxu0 0.0
  %1602 = vmatpush1.msra.mxu0 0.0
  %1603 = vmatprep.subr.mxu0 0.0
  %1604 = vmatpush1.msra.mxu0 0.0
  %1605 = vmatprep.subr.mxu0 0.0
  %1606 = vmatpush1.msra.mxu0 0.0
  %1607 = vmatprep.subr.mxu0 0.0
  %1608 = vmatpush1.msra.mxu0 0.0
  %1609 = vmatprep.subr.mxu0 0.0
  %1610 = vmatpush1.msra.mxu0 0.0
  %1611 = vmatprep.subr.mxu0 0.0
  %1612 = vmatpush1.msra.mxu0 0.0
  %1613 = vmatprep.subr.mxu0 0.0
  %1614 = vmatpush1.msra.mxu0 0.0
  %1615 = vmatprep.subr.mxu0 0.0
  %1616 = vmatpush1.msra.mxu0 0.0
  %1617 = vmatprep.subr.mxu0 0.0
  %1618 = vmatpush1.msra.mxu0 0.0
  %1619 = vmatprep.subr.mxu0 0.0
  %1620 = vmatpush1.msra.mxu0 0.0
  %1621 = vmatprep.subr.mxu0 0.0
  %1622 = vmatpush1.msra.mxu0 0.0
  %1623 = vmatprep.subr.mxu0 0.0
  %1624 = vmatpush1.msra.mxu0 0.0
  %1625 = vmatprep.subr.mxu0 0.0
  %1626 = vmatpush1.msra.mxu0 0.0
  %1627 = vmatprep.subr.mxu0 0.0
  %1628 = vmatpush1.msra.mxu0 0.0
  %1629 = vmatprep.subr.mxu0 0.0
  %1630 = vmatpush1.msra.mxu0 0.0
  %1631 = vmatprep.subr.mxu0 0.0
  %1632 = vmatpush1.msra.mxu0 0.0
  %1633 = vmatprep.subr.mxu0 0.0
  %1634 = vmatpush1.msra.mxu0 0.0
  %1635 = vmatprep.subr.mxu0 0.0
  %1636 = vmatpush1.msra.mxu0 0.0
  %1637 = vmatprep.subr.mxu0 0.0
  %1638 = vmatpush1.msra.mxu0 0.0
  %1639 = vmatprep.subr.mxu0 0.0
  %1640 = vmatpush1.msra.mxu0 0.0
  %1641 = vmatprep.subr.mxu0 0.0
  %1642 = vmatpush1.msra.mxu0 0.0
  %1643 = vmatprep.subr.mxu0 0.0
  %1644 = vmatpush1.msra.mxu0 0.0
  %1645 = vmatprep.subr.mxu0 0.0
  %1646 = vmatpush1.msra.mxu0 0.0
  %1647 = vmatprep.subr.mxu0 0.0
  %1648 = vmatpush1.msra.mxu0 0.0
  %1649 = vmatprep.subr.mxu0 0.0
  %1650 = vmatpush1.msra.mxu0 0.0
  %1651 = vmatprep.subr.mxu0 0.0
  %1652 = vmatpush1.msra.mxu0 0.0
  %1653 = vmatprep.subr.mxu0 0.0
  %1654 = vmatpush1.msra.mxu0 0.0
  %1655 = vmatprep.mubr.f32.mxu0 0.0
  %1656 = vmatmul.mubr.f32.gmra.mrb[0].mxu0 %v1589
  %v1657 = vpop.f32.mrb[0].mxu0
  %v1658 = vadd.f32 %v251, %v1657
  %v1659 = vpop.f32.mrb[0].mxu0
  %1660 = vdwg.mxu0
  %v1661 = vld [vmem:[#allocation2 + $0x9] sm:$0x1]
  %v1662 = vld [vmem:[#allocation2 + $0x29] sm:$0x1]
  %v1664 = vrot.slane %v1658, 1
  %v1667 = vadd.f32 %v1661, %v1658
  %v1668 = vadd.f32 %v1662, %v1664
  %v1669 = vxor.u32 %v1667, 2147483648
  %v1670 = vxor.u32 %v1668, 2147483648
  %v1671 = vmul.f32 %v1669, 1.442695
  %v1672 = vpow.pop %v1671
  %v1673 = vmul.f32 %v1670, 1.442695
  %v1674 = vpow.pop %v1673
  %v1675 = vadd.f32 %v1672, 1.0
  %v1676 = vadd.f32 %v1674, 1.0
  %v1677 = vrcp.pop %v1675
  %v1678 = vmul.f32 1.0, %v1677
  %v1679 = vrcp.pop %v1676
  %v1680 = vmul.f32 1.0, %v1679
  %1681 = vrot.lane.b32.xlu0 %v1658, 64
  %v1682 = vpop.permute.xlu0 %1681
  %1683 = vrot.lane.b32.xlu0 %v1664, 64
  %v1684 = vpop.permute.xlu0 %1683
  %v1687 = vmul.f32 %v1678, %v1682
  %v1688 = vmul.f32 %v1680, %v1684
  %1691 = vrot.lane.b32.xlu0 %v1687, 64
  %v1692 = vpop.permute.xlu0 %1691
  %1693 = vrot.lane.b32.xlu0 %v1688, 64
  %v1694 = vpop.permute.xlu0 %1693
  %v1697 = vadd.f32 %v1661, %v1692
  %v1698 = vadd.f32 %v1662, %v1694
  %v1699 = vtanh.pop %v1697
  %v1700 = vtanh.pop %v1698
  %v1701 = vsub.f32 %v1573, %v1699
  %v1702 = vsub.f32 %v1574, %v1700
  %1705 = vrot.lane.b32.xlu0 %v1701, 96
  %v1706 = vpop.permute.xlu0 %1705
  %1707 = vrot.lane.b32.xlu0 %v1702, 96
  %v1708 = vpop.permute.xlu0 %1707
  %v1711 = vmul.f32 %v1678, %v1706
  %v1712 = vmul.f32 %v1680, %v1708
  %1715 = vrot.lane.b32.xlu0 %v1711, 32
  %v1716 = vpop.permute.xlu0 %1715
  %1717 = vrot.lane.b32.xlu0 %v1712, 32
  %v1718 = vpop.permute.xlu0 %1717
  %v1721 = vadd.f32 %v1699, %v1716
  %v1722 = vadd.f32 %v1700, %v1718
  %1725 = vrot.lane.b32.xlu0 %v1721, 64
  %v1726 = vpop.permute.xlu0 %1725
  %1727 = vrot.lane.b32.xlu0 %v1722, 64
  %v1728 = vpop.permute.xlu0 %1727
  %1731 = vst.msk [vmem:[%s5 + $0x9] sm:$0x1] %vm397, %v1726
  %1732 = vst.msk [vmem:[%s5 + $0x29] sm:$0x1] %vm397, %v1728
  %v1733 = vrot.slane %v1722, 7
  %v1734 = vsel %vm401, %v1733, %v1721
  %1735 = vrot.lane.b32.xlu0 %v1734, 64
  %v1736 = vpop.permute.xlu0 %1735
  %v1737 = vsel %vm253, %v1736, 0
  %1739 = vmatprep.subr.mxu0 0.0
  %1740 = vmatpush1.msra.mxu0 %v23
  %1741 = vmatprep.subr.mxu0 0.0
  %1742 = vmatpush1.msra.mxu0 %v24
  %1743 = vmatprep.subr.mxu0 0.0
  %1744 = vmatpush1.msra.mxu0 %v25
  %1745 = vmatprep.subr.mxu0 0.0
  %1746 = vmatpush1.msra.mxu0 %v26
  %1747 = vmatprep.subr.mxu0 0.0
  %1748 = vmatpush1.msra.mxu0 0.0
  %1749 = vmatprep.subr.mxu0 0.0
  %1750 = vmatpush1.msra.mxu0 0.0
  %1751 = vmatprep.subr.mxu0 0.0
  %1752 = vmatpush1.msra.mxu0 0.0
  %1753 = vmatprep.subr.mxu0 0.0
  %1754 = vmatpush1.msra.mxu0 0.0
  %1755 = vmatprep.subr.mxu0 0.0
  %1756 = vmatpush1.msra.mxu0 0.0
  %1757 = vmatprep.subr.mxu0 0.0
  %1758 = vmatpush1.msra.mxu0 0.0
  %1759 = vmatprep.subr.mxu0 0.0
  %1760 = vmatpush1.msra.mxu0 0.0
  %1761 = vmatprep.subr.mxu0 0.0
  %1762 = vmatpush1.msra.mxu0 0.0
  %1763 = vmatprep.subr.mxu0 0.0
  %1764 = vmatpush1.msra.mxu0 0.0
  %1765 = vmatprep.subr.mxu0 0.0
  %1766 = vmatpush1.msra.mxu0 0.0
  %1767 = vmatprep.subr.mxu0 0.0
  %1768 = vmatpush1.msra.mxu0 0.0
  %1769 = vmatprep.subr.mxu0 0.0
  %1770 = vmatpush1.msra.mxu0 0.0
  %1771 = vmatprep.subr.mxu0 0.0
  %1772 = vmatpush1.msra.mxu0 0.0
  %1773 = vmatprep.subr.mxu0 0.0
  %1774 = vmatpush1.msra.mxu0 0.0
  %1775 = vmatprep.subr.mxu0 0.0
  %1776 = vmatpush1.msra.mxu0 0.0
  %1777 = vmatprep.subr.mxu0 0.0
  %1778 = vmatpush1.msra.mxu0 0.0
  %1779 = vmatprep.subr.mxu0 0.0
  %1780 = vmatpush1.msra.mxu0 0.0
  %1781 = vmatprep.subr.mxu0 0.0
  %1782 = vmatpush1.msra.mxu0 0.0
  %1783 = vmatprep.subr.mxu0 0.0
  %1784 = vmatpush1.msra.mxu0 0.0
  %1785 = vmatprep.subr.mxu0 0.0
  %1786 = vmatpush1.msra.mxu0 0.0
  %1787 = vmatprep.subr.mxu0 0.0
  %1788 = vmatpush1.msra.mxu0 0.0
  %1789 = vmatprep.subr.mxu0 0.0
  %1790 = vmatpush1.msra.mxu0 0.0
  %1791 = vmatprep.subr.mxu0 0.0
  %1792 = vmatpush1.msra.mxu0 0.0
  %1793 = vmatprep.subr.mxu0 0.0
  %1794 = vmatpush1.msra.mxu0 0.0
  %1795 = vmatprep.subr.mxu0 0.0
  %1796 = vmatpush1.msra.mxu0 0.0
  %1797 = vmatprep.subr.mxu0 0.0
  %1798 = vmatpush1.msra.mxu0 0.0
  %1799 = vmatprep.subr.mxu0 0.0
  %1800 = vmatpush1.msra.mxu0 0.0
  %1801 = vmatprep.subr.mxu0 0.0
  %1802 = vmatpush1.msra.mxu0 0.0
  %1803 = vmatprep.mubr.f32.mxu0 0.0
  %1804 = vmatmul.mubr.f32.gmra.mrb[0].mxu0 %v1737
  %v1805 = vpop.f32.mrb[0].mxu0
  %v1806 = vadd.f32 %v251, %v1805
  %v1807 = vpop.f32.mrb[0].mxu0
  %1808 = vdwg.mxu0
  %v1809 = vld [vmem:[#allocation2 + $0xa] sm:$0x1]
  %v1810 = vld [vmem:[#allocation2 + $0x2a] sm:$0x1]
  %v1812 = vrot.slane %v1806, 1
  %v1815 = vadd.f32 %v1809, %v1806
  %v1816 = vadd.f32 %v1810, %v1812
  %v1817 = vxor.u32 %v1815, 2147483648
  %v1818 = vxor.u32 %v1816, 2147483648
  %v1819 = vmul.f32 %v1817, 1.442695
  %v1820 = vpow.pop %v1819
  %v1821 = vmul.f32 %v1818, 1.442695
  %v1822 = vpow.pop %v1821
  %v1823 = vadd.f32 %v1820, 1.0
  %v1824 = vadd.f32 %v1822, 1.0
  %v1825 = vrcp.pop %v1823
  %v1826 = vmul.f32 1.0, %v1825
  %v1827 = vrcp.pop %v1824
  %v1828 = vmul.f32 1.0, %v1827
  %1829 = vrot.lane.b32.xlu0 %v1806, 64
  %v1830 = vpop.permute.xlu0 %1829
  %1831 = vrot.lane.b32.xlu0 %v1812, 64
  %v1832 = vpop.permute.xlu0 %1831
  %v1835 = vmul.f32 %v1826, %v1830
  %v1836 = vmul.f32 %v1828, %v1832
  %1839 = vrot.lane.b32.xlu0 %v1835, 64
  %v1840 = vpop.permute.xlu0 %1839
  %1841 = vrot.lane.b32.xlu0 %v1836, 64
  %v1842 = vpop.permute.xlu0 %1841
  %v1845 = vadd.f32 %v1809, %v1840
  %v1846 = vadd.f32 %v1810, %v1842
  %v1847 = vtanh.pop %v1845
  %v1848 = vtanh.pop %v1846
  %v1849 = vsub.f32 %v1721, %v1847
  %v1850 = vsub.f32 %v1722, %v1848
  %1853 = vrot.lane.b32.xlu0 %v1849, 96
  %v1854 = vpop.permute.xlu0 %1853
  %1855 = vrot.lane.b32.xlu0 %v1850, 96
  %v1856 = vpop.permute.xlu0 %1855
  %v1859 = vmul.f32 %v1826, %v1854
  %v1860 = vmul.f32 %v1828, %v1856
  %1863 = vrot.lane.b32.xlu0 %v1859, 32
  %v1864 = vpop.permute.xlu0 %1863
  %1865 = vrot.lane.b32.xlu0 %v1860, 32
  %v1866 = vpop.permute.xlu0 %1865
  %v1869 = vadd.f32 %v1847, %v1864
  %v1870 = vadd.f32 %v1848, %v1866
  %1873 = vrot.lane.b32.xlu0 %v1869, 64
  %v1874 = vpop.permute.xlu0 %1873
  %1875 = vrot.lane.b32.xlu0 %v1870, 64
  %v1876 = vpop.permute.xlu0 %1875
  %1879 = vst.msk [vmem:[%s5 + $0xa] sm:$0x1] %vm397, %v1874
  %1880 = vst.msk [vmem:[%s5 + $0x2a] sm:$0x1] %vm397, %v1876
  %v1881 = vrot.slane %v1870, 7
  %v1882 = vsel %vm401, %v1881, %v1869
  %1883 = vrot.lane.b32.xlu0 %v1882, 64
  %v1884 = vpop.permute.xlu0 %1883
  %v1885 = vsel %vm253, %v1884, 0
  %1887 = vmatprep.subr.mxu0 0.0
  %1888 = vmatpush1.msra.mxu0 %v23
  %1889 = vmatprep.subr.mxu0 0.0
  %1890 = vmatpush1.msra.mxu0 %v24
  %1891 = vmatprep.subr.mxu0 0.0
  %1892 = vmatpush1.msra.mxu0 %v25
  %1893 = vmatprep.subr.mxu0 0.0
  %1894 = vmatpush1.msra.mxu0 %v26
  %1895 = vmatprep.subr.mxu0 0.0
  %1896 = vmatpush1.msra.mxu0 0.0
  %1897 = vmatprep.subr.mxu0 0.0
  %1898 = vmatpush1.msra.mxu0 0.0
  %1899 = vmatprep.subr.mxu0 0.0
  %1900 = vmatpush1.msra.mxu0 0.0
  %1901 = vmatprep.subr.mxu0 0.0
  %1902 = vmatpush1.msra.mxu0 0.0
  %1903 = vmatprep.subr.mxu0 0.0
  %1904 = vmatpush1.msra.mxu0 0.0
  %1905 = vmatprep.subr.mxu0 0.0
  %1906 = vmatpush1.msra.mxu0 0.0
  %1907 = vmatprep.subr.mxu0 0.0
  %1908 = vmatpush1.msra.mxu0 0.0
  %1909 = vmatprep.subr.mxu0 0.0
  %1910 = vmatpush1.msra.mxu0 0.0
  %1911 = vmatprep.subr.mxu0 0.0
  %1912 = vmatpush1.msra.mxu0 0.0
  %1913 = vmatprep.subr.mxu0 0.0
  %1914 = vmatpush1.msra.mxu0 0.0
  %1915 = vmatprep.subr.mxu0 0.0
  %1916 = vmatpush1.msra.mxu0 0.0
  %1917 = vmatprep.subr.mxu0 0.0
  %1918 = vmatpush1.msra.mxu0 0.0
  %1919 = vmatprep.subr.mxu0 0.0
  %1920 = vmatpush1.msra.mxu0 0.0
  %1921 = vmatprep.subr.mxu0 0.0
  %1922 = vmatpush1.msra.mxu0 0.0
  %1923 = vmatprep.subr.mxu0 0.0
  %1924 = vmatpush1.msra.mxu0 0.0
  %1925 = vmatprep.subr.mxu0 0.0
  %1926 = vmatpush1.msra.mxu0 0.0
  %1927 = vmatprep.subr.mxu0 0.0
  %1928 = vmatpush1.msra.mxu0 0.0
  %1929 = vmatprep.subr.mxu0 0.0
  %1930 = vmatpush1.msra.mxu0 0.0
  %1931 = vmatprep.subr.mxu0 0.0
  %1932 = vmatpush1.msra.mxu0 0.0
  %1933 = vmatprep.subr.mxu0 0.0
  %1934 = vmatpush1.msra.mxu0 0.0
  %1935 = vmatprep.subr.mxu0 0.0
  %1936 = vmatpush1.msra.mxu0 0.0
  %1937 = vmatprep.subr.mxu0 0.0
  %1938 = vmatpush1.msra.mxu0 0.0
  %1939 = vmatprep.subr.mxu0 0.0
  %1940 = vmatpush1.msra.mxu0 0.0
  %1941 = vmatprep.subr.mxu0 0.0
  %1942 = vmatpush1.msra.mxu0 0.0
  %1943 = vmatprep.subr.mxu0 0.0
  %1944 = vmatpush1.msra.mxu0 0.0
  %1945 = vmatprep.subr.mxu0 0.0
  %1946 = vmatpush1.msra.mxu0 0.0
  %1947 = vmatprep.subr.mxu0 0.0
  %1948 = vmatpush1.msra.mxu0 0.0
  %1949 = vmatprep.subr.mxu0 0.0
  %1950 = vmatpush1.msra.mxu0 0.0
  %1951 = vmatprep.mubr.f32.mxu0 0.0
  %1952 = vmatmul.mubr.f32.gmra.mrb[0].mxu0 %v1885
  %v1953 = vpop.f32.mrb[0].mxu0
  %v1954 = vadd.f32 %v251, %v1953
  %v1955 = vpop.f32.mrb[0].mxu0
  %1956 = vdwg.mxu0
  %v1957 = vld [vmem:[#allocation2 + $0xb] sm:$0x1]
  %v1958 = vld [vmem:[#allocation2 + $0x2b] sm:$0x1]
  %v1960 = vrot.slane %v1954, 1
  %v1963 = vadd.f32 %v1957, %v1954
  %v1964 = vadd.f32 %v1958, %v1960
  %v1965 = vxor.u32 %v1963, 2147483648
  %v1966 = vxor.u32 %v1964, 2147483648
  %v1967 = vmul.f32 %v1965, 1.442695
  %v1968 = vpow.pop %v1967
  %v1969 = vmul.f32 %v1966, 1.442695
  %v1970 = vpow.pop %v1969
  %v1971 = vadd.f32 %v1968, 1.0
  %v1972 = vadd.f32 %v1970, 1.0
  %v1973 = vrcp.pop %v1971
  %v1974 = vmul.f32 1.0, %v1973
  %v1975 = vrcp.pop %v1972
  %v1976 = vmul.f32 1.0, %v1975
  %1977 = vrot.lane.b32.xlu0 %v1954, 64
  %v1978 = vpop.permute.xlu0 %1977
  %1979 = vrot.lane.b32.xlu0 %v1960, 64
  %v1980 = vpop.permute.xlu0 %1979
  %v1983 = vmul.f32 %v1974, %v1978
  %v1984 = vmul.f32 %v1976, %v1980
  %1987 = vrot.lane.b32.xlu0 %v1983, 64
  %v1988 = vpop.permute.xlu0 %1987
  %1989 = vrot.lane.b32.xlu0 %v1984, 64
  %v1990 = vpop.permute.xlu0 %1989
  %v1993 = vadd.f32 %v1957, %v1988
  %v1994 = vadd.f32 %v1958, %v1990
  %v1995 = vtanh.pop %v1993
  %v1996 = vtanh.pop %v1994
  %v1997 = vsub.f32 %v1869, %v1995
  %v1998 = vsub.f32 %v1870, %v1996
  %2001 = vrot.lane.b32.xlu0 %v1997, 96
  %v2002 = vpop.permute.xlu0 %2001
  %2003 = vrot.lane.b32.xlu0 %v1998, 96
  %v2004 = vpop.permute.xlu0 %2003
  %v2007 = vmul.f32 %v1974, %v2002
  %v2008 = vmul.f32 %v1976, %v2004
  %2011 = vrot.lane.b32.xlu0 %v2007, 32
  %v2012 = vpop.permute.xlu0 %2011
  %2013 = vrot.lane.b32.xlu0 %v2008, 32
  %v2014 = vpop.permute.xlu0 %2013
  %v2017 = vadd.f32 %v1995, %v2012
  %v2018 = vadd.f32 %v1996, %v2014
  %2021 = vrot.lane.b32.xlu0 %v2017, 64
  %v2022 = vpop.permute.xlu0 %2021
  %2023 = vrot.lane.b32.xlu0 %v2018, 64
  %v2024 = vpop.permute.xlu0 %2023
  %2027 = vst.msk [vmem:[%s5 + $0xb] sm:$0x1] %vm397, %v2022
  %2028 = vst.msk [vmem:[%s5 + $0x2b] sm:$0x1] %vm397, %v2024
  %v2029 = vrot.slane %v2018, 7
  %v2030 = vsel %vm401, %v2029, %v2017
  %2031 = vrot.lane.b32.xlu0 %v2030, 64
  %v2032 = vpop.permute.xlu0 %2031
  %v2033 = vsel %vm253, %v2032, 0
  %2035 = vmatprep.subr.mxu0 0.0
  %2036 = vmatpush1.msra.mxu0 %v23
  %2037 = vmatprep.subr.mxu0 0.0
  %2038 = vmatpush1.msra.mxu0 %v24
  %2039 = vmatprep.subr.mxu0 0.0
  %2040 = vmatpush1.msra.mxu0 %v25
  %2041 = vmatprep.subr.mxu0 0.0
  %2042 = vmatpush1.msra.mxu0 %v26
  %2043 = vmatprep.subr.mxu0 0.0
  %2044 = vmatpush1.msra.mxu0 0.0
  %2045 = vmatprep.subr.mxu0 0.0
  %2046 = vmatpush1.msra.mxu0 0.0
  %2047 = vmatprep.subr.mxu0 0.0
  %2048 = vmatpush1.msra.mxu0 0.0
  %2049 = vmatprep.subr.mxu0 0.0
  %2050 = vmatpush1.msra.mxu0 0.0
  %2051 = vmatprep.subr.mxu0 0.0
  %2052 = vmatpush1.msra.mxu0 0.0
  %2053 = vmatprep.subr.mxu0 0.0
  %2054 = vmatpush1.msra.mxu0 0.0
  %2055 = vmatprep.subr.mxu0 0.0
  %2056 = vmatpush1.msra.mxu0 0.0
  %2057 = vmatprep.subr.mxu0 0.0
  %2058 = vmatpush1.msra.mxu0 0.0
  %2059 = vmatprep.subr.mxu0 0.0
  %2060 = vmatpush1.msra.mxu0 0.0
  %2061 = vmatprep.subr.mxu0 0.0
  %2062 = vmatpush1.msra.mxu0 0.0
  %2063 = vmatprep.subr.mxu0 0.0
  %2064 = vmatpush1.msra.mxu0 0.0
  %2065 = vmatprep.subr.mxu0 0.0
  %2066 = vmatpush1.msra.mxu0 0.0
  %2067 = vmatprep.subr.mxu0 0.0
  %2068 = vmatpush1.msra.mxu0 0.0
  %2069 = vmatprep.subr.mxu0 0.0
  %2070 = vmatpush1.msra.mxu0 0.0
  %2071 = vmatprep.subr.mxu0 0.0
  %2072 = vmatpush1.msra.mxu0 0.0
  %2073 = vmatprep.subr.mxu0 0.0
  %2074 = vmatpush1.msra.mxu0 0.0
  %2075 = vmatprep.subr.mxu0 0.0
  %2076 = vmatpush1.msra.mxu0 0.0
  %2077 = vmatprep.subr.mxu0 0.0
  %2078 = vmatpush1.msra.mxu0 0.0
  %2079 = vmatprep.subr.mxu0 0.0
  %2080 = vmatpush1.msra.mxu0 0.0
  %2081 = vmatprep.subr.mxu0 0.0
  %2082 = vmatpush1.msra.mxu0 0.0
  %2083 = vmatprep.subr.mxu0 0.0
  %2084 = vmatpush1.msra.mxu0 0.0
  %2085 = vmatprep.subr.mxu0 0.0
  %2086 = vmatpush1.msra.mxu0 0.0
  %2087 = vmatprep.subr.mxu0 0.0
  %2088 = vmatpush1.msra.mxu0 0.0
  %2089 = vmatprep.subr.mxu0 0.0
  %2090 = vmatpush1.msra.mxu0 0.0
  %2091 = vmatprep.subr.mxu0 0.0
  %2092 = vmatpush1.msra.mxu0 0.0
  %2093 = vmatprep.subr.mxu0 0.0
  %2094 = vmatpush1.msra.mxu0 0.0
  %2095 = vmatprep.subr.mxu0 0.0
  %2096 = vmatpush1.msra.mxu0 0.0
  %2097 = vmatprep.subr.mxu0 0.0
  %2098 = vmatpush1.msra.mxu0 0.0
  %2099 = vmatprep.mubr.f32.mxu0 0.0
  %2100 = vmatmul.mubr.f32.gmra.mrb[0].mxu0 %v2033
  %v2101 = vpop.f32.mrb[0].mxu0
  %v2102 = vadd.f32 %v251, %v2101
  %v2103 = vpop.f32.mrb[0].mxu0
  %2104 = vdwg.mxu0
  %v2105 = vld [vmem:[#allocation2 + $0xc] sm:$0x1]
  %v2106 = vld [vmem:[#allocation2 + $0x2c] sm:$0x1]
  %v2108 = vrot.slane %v2102, 1
  %v2111 = vadd.f32 %v2105, %v2102
  %v2112 = vadd.f32 %v2106, %v2108
  %v2113 = vxor.u32 %v2111, 2147483648
  %v2114 = vxor.u32 %v2112, 2147483648
  %v2115 = vmul.f32 %v2113, 1.442695
  %v2116 = vpow.pop %v2115
  %v2117 = vmul.f32 %v2114, 1.442695
  %v2118 = vpow.pop %v2117
  %v2119 = vadd.f32 %v2116, 1.0
  %v2120 = vadd.f32 %v2118, 1.0
  %v2121 = vrcp.pop %v2119
  %v2122 = vmul.f32 1.0, %v2121
  %v2123 = vrcp.pop %v2120
  %v2124 = vmul.f32 1.0, %v2123
  %2125 = vrot.lane.b32.xlu0 %v2102, 64
  %v2126 = vpop.permute.xlu0 %2125
  %2127 = vrot.lane.b32.xlu0 %v2108, 64
  %v2128 = vpop.permute.xlu0 %2127
  %v2131 = vmul.f32 %v2122, %v2126
  %v2132 = vmul.f32 %v2124, %v2128
  %2135 = vrot.lane.b32.xlu0 %v2131, 64
  %v2136 = vpop.permute.xlu0 %2135
  %2137 = vrot.lane.b32.xlu0 %v2132, 64
  %v2138 = vpop.permute.xlu0 %2137
  %v2141 = vadd.f32 %v2105, %v2136
  %v2142 = vadd.f32 %v2106, %v2138
  %v2143 = vtanh.pop %v2141
  %v2144 = vtanh.pop %v2142
  %v2145 = vsub.f32 %v2017, %v2143
  %v2146 = vsub.f32 %v2018, %v2144
  %2149 = vrot.lane.b32.xlu0 %v2145, 96
  %v2150 = vpop.permute.xlu0 %2149
  %2151 = vrot.lane.b32.xlu0 %v2146, 96
  %v2152 = vpop.permute.xlu0 %2151
  %v2155 = vmul.f32 %v2122, %v2150
  %v2156 = vmul.f32 %v2124, %v2152
  %2159 = vrot.lane.b32.xlu0 %v2155, 32
  %v2160 = vpop.permute.xlu0 %2159
  %2161 = vrot.lane.b32.xlu0 %v2156, 32
  %v2162 = vpop.permute.xlu0 %2161
  %v2165 = vadd.f32 %v2143, %v2160
  %v2166 = vadd.f32 %v2144, %v2162
  %2169 = vrot.lane.b32.xlu0 %v2165, 64
  %v2170 = vpop.permute.xlu0 %2169
  %2171 = vrot.lane.b32.xlu0 %v2166, 64
  %v2172 = vpop.permute.xlu0 %2171
  %2175 = vst.msk [vmem:[%s5 + $0xc] sm:$0x1] %vm397, %v2170
  %2176 = vst.msk [vmem:[%s5 + $0x2c] sm:$0x1] %vm397, %v2172
  %v2177 = vrot.slane %v2166, 7
  %v2178 = vsel %vm401, %v2177, %v2165
  %2179 = vrot.lane.b32.xlu0 %v2178, 64
  %v2180 = vpop.permute.xlu0 %2179
  %v2181 = vsel %vm253, %v2180, 0
  %2183 = vmatprep.subr.mxu0 0.0
  %2184 = vmatpush1.msra.mxu0 %v23
  %2185 = vmatprep.subr.mxu0 0.0
  %2186 = vmatpush1.msra.mxu0 %v24
  %2187 = vmatprep.subr.mxu0 0.0
  %2188 = vmatpush1.msra.mxu0 %v25
  %2189 = vmatprep.subr.mxu0 0.0
  %2190 = vmatpush1.msra.mxu0 %v26
  %2191 = vmatprep.subr.mxu0 0.0
  %2192 = vmatpush1.msra.mxu0 0.0
  %2193 = vmatprep.subr.mxu0 0.0
  %2194 = vmatpush1.msra.mxu0 0.0
  %2195 = vmatprep.subr.mxu0 0.0
  %2196 = vmatpush1.msra.mxu0 0.0
  %2197 = vmatprep.subr.mxu0 0.0
  %2198 = vmatpush1.msra.mxu0 0.0
  %2199 = vmatprep.subr.mxu0 0.0
  %2200 = vmatpush1.msra.mxu0 0.0
  %2201 = vmatprep.subr.mxu0 0.0
  %2202 = vmatpush1.msra.mxu0 0.0
  %2203 = vmatprep.subr.mxu0 0.0
  %2204 = vmatpush1.msra.mxu0 0.0
  %2205 = vmatprep.subr.mxu0 0.0
  %2206 = vmatpush1.msra.mxu0 0.0
  %2207 = vmatprep.subr.mxu0 0.0
  %2208 = vmatpush1.msra.mxu0 0.0
  %2209 = vmatprep.subr.mxu0 0.0
  %2210 = vmatpush1.msra.mxu0 0.0
  %2211 = vmatprep.subr.mxu0 0.0
  %2212 = vmatpush1.msra.mxu0 0.0
  %2213 = vmatprep.subr.mxu0 0.0
  %2214 = vmatpush1.msra.mxu0 0.0
  %2215 = vmatprep.subr.mxu0 0.0
  %2216 = vmatpush1.msra.mxu0 0.0
  %2217 = vmatprep.subr.mxu0 0.0
  %2218 = vmatpush1.msra.mxu0 0.0
  %2219 = vmatprep.subr.mxu0 0.0
  %2220 = vmatpush1.msra.mxu0 0.0
  %2221 = vmatprep.subr.mxu0 0.0
  %2222 = vmatpush1.msra.mxu0 0.0
  %2223 = vmatprep.subr.mxu0 0.0
  %2224 = vmatpush1.msra.mxu0 0.0
  %2225 = vmatprep.subr.mxu0 0.0
  %2226 = vmatpush1.msra.mxu0 0.0
  %2227 = vmatprep.subr.mxu0 0.0
  %2228 = vmatpush1.msra.mxu0 0.0
  %2229 = vmatprep.subr.mxu0 0.0
  %2230 = vmatpush1.msra.mxu0 0.0
  %2231 = vmatprep.subr.mxu0 0.0
  %2232 = vmatpush1.msra.mxu0 0.0
  %2233 = vmatprep.subr.mxu0 0.0
  %2234 = vmatpush1.msra.mxu0 0.0
  %2235 = vmatprep.subr.mxu0 0.0
  %2236 = vmatpush1.msra.mxu0 0.0
  %2237 = vmatprep.subr.mxu0 0.0
  %2238 = vmatpush1.msra.mxu0 0.0
  %2239 = vmatprep.subr.mxu0 0.0
  %2240 = vmatpush1.msra.mxu0 0.0
  %2241 = vmatprep.subr.mxu0 0.0
  %2242 = vmatpush1.msra.mxu0 0.0
  %2243 = vmatprep.subr.mxu0 0.0
  %2244 = vmatpush1.msra.mxu0 0.0
  %2245 = vmatprep.subr.mxu0 0.0
  %2246 = vmatpush1.msra.mxu0 0.0
  %2247 = vmatprep.mubr.f32.mxu0 0.0
  %2248 = vmatmul.mubr.f32.gmra.mrb[0].mxu0 %v2181
  %v2249 = vpop.f32.mrb[0].mxu0
  %v2250 = vadd.f32 %v251, %v2249
  %v2251 = vpop.f32.mrb[0].mxu0
  %2252 = vdwg.mxu0
  %v2253 = vld [vmem:[#allocation2 + $0xd] sm:$0x1]
  %v2254 = vld [vmem:[#allocation2 + $0x2d] sm:$0x1]
  %v2256 = vrot.slane %v2250, 1
  %v2259 = vadd.f32 %v2253, %v2250
  %v2260 = vadd.f32 %v2254, %v2256
  %v2261 = vxor.u32 %v2259, 2147483648
  %v2262 = vxor.u32 %v2260, 2147483648
  %v2263 = vmul.f32 %v2261, 1.442695
  %v2264 = vpow.pop %v2263
  %v2265 = vmul.f32 %v2262, 1.442695
  %v2266 = vpow.pop %v2265
  %v2267 = vadd.f32 %v2264, 1.0
  %v2268 = vadd.f32 %v2266, 1.0
  %v2269 = vrcp.pop %v2267
  %v2270 = vmul.f32 1.0, %v2269
  %v2271 = vrcp.pop %v2268
  %v2272 = vmul.f32 1.0, %v2271
  %2273 = vrot.lane.b32.xlu0 %v2250, 64
  %v2274 = vpop.permute.xlu0 %2273
  %2275 = vrot.lane.b32.xlu0 %v2256, 64
  %v2276 = vpop.permute.xlu0 %2275
  %v2279 = vmul.f32 %v2270, %v2274
  %v2280 = vmul.f32 %v2272, %v2276
  %2283 = vrot.lane.b32.xlu0 %v2279, 64
  %v2284 = vpop.permute.xlu0 %2283
  %2285 = vrot.lane.b32.xlu0 %v2280, 64
  %v2286 = vpop.permute.xlu0 %2285
  %v2289 = vadd.f32 %v2253, %v2284
  %v2290 = vadd.f32 %v2254, %v2286
  %v2291 = vtanh.pop %v2289
  %v2292 = vtanh.pop %v2290
  %v2293 = vsub.f32 %v2165, %v2291
  %v2294 = vsub.f32 %v2166, %v2292
  %2297 = vrot.lane.b32.xlu0 %v2293, 96
  %v2298 = vpop.permute.xlu0 %2297
  %2299 = vrot.lane.b32.xlu0 %v2294, 96
  %v2300 = vpop.permute.xlu0 %2299
  %v2303 = vmul.f32 %v2270, %v2298
  %v2304 = vmul.f32 %v2272, %v2300
  %2307 = vrot.lane.b32.xlu0 %v2303, 32
  %v2308 = vpop.permute.xlu0 %2307
  %2309 = vrot.lane.b32.xlu0 %v2304, 32
  %v2310 = vpop.permute.xlu0 %2309
  %v2313 = vadd.f32 %v2291, %v2308
  %v2314 = vadd.f32 %v2292, %v2310
  %2317 = vrot.lane.b32.xlu0 %v2313, 64
  %v2318 = vpop.permute.xlu0 %2317
  %2319 = vrot.lane.b32.xlu0 %v2314, 64
  %v2320 = vpop.permute.xlu0 %2319
  %2323 = vst.msk [vmem:[%s5 + $0xd] sm:$0x1] %vm397, %v2318
  %2324 = vst.msk [vmem:[%s5 + $0x2d] sm:$0x1] %vm397, %v2320
  %v2325 = vrot.slane %v2314, 7
  %v2326 = vsel %vm401, %v2325, %v2313
  %2327 = vrot.lane.b32.xlu0 %v2326, 64
  %v2328 = vpop.permute.xlu0 %2327
  %v2329 = vsel %vm253, %v2328, 0
  %2331 = vmatprep.subr.mxu0 0.0
  %2332 = vmatpush1.msra.mxu0 %v23
  %2333 = vmatprep.subr.mxu0 0.0
  %2334 = vmatpush1.msra.mxu0 %v24
  %2335 = vmatprep.subr.mxu0 0.0
  %2336 = vmatpush1.msra.mxu0 %v25
  %2337 = vmatprep.subr.mxu0 0.0
  %2338 = vmatpush1.msra.mxu0 %v26
  %2339 = vmatprep.subr.mxu0 0.0
  %2340 = vmatpush1.msra.mxu0 0.0
  %2341 = vmatprep.subr.mxu0 0.0
  %2342 = vmatpush1.msra.mxu0 0.0
  %2343 = vmatprep.subr.mxu0 0.0
  %2344 = vmatpush1.msra.mxu0 0.0
  %2345 = vmatprep.subr.mxu0 0.0
  %2346 = vmatpush1.msra.mxu0 0.0
  %2347 = vmatprep.subr.mxu0 0.0
  %2348 = vmatpush1.msra.mxu0 0.0
  %2349 = vmatprep.subr.mxu0 0.0
  %2350 = vmatpush1.msra.mxu0 0.0
  %2351 = vmatprep.subr.mxu0 0.0
  %2352 = vmatpush1.msra.mxu0 0.0
  %2353 = vmatprep.subr.mxu0 0.0
  %2354 = vmatpush1.msra.mxu0 0.0
  %2355 = vmatprep.subr.mxu0 0.0
  %2356 = vmatpush1.msra.mxu0 0.0
  %2357 = vmatprep.subr.mxu0 0.0
  %2358 = vmatpush1.msra.mxu0 0.0
  %2359 = vmatprep.subr.mxu0 0.0
  %2360 = vmatpush1.msra.mxu0 0.0
  %2361 = vmatprep.subr.mxu0 0.0
  %2362 = vmatpush1.msra.mxu0 0.0
  %2363 = vmatprep.subr.mxu0 0.0
  %2364 = vmatpush1.msra.mxu0 0.0
  %2365 = vmatprep.subr.mxu0 0.0
  %2366 = vmatpush1.msra.mxu0 0.0
  %2367 = vmatprep.subr.mxu0 0.0
  %2368 = vmatpush1.msra.mxu0 0.0
  %2369 = vmatprep.subr.mxu0 0.0
  %2370 = vmatpush1.msra.mxu0 0.0
  %2371 = vmatprep.subr.mxu0 0.0
  %2372 = vmatpush1.msra.mxu0 0.0
  %2373 = vmatprep.subr.mxu0 0.0
  %2374 = vmatpush1.msra.mxu0 0.0
  %2375 = vmatprep.subr.mxu0 0.0
  %2376 = vmatpush1.msra.mxu0 0.0
  %2377 = vmatprep.subr.mxu0 0.0
  %2378 = vmatpush1.msra.mxu0 0.0
  %2379 = vmatprep.subr.mxu0 0.0
  %2380 = vmatpush1.msra.mxu0 0.0
  %2381 = vmatprep.subr.mxu0 0.0
  %2382 = vmatpush1.msra.mxu0 0.0
  %2383 = vmatprep.subr.mxu0 0.0
  %2384 = vmatpush1.msra.mxu0 0.0
  %2385 = vmatprep.subr.mxu0 0.0
  %2386 = vmatpush1.msra.mxu0 0.0
  %2387 = vmatprep.subr.mxu0 0.0
  %2388 = vmatpush1.msra.mxu0 0.0
  %2389 = vmatprep.subr.mxu0 0.0
  %2390 = vmatpush1.msra.mxu0 0.0
  %2391 = vmatprep.subr.mxu0 0.0
  %2392 = vmatpush1.msra.mxu0 0.0
  %2393 = vmatprep.subr.mxu0 0.0
  %2394 = vmatpush1.msra.mxu0 0.0
  %2395 = vmatprep.mubr.f32.mxu0 0.0
  %2396 = vmatmul.mubr.f32.gmra.mrb[0].mxu0 %v2329
  %v2397 = vpop.f32.mrb[0].mxu0
  %v2398 = vadd.f32 %v251, %v2397
  %v2399 = vpop.f32.mrb[0].mxu0
  %2400 = vdwg.mxu0
  %v2401 = vld [vmem:[#allocation2 + $0xe] sm:$0x1]
  %v2402 = vld [vmem:[#allocation2 + $0x2e] sm:$0x1]
  %v2404 = vrot.slane %v2398, 1
  %v2407 = vadd.f32 %v2401, %v2398
  %v2408 = vadd.f32 %v2402, %v2404
  %v2409 = vxor.u32 %v2407, 2147483648
  %v2410 = vxor.u32 %v2408, 2147483648
  %v2411 = vmul.f32 %v2409, 1.442695
  %v2412 = vpow.pop %v2411
  %v2413 = vmul.f32 %v2410, 1.442695
  %v2414 = vpow.pop %v2413
  %v2415 = vadd.f32 %v2412, 1.0
  %v2416 = vadd.f32 %v2414, 1.0
  %v2417 = vrcp.pop %v2415
  %v2418 = vmul.f32 1.0, %v2417
  %v2419 = vrcp.pop %v2416
  %v2420 = vmul.f32 1.0, %v2419
  %2421 = vrot.lane.b32.xlu0 %v2398, 64
  %v2422 = vpop.permute.xlu0 %2421
  %2423 = vrot.lane.b32.xlu0 %v2404, 64
  %v2424 = vpop.permute.xlu0 %2423
  %v2427 = vmul.f32 %v2418, %v2422
  %v2428 = vmul.f32 %v2420, %v2424
  %2431 = vrot.lane.b32.xlu0 %v2427, 64
  %v2432 = vpop.permute.xlu0 %2431
  %2433 = vrot.lane.b32.xlu0 %v2428, 64
  %v2434 = vpop.permute.xlu0 %2433
  %v2437 = vadd.f32 %v2401, %v2432
  %v2438 = vadd.f32 %v2402, %v2434
  %v2439 = vtanh.pop %v2437
  %v2440 = vtanh.pop %v2438
  %v2441 = vsub.f32 %v2313, %v2439
  %v2442 = vsub.f32 %v2314, %v2440
  %2445 = vrot.lane.b32.xlu0 %v2441, 96
  %v2446 = vpop.permute.xlu0 %2445
  %2447 = vrot.lane.b32.xlu0 %v2442, 96
  %v2448 = vpop.permute.xlu0 %2447
  %v2451 = vmul.f32 %v2418, %v2446
  %v2452 = vmul.f32 %v2420, %v2448
  %2455 = vrot.lane.b32.xlu0 %v2451, 32
  %v2456 = vpop.permute.xlu0 %2455
  %2457 = vrot.lane.b32.xlu0 %v2452, 32
  %v2458 = vpop.permute.xlu0 %2457
  %v2461 = vadd.f32 %v2439, %v2456
  %v2462 = vadd.f32 %v2440, %v2458
  %2465 = vrot.lane.b32.xlu0 %v2461, 64
  %v2466 = vpop.permute.xlu0 %2465
  %2467 = vrot.lane.b32.xlu0 %v2462, 64
  %v2468 = vpop.permute.xlu0 %2467
  %2471 = vst.msk [vmem:[%s5 + $0xe] sm:$0x1] %vm397, %v2466
  %2472 = vst.msk [vmem:[%s5 + $0x2e] sm:$0x1] %vm397, %v2468
  %v2473 = vrot.slane %v2462, 7
  %v2474 = vsel %vm401, %v2473, %v2461
  %2475 = vrot.lane.b32.xlu0 %v2474, 64
  %v2476 = vpop.permute.xlu0 %2475
  %v2477 = vsel %vm253, %v2476, 0
  %2479 = vmatprep.subr.mxu0 0.0
  %2480 = vmatpush1.msra.mxu0 %v23
  %2481 = vmatprep.subr.mxu0 0.0
  %2482 = vmatpush1.msra.mxu0 %v24
  %2483 = vmatprep.subr.mxu0 0.0
  %2484 = vmatpush1.msra.mxu0 %v25
  %2485 = vmatprep.subr.mxu0 0.0
  %2486 = vmatpush1.msra.mxu0 %v26
  %2487 = vmatprep.subr.mxu0 0.0
  %2488 = vmatpush1.msra.mxu0 0.0
  %2489 = vmatprep.subr.mxu0 0.0
  %2490 = vmatpush1.msra.mxu0 0.0
  %2491 = vmatprep.subr.mxu0 0.0
  %2492 = vmatpush1.msra.mxu0 0.0
  %2493 = vmatprep.subr.mxu0 0.0
  %2494 = vmatpush1.msra.mxu0 0.0
  %2495 = vmatprep.subr.mxu0 0.0
  %2496 = vmatpush1.msra.mxu0 0.0
  %2497 = vmatprep.subr.mxu0 0.0
  %2498 = vmatpush1.msra.mxu0 0.0
  %2499 = vmatprep.subr.mxu0 0.0
  %2500 = vmatpush1.msra.mxu0 0.0
  %2501 = vmatprep.subr.mxu0 0.0
  %2502 = vmatpush1.msra.mxu0 0.0
  %2503 = vmatprep.subr.mxu0 0.0
  %2504 = vmatpush1.msra.mxu0 0.0
  %2505 = vmatprep.subr.mxu0 0.0
  %2506 = vmatpush1.msra.mxu0 0.0
  %2507 = vmatprep.subr.mxu0 0.0
  %2508 = vmatpush1.msra.mxu0 0.0
  %2509 = vmatprep.subr.mxu0 0.0
  %2510 = vmatpush1.msra.mxu0 0.0
  %2511 = vmatprep.subr.mxu0 0.0
  %2512 = vmatpush1.msra.mxu0 0.0
  %2513 = vmatprep.subr.mxu0 0.0
  %2514 = vmatpush1.msra.mxu0 0.0
  %2515 = vmatprep.subr.mxu0 0.0
  %2516 = vmatpush1.msra.mxu0 0.0
  %2517 = vmatprep.subr.mxu0 0.0
  %2518 = vmatpush1.msra.mxu0 0.0
  %2519 = vmatprep.subr.mxu0 0.0
  %2520 = vmatpush1.msra.mxu0 0.0
  %2521 = vmatprep.subr.mxu0 0.0
  %2522 = vmatpush1.msra.mxu0 0.0
  %2523 = vmatprep.subr.mxu0 0.0
  %2524 = vmatpush1.msra.mxu0 0.0
  %2525 = vmatprep.subr.mxu0 0.0
  %2526 = vmatpush1.msra.mxu0 0.0
  %2527 = vmatprep.subr.mxu0 0.0
  %2528 = vmatpush1.msra.mxu0 0.0
  %2529 = vmatprep.subr.mxu0 0.0
  %2530 = vmatpush1.msra.mxu0 0.0
  %2531 = vmatprep.subr.mxu0 0.0
  %2532 = vmatpush1.msra.mxu0 0.0
  %2533 = vmatprep.subr.mxu0 0.0
  %2534 = vmatpush1.msra.mxu0 0.0
  %2535 = vmatprep.subr.mxu0 0.0
  %2536 = vmatpush1.msra.mxu0 0.0
  %2537 = vmatprep.subr.mxu0 0.0
  %2538 = vmatpush1.msra.mxu0 0.0
  %2539 = vmatprep.subr.mxu0 0.0
  %2540 = vmatpush1.msra.mxu0 0.0
  %2541 = vmatprep.subr.mxu0 0.0
  %2542 = vmatpush1.msra.mxu0 0.0
  %2543 = vmatprep.mubr.f32.mxu0 0.0
  %2544 = vmatmul.mubr.f32.gmra.mrb[0].mxu0 %v2477
  %v2545 = vpop.f32.mrb[0].mxu0
  %v2546 = vadd.f32 %v251, %v2545
  %v2547 = vpop.f32.mrb[0].mxu0
  %2548 = vdwg.mxu0
  %v2549 = vld [vmem:[#allocation2 + $0xf] sm:$0x1]
  %v2550 = vld [vmem:[#allocation2 + $0x2f] sm:$0x1]
  %v2552 = vrot.slane %v2546, 1
  %v2555 = vadd.f32 %v2549, %v2546
  %v2556 = vadd.f32 %v2550, %v2552
  %v2557 = vxor.u32 %v2555, 2147483648
  %v2558 = vxor.u32 %v2556, 2147483648
  %v2559 = vmul.f32 %v2557, 1.442695
  %v2560 = vpow.pop %v2559
  %v2561 = vmul.f32 %v2558, 1.442695
  %v2562 = vpow.pop %v2561
  %v2563 = vadd.f32 %v2560, 1.0
  %v2564 = vadd.f32 %v2562, 1.0
  %v2565 = vrcp.pop %v2563
  %v2566 = vmul.f32 1.0, %v2565
  %v2567 = vrcp.pop %v2564
  %v2568 = vmul.f32 1.0, %v2567
  %2569 = vrot.lane.b32.xlu0 %v2546, 64
  %v2570 = vpop.permute.xlu0 %2569
  %2571 = vrot.lane.b32.xlu0 %v2552, 64
  %v2572 = vpop.permute.xlu0 %2571
  %v2575 = vmul.f32 %v2566, %v2570
  %v2576 = vmul.f32 %v2568, %v2572
  %2579 = vrot.lane.b32.xlu0 %v2575, 64
  %v2580 = vpop.permute.xlu0 %2579
  %2581 = vrot.lane.b32.xlu0 %v2576, 64
  %v2582 = vpop.permute.xlu0 %2581
  %v2585 = vadd.f32 %v2549, %v2580
  %v2586 = vadd.f32 %v2550, %v2582
  %v2587 = vtanh.pop %v2585
  %v2588 = vtanh.pop %v2586
  %v2589 = vsub.f32 %v2461, %v2587
  %v2590 = vsub.f32 %v2462, %v2588
  %2593 = vrot.lane.b32.xlu0 %v2589, 96
  %v2594 = vpop.permute.xlu0 %2593
  %2595 = vrot.lane.b32.xlu0 %v2590, 96
  %v2596 = vpop.permute.xlu0 %2595
  %v2599 = vmul.f32 %v2566, %v2594
  %v2600 = vmul.f32 %v2568, %v2596
  %2603 = vrot.lane.b32.xlu0 %v2599, 32
  %v2604 = vpop.permute.xlu0 %2603
  %2605 = vrot.lane.b32.xlu0 %v2600, 32
  %v2606 = vpop.permute.xlu0 %2605
  %v2609 = vadd.f32 %v2587, %v2604
  %v2610 = vadd.f32 %v2588, %v2606
  %2613 = vrot.lane.b32.xlu0 %v2609, 64
  %v2614 = vpop.permute.xlu0 %2613
  %2615 = vrot.lane.b32.xlu0 %v2610, 64
  %v2616 = vpop.permute.xlu0 %2615
  %2619 = vst.msk [vmem:[%s5 + $0xf] sm:$0x1] %vm397, %v2614
  %2620 = vst.msk [vmem:[%s5 + $0x2f] sm:$0x1] %vm397, %v2616
  %v2621 = vrot.slane %v2610, 7
  %v2622 = vsel %vm401, %v2621, %v2609
  %2623 = vrot.lane.b32.xlu0 %v2622, 64
  %v2624 = vpop.permute.xlu0 %2623
  %v2625 = vsel %vm253, %v2624, 0
  %2627 = vmatprep.subr.mxu0 0.0
  %2628 = vmatpush1.msra.mxu0 %v23
  %2629 = vmatprep.subr.mxu0 0.0
  %2630 = vmatpush1.msra.mxu0 %v24
  %2631 = vmatprep.subr.mxu0 0.0
  %2632 = vmatpush1.msra.mxu0 %v25
  %2633 = vmatprep.subr.mxu0 0.0
  %2634 = vmatpush1.msra.mxu0 %v26
  %2635 = vmatprep.subr.mxu0 0.0
  %2636 = vmatpush1.msra.mxu0 0.0
  %2637 = vmatprep.subr.mxu0 0.0
  %2638 = vmatpush1.msra.mxu0 0.0
  %2639 = vmatprep.subr.mxu0 0.0
  %2640 = vmatpush1.msra.mxu0 0.0
  %2641 = vmatprep.subr.mxu0 0.0
  %2642 = vmatpush1.msra.mxu0 0.0
  %2643 = vmatprep.subr.mxu0 0.0
  %2644 = vmatpush1.msra.mxu0 0.0
  %2645 = vmatprep.subr.mxu0 0.0
  %2646 = vmatpush1.msra.mxu0 0.0
  %2647 = vmatprep.subr.mxu0 0.0
  %2648 = vmatpush1.msra.mxu0 0.0
  %2649 = vmatprep.subr.mxu0 0.0
  %2650 = vmatpush1.msra.mxu0 0.0
  %2651 = vmatprep.subr.mxu0 0.0
  %2652 = vmatpush1.msra.mxu0 0.0
  %2653 = vmatprep.subr.mxu0 0.0
  %2654 = vmatpush1.msra.mxu0 0.0
  %2655 = vmatprep.subr.mxu0 0.0
  %2656 = vmatpush1.msra.mxu0 0.0
  %2657 = vmatprep.subr.mxu0 0.0
  %2658 = vmatpush1.msra.mxu0 0.0
  %2659 = vmatprep.subr.mxu0 0.0
  %2660 = vmatpush1.msra.mxu0 0.0
  %2661 = vmatprep.subr.mxu0 0.0
  %2662 = vmatpush1.msra.mxu0 0.0
  %2663 = vmatprep.subr.mxu0 0.0
  %2664 = vmatpush1.msra.mxu0 0.0
  %2665 = vmatprep.subr.mxu0 0.0
  %2666 = vmatpush1.msra.mxu0 0.0
  %2667 = vmatprep.subr.mxu0 0.0
  %2668 = vmatpush1.msra.mxu0 0.0
  %2669 = vmatprep.subr.mxu0 0.0
  %2670 = vmatpush1.msra.mxu0 0.0
  %2671 = vmatprep.subr.mxu0 0.0
  %2672 = vmatpush1.msra.mxu0 0.0
  %2673 = vmatprep.subr.mxu0 0.0
  %2674 = vmatpush1.msra.mxu0 0.0
  %2675 = vmatprep.subr.mxu0 0.0
  %2676 = vmatpush1.msra.mxu0 0.0
  %2677 = vmatprep.subr.mxu0 0.0
  %2678 = vmatpush1.msra.mxu0 0.0
  %2679 = vmatprep.subr.mxu0 0.0
  %2680 = vmatpush1.msra.mxu0 0.0
  %2681 = vmatprep.subr.mxu0 0.0
  %2682 = vmatpush1.msra.mxu0 0.0
  %2683 = vmatprep.subr.mxu0 0.0
  %2684 = vmatpush1.msra.mxu0 0.0
  %2685 = vmatprep.subr.mxu0 0.0
  %2686 = vmatpush1.msra.mxu0 0.0
  %2687 = vmatprep.subr.mxu0 0.0
  %2688 = vmatpush1.msra.mxu0 0.0
  %2689 = vmatprep.subr.mxu0 0.0
  %2690 = vmatpush1.msra.mxu0 0.0
  %2691 = vmatprep.mubr.f32.mxu0 0.0
  %2692 = vmatmul.mubr.f32.gmra.mrb[0].mxu0 %v2625
  %v2693 = vpop.f32.mrb[0].mxu0
  %v2694 = vadd.f32 %v251, %v2693
  %v2695 = vpop.f32.mrb[0].mxu0
  %2696 = vdwg.mxu0
  %v2697 = vld [vmem:[#allocation2 + $0x10] sm:$0x1]
  %v2698 = vld [vmem:[#allocation2 + $0x30] sm:$0x1]
  %v2700 = vrot.slane %v2694, 1
  %v2703 = vadd.f32 %v2697, %v2694
  %v2704 = vadd.f32 %v2698, %v2700
  %v2705 = vxor.u32 %v2703, 2147483648
  %v2706 = vxor.u32 %v2704, 2147483648
  %v2707 = vmul.f32 %v2705, 1.442695
  %v2708 = vpow.pop %v2707
  %v2709 = vmul.f32 %v2706, 1.442695
  %v2710 = vpow.pop %v2709
  %v2711 = vadd.f32 %v2708, 1.0
  %v2712 = vadd.f32 %v2710, 1.0
  %v2713 = vrcp.pop %v2711
  %v2714 = vmul.f32 1.0, %v2713
  %v2715 = vrcp.pop %v2712
  %v2716 = vmul.f32 1.0, %v2715
  %2717 = vrot.lane.b32.xlu0 %v2694, 64
  %v2718 = vpop.permute.xlu0 %2717
  %2719 = vrot.lane.b32.xlu0 %v2700, 64
  %v2720 = vpop.permute.xlu0 %2719
  %v2723 = vmul.f32 %v2714, %v2718
  %v2724 = vmul.f32 %v2716, %v2720
  %2727 = vrot.lane.b32.xlu0 %v2723, 64
  %v2728 = vpop.permute.xlu0 %2727
  %2729 = vrot.lane.b32.xlu0 %v2724, 64
  %v2730 = vpop.permute.xlu0 %2729
  %v2733 = vadd.f32 %v2697, %v2728
  %v2734 = vadd.f32 %v2698, %v2730
  %v2735 = vtanh.pop %v2733
  %v2736 = vtanh.pop %v2734
  %v2737 = vsub.f32 %v2609, %v2735
  %v2738 = vsub.f32 %v2610, %v2736
  %2741 = vrot.lane.b32.xlu0 %v2737, 96
  %v2742 = vpop.permute.xlu0 %2741
  %2743 = vrot.lane.b32.xlu0 %v2738, 96
  %v2744 = vpop.permute.xlu0 %2743
  %v2747 = vmul.f32 %v2714, %v2742
  %v2748 = vmul.f32 %v2716, %v2744
  %2751 = vrot.lane.b32.xlu0 %v2747, 32
  %v2752 = vpop.permute.xlu0 %2751
  %2753 = vrot.lane.b32.xlu0 %v2748, 32
  %v2754 = vpop.permute.xlu0 %2753
  %v2757 = vadd.f32 %v2735, %v2752
  %v2758 = vadd.f32 %v2736, %v2754
  %2761 = vrot.lane.b32.xlu0 %v2757, 64
  %v2762 = vpop.permute.xlu0 %2761
  %2763 = vrot.lane.b32.xlu0 %v2758, 64
  %v2764 = vpop.permute.xlu0 %2763
  %2767 = vst.msk [vmem:[%s5 + $0x10] sm:$0x1] %vm397, %v2762
  %2768 = vst.msk [vmem:[%s5 + $0x30] sm:$0x1] %vm397, %v2764
  %v2769 = vrot.slane %v2758, 7
  %v2770 = vsel %vm401, %v2769, %v2757
  %2771 = vrot.lane.b32.xlu0 %v2770, 64
  %v2772 = vpop.permute.xlu0 %2771
  %v2773 = vsel %vm253, %v2772, 0
  %2775 = vmatprep.subr.mxu0 0.0
  %2776 = vmatpush1.msra.mxu0 %v23
  %2777 = vmatprep.subr.mxu0 0.0
  %2778 = vmatpush1.msra.mxu0 %v24
  %2779 = vmatprep.subr.mxu0 0.0
  %2780 = vmatpush1.msra.mxu0 %v25
  %2781 = vmatprep.subr.mxu0 0.0
  %2782 = vmatpush1.msra.mxu0 %v26
  %2783 = vmatprep.subr.mxu0 0.0
  %2784 = vmatpush1.msra.mxu0 0.0
  %2785 = vmatprep.subr.mxu0 0.0
  %2786 = vmatpush1.msra.mxu0 0.0
  %2787 = vmatprep.subr.mxu0 0.0
  %2788 = vmatpush1.msra.mxu0 0.0
  %2789 = vmatprep.subr.mxu0 0.0
  %2790 = vmatpush1.msra.mxu0 0.0
  %2791 = vmatprep.subr.mxu0 0.0
  %2792 = vmatpush1.msra.mxu0 0.0
  %2793 = vmatprep.subr.mxu0 0.0
  %2794 = vmatpush1.msra.mxu0 0.0
  %2795 = vmatprep.subr.mxu0 0.0
  %2796 = vmatpush1.msra.mxu0 0.0
  %2797 = vmatprep.subr.mxu0 0.0
  %2798 = vmatpush1.msra.mxu0 0.0
  %2799 = vmatprep.subr.mxu0 0.0
  %2800 = vmatpush1.msra.mxu0 0.0
  %2801 = vmatprep.subr.mxu0 0.0
  %2802 = vmatpush1.msra.mxu0 0.0
  %2803 = vmatprep.subr.mxu0 0.0
  %2804 = vmatpush1.msra.mxu0 0.0
  %2805 = vmatprep.subr.mxu0 0.0
  %2806 = vmatpush1.msra.mxu0 0.0
  %2807 = vmatprep.subr.mxu0 0.0
  %2808 = vmatpush1.msra.mxu0 0.0
  %2809 = vmatprep.subr.mxu0 0.0
  %2810 = vmatpush1.msra.mxu0 0.0
  %2811 = vmatprep.subr.mxu0 0.0
  %2812 = vmatpush1.msra.mxu0 0.0
  %2813 = vmatprep.subr.mxu0 0.0
  %2814 = vmatpush1.msra.mxu0 0.0
  %2815 = vmatprep.subr.mxu0 0.0
  %2816 = vmatpush1.msra.mxu0 0.0
  %2817 = vmatprep.subr.mxu0 0.0
  %2818 = vmatpush1.msra.mxu0 0.0
  %2819 = vmatprep.subr.mxu0 0.0
  %2820 = vmatpush1.msra.mxu0 0.0
  %2821 = vmatprep.subr.mxu0 0.0
  %2822 = vmatpush1.msra.mxu0 0.0
  %2823 = vmatprep.subr.mxu0 0.0
  %2824 = vmatpush1.msra.mxu0 0.0
  %2825 = vmatprep.subr.mxu0 0.0
  %2826 = vmatpush1.msra.mxu0 0.0
  %2827 = vmatprep.subr.mxu0 0.0
  %2828 = vmatpush1.msra.mxu0 0.0
  %2829 = vmatprep.subr.mxu0 0.0
  %2830 = vmatpush1.msra.mxu0 0.0
  %2831 = vmatprep.subr.mxu0 0.0
  %2832 = vmatpush1.msra.mxu0 0.0
  %2833 = vmatprep.subr.mxu0 0.0
  %2834 = vmatpush1.msra.mxu0 0.0
  %2835 = vmatprep.subr.mxu0 0.0
  %2836 = vmatpush1.msra.mxu0 0.0
  %2837 = vmatprep.subr.mxu0 0.0
  %2838 = vmatpush1.msra.mxu0 0.0
  %2839 = vmatprep.mubr.f32.mxu0 0.0
  %2840 = vmatmul.mubr.f32.gmra.mrb[0].mxu0 %v2773
  %v2841 = vpop.f32.mrb[0].mxu0
  %v2842 = vadd.f32 %v251, %v2841
  %v2843 = vpop.f32.mrb[0].mxu0
  %2844 = vdwg.mxu0
  %v2845 = vld [vmem:[#allocation2 + $0x11] sm:$0x1]
  %v2846 = vld [vmem:[#allocation2 + $0x31] sm:$0x1]
  %v2848 = vrot.slane %v2842, 1
  %v2851 = vadd.f32 %v2845, %v2842
  %v2852 = vadd.f32 %v2846, %v2848
  %v2853 = vxor.u32 %v2851, 2147483648
  %v2854 = vxor.u32 %v2852, 2147483648
  %v2855 = vmul.f32 %v2853, 1.442695
  %v2856 = vpow.pop %v2855
  %v2857 = vmul.f32 %v2854, 1.442695
  %v2858 = vpow.pop %v2857
  %v2859 = vadd.f32 %v2856, 1.0
  %v2860 = vadd.f32 %v2858, 1.0
  %v2861 = vrcp.pop %v2859
  %v2862 = vmul.f32 1.0, %v2861
  %v2863 = vrcp.pop %v2860
  %v2864 = vmul.f32 1.0, %v2863
  %2865 = vrot.lane.b32.xlu0 %v2842, 64
  %v2866 = vpop.permute.xlu0 %2865
  %2867 = vrot.lane.b32.xlu0 %v2848, 64
  %v2868 = vpop.permute.xlu0 %2867
  %v2871 = vmul.f32 %v2862, %v2866
  %v2872 = vmul.f32 %v2864, %v2868
  %2875 = vrot.lane.b32.xlu0 %v2871, 64
  %v2876 = vpop.permute.xlu0 %2875
  %2877 = vrot.lane.b32.xlu0 %v2872, 64
  %v2878 = vpop.permute.xlu0 %2877
  %v2881 = vadd.f32 %v2845, %v2876
  %v2882 = vadd.f32 %v2846, %v2878
  %v2883 = vtanh.pop %v2881
  %v2884 = vtanh.pop %v2882
  %v2885 = vsub.f32 %v2757, %v2883
  %v2886 = vsub.f32 %v2758, %v2884
  %2889 = vrot.lane.b32.xlu0 %v2885, 96
  %v2890 = vpop.permute.xlu0 %2889
  %2891 = vrot.lane.b32.xlu0 %v2886, 96
  %v2892 = vpop.permute.xlu0 %2891
  %v2895 = vmul.f32 %v2862, %v2890
  %v2896 = vmul.f32 %v2864, %v2892
  %2899 = vrot.lane.b32.xlu0 %v2895, 32
  %v2900 = vpop.permute.xlu0 %2899
  %2901 = vrot.lane.b32.xlu0 %v2896, 32
  %v2902 = vpop.permute.xlu0 %2901
  %v2905 = vadd.f32 %v2883, %v2900
  %v2906 = vadd.f32 %v2884, %v2902
  %2909 = vrot.lane.b32.xlu0 %v2905, 64
  %v2910 = vpop.permute.xlu0 %2909
  %2911 = vrot.lane.b32.xlu0 %v2906, 64
  %v2912 = vpop.permute.xlu0 %2911
  %2915 = vst.msk [vmem:[%s5 + $0x11] sm:$0x1] %vm397, %v2910
  %2916 = vst.msk [vmem:[%s5 + $0x31] sm:$0x1] %vm397, %v2912
  %v2917 = vrot.slane %v2906, 7
  %v2918 = vsel %vm401, %v2917, %v2905
  %2919 = vrot.lane.b32.xlu0 %v2918, 64
  %v2920 = vpop.permute.xlu0 %2919
  %v2921 = vsel %vm253, %v2920, 0
  %2923 = vmatprep.subr.mxu0 0.0
  %2924 = vmatpush1.msra.mxu0 %v23
  %2925 = vmatprep.subr.mxu0 0.0
  %2926 = vmatpush1.msra.mxu0 %v24
  %2927 = vmatprep.subr.mxu0 0.0
  %2928 = vmatpush1.msra.mxu0 %v25
  %2929 = vmatprep.subr.mxu0 0.0
  %2930 = vmatpush1.msra.mxu0 %v26
  %2931 = vmatprep.subr.mxu0 0.0
  %2932 = vmatpush1.msra.mxu0 0.0
  %2933 = vmatprep.subr.mxu0 0.0
  %2934 = vmatpush1.msra.mxu0 0.0
  %2935 = vmatprep.subr.mxu0 0.0
  %2936 = vmatpush1.msra.mxu0 0.0
  %2937 = vmatprep.subr.mxu0 0.0
  %2938 = vmatpush1.msra.mxu0 0.0
  %2939 = vmatprep.subr.mxu0 0.0
  %2940 = vmatpush1.msra.mxu0 0.0
  %2941 = vmatprep.subr.mxu0 0.0
  %2942 = vmatpush1.msra.mxu0 0.0
  %2943 = vmatprep.subr.mxu0 0.0
  %2944 = vmatpush1.msra.mxu0 0.0
  %2945 = vmatprep.subr.mxu0 0.0
  %2946 = vmatpush1.msra.mxu0 0.0
  %2947 = vmatprep.subr.mxu0 0.0
  %2948 = vmatpush1.msra.mxu0 0.0
  %2949 = vmatprep.subr.mxu0 0.0
  %2950 = vmatpush1.msra.mxu0 0.0
  %2951 = vmatprep.subr.mxu0 0.0
  %2952 = vmatpush1.msra.mxu0 0.0
  %2953 = vmatprep.subr.mxu0 0.0
  %2954 = vmatpush1.msra.mxu0 0.0
  %2955 = vmatprep.subr.mxu0 0.0
  %2956 = vmatpush1.msra.mxu0 0.0
  %2957 = vmatprep.subr.mxu0 0.0
  %2958 = vmatpush1.msra.mxu0 0.0
  %2959 = vmatprep.subr.mxu0 0.0
  %2960 = vmatpush1.msra.mxu0 0.0
  %2961 = vmatprep.subr.mxu0 0.0
  %2962 = vmatpush1.msra.mxu0 0.0
  %2963 = vmatprep.subr.mxu0 0.0
  %2964 = vmatpush1.msra.mxu0 0.0
  %2965 = vmatprep.subr.mxu0 0.0
  %2966 = vmatpush1.msra.mxu0 0.0
  %2967 = vmatprep.subr.mxu0 0.0
  %2968 = vmatpush1.msra.mxu0 0.0
  %2969 = vmatprep.subr.mxu0 0.0
  %2970 = vmatpush1.msra.mxu0 0.0
  %2971 = vmatprep.subr.mxu0 0.0
  %2972 = vmatpush1.msra.mxu0 0.0
  %2973 = vmatprep.subr.mxu0 0.0
  %2974 = vmatpush1.msra.mxu0 0.0
  %2975 = vmatprep.subr.mxu0 0.0
  %2976 = vmatpush1.msra.mxu0 0.0
  %2977 = vmatprep.subr.mxu0 0.0
  %2978 = vmatpush1.msra.mxu0 0.0
  %2979 = vmatprep.subr.mxu0 0.0
  %2980 = vmatpush1.msra.mxu0 0.0
  %2981 = vmatprep.subr.mxu0 0.0
  %2982 = vmatpush1.msra.mxu0 0.0
  %2983 = vmatprep.subr.mxu0 0.0
  %2984 = vmatpush1.msra.mxu0 0.0
  %2985 = vmatprep.subr.mxu0 0.0
  %2986 = vmatpush1.msra.mxu0 0.0
  %2987 = vmatprep.mubr.f32.mxu0 0.0
  %2988 = vmatmul.mubr.f32.gmra.mrb[0].mxu0 %v2921
  %v2989 = vpop.f32.mrb[0].mxu0
  %v2990 = vadd.f32 %v251, %v2989
  %v2991 = vpop.f32.mrb[0].mxu0
  %2992 = vdwg.mxu0
  %v2993 = vld [vmem:[#allocation2 + $0x12] sm:$0x1]
  %v2994 = vld [vmem:[#allocation2 + $0x32] sm:$0x1]
  %v2996 = vrot.slane %v2990, 1
  %v2999 = vadd.f32 %v2993, %v2990
  %v3000 = vadd.f32 %v2994, %v2996
  %v3001 = vxor.u32 %v2999, 2147483648
  %v3002 = vxor.u32 %v3000, 2147483648
  %v3003 = vmul.f32 %v3001, 1.442695
  %v3004 = vpow.pop %v3003
  %v3005 = vmul.f32 %v3002, 1.442695
  %v3006 = vpow.pop %v3005
  %v3007 = vadd.f32 %v3004, 1.0
  %v3008 = vadd.f32 %v3006, 1.0
  %v3009 = vrcp.pop %v3007
  %v3010 = vmul.f32 1.0, %v3009
  %v3011 = vrcp.pop %v3008
  %v3012 = vmul.f32 1.0, %v3011
  %3013 = vrot.lane.b32.xlu0 %v2990, 64
  %v3014 = vpop.permute.xlu0 %3013
  %3015 = vrot.lane.b32.xlu0 %v2996, 64
  %v3016 = vpop.permute.xlu0 %3015
  %v3019 = vmul.f32 %v3010, %v3014
  %v3020 = vmul.f32 %v3012, %v3016
  %3023 = vrot.lane.b32.xlu0 %v3019, 64
  %v3024 = vpop.permute.xlu0 %3023
  %3025 = vrot.lane.b32.xlu0 %v3020, 64
  %v3026 = vpop.permute.xlu0 %3025
  %v3029 = vadd.f32 %v2993, %v3024
  %v3030 = vadd.f32 %v2994, %v3026
  %v3031 = vtanh.pop %v3029
  %v3032 = vtanh.pop %v3030
  %v3033 = vsub.f32 %v2905, %v3031
  %v3034 = vsub.f32 %v2906, %v3032
  %3037 = vrot.lane.b32.xlu0 %v3033, 96
  %v3038 = vpop.permute.xlu0 %3037
  %3039 = vrot.lane.b32.xlu0 %v3034, 96
  %v3040 = vpop.permute.xlu0 %3039
  %v3043 = vmul.f32 %v3010, %v3038
  %v3044 = vmul.f32 %v3012, %v3040
  %3047 = vrot.lane.b32.xlu0 %v3043, 32
  %v3048 = vpop.permute.xlu0 %3047
  %3049 = vrot.lane.b32.xlu0 %v3044, 32
  %v3050 = vpop.permute.xlu0 %3049
  %v3053 = vadd.f32 %v3031, %v3048
  %v3054 = vadd.f32 %v3032, %v3050
  %3057 = vrot.lane.b32.xlu0 %v3053, 64
  %v3058 = vpop.permute.xlu0 %3057
  %3059 = vrot.lane.b32.xlu0 %v3054, 64
  %v3060 = vpop.permute.xlu0 %3059
  %3063 = vst.msk [vmem:[%s5 + $0x12] sm:$0x1] %vm397, %v3058
  %3064 = vst.msk [vmem:[%s5 + $0x32] sm:$0x1] %vm397, %v3060
  %v3065 = vrot.slane %v3054, 7
  %v3066 = vsel %vm401, %v3065, %v3053
  %3067 = vrot.lane.b32.xlu0 %v3066, 64
  %v3068 = vpop.permute.xlu0 %3067
  %v3069 = vsel %vm253, %v3068, 0
  %3071 = vmatprep.subr.mxu0 0.0
  %3072 = vmatpush1.msra.mxu0 %v23
  %3073 = vmatprep.subr.mxu0 0.0
  %3074 = vmatpush1.msra.mxu0 %v24
  %3075 = vmatprep.subr.mxu0 0.0
  %3076 = vmatpush1.msra.mxu0 %v25
  %3077 = vmatprep.subr.mxu0 0.0
  %3078 = vmatpush1.msra.mxu0 %v26
  %3079 = vmatprep.subr.mxu0 0.0
  %3080 = vmatpush1.msra.mxu0 0.0
  %3081 = vmatprep.subr.mxu0 0.0
  %3082 = vmatpush1.msra.mxu0 0.0
  %3083 = vmatprep.subr.mxu0 0.0
  %3084 = vmatpush1.msra.mxu0 0.0
  %3085 = vmatprep.subr.mxu0 0.0
  %3086 = vmatpush1.msra.mxu0 0.0
  %3087 = vmatprep.subr.mxu0 0.0
  %3088 = vmatpush1.msra.mxu0 0.0
  %3089 = vmatprep.subr.mxu0 0.0
  %3090 = vmatpush1.msra.mxu0 0.0
  %3091 = vmatprep.subr.mxu0 0.0
  %3092 = vmatpush1.msra.mxu0 0.0
  %3093 = vmatprep.subr.mxu0 0.0
  %3094 = vmatpush1.msra.mxu0 0.0
  %3095 = vmatprep.subr.mxu0 0.0
  %3096 = vmatpush1.msra.mxu0 0.0
  %3097 = vmatprep.subr.mxu0 0.0
  %3098 = vmatpush1.msra.mxu0 0.0
  %3099 = vmatprep.subr.mxu0 0.0
  %3100 = vmatpush1.msra.mxu0 0.0
  %3101 = vmatprep.subr.mxu0 0.0
  %3102 = vmatpush1.msra.mxu0 0.0
  %3103 = vmatprep.subr.mxu0 0.0
  %3104 = vmatpush1.msra.mxu0 0.0
  %3105 = vmatprep.subr.mxu0 0.0
  %3106 = vmatpush1.msra.mxu0 0.0
  %3107 = vmatprep.subr.mxu0 0.0
  %3108 = vmatpush1.msra.mxu0 0.0
  %3109 = vmatprep.subr.mxu0 0.0
  %3110 = vmatpush1.msra.mxu0 0.0
  %3111 = vmatprep.subr.mxu0 0.0
  %3112 = vmatpush1.msra.mxu0 0.0
  %3113 = vmatprep.subr.mxu0 0.0
  %3114 = vmatpush1.msra.mxu0 0.0
  %3115 = vmatprep.subr.mxu0 0.0
  %3116 = vmatpush1.msra.mxu0 0.0
  %3117 = vmatprep.subr.mxu0 0.0
  %3118 = vmatpush1.msra.mxu0 0.0
  %3119 = vmatprep.subr.mxu0 0.0
  %3120 = vmatpush1.msra.mxu0 0.0
  %3121 = vmatprep.subr.mxu0 0.0
  %3122 = vmatpush1.msra.mxu0 0.0
  %3123 = vmatprep.subr.mxu0 0.0
  %3124 = vmatpush1.msra.mxu0 0.0
  %3125 = vmatprep.subr.mxu0 0.0
  %3126 = vmatpush1.msra.mxu0 0.0
  %3127 = vmatprep.subr.mxu0 0.0
  %3128 = vmatpush1.msra.mxu0 0.0
  %3129 = vmatprep.subr.mxu0 0.0
  %3130 = vmatpush1.msra.mxu0 0.0
  %3131 = vmatprep.subr.mxu0 0.0
  %3132 = vmatpush1.msra.mxu0 0.0
  %3133 = vmatprep.subr.mxu0 0.0
  %3134 = vmatpush1.msra.mxu0 0.0
  %3135 = vmatprep.mubr.f32.mxu0 0.0
  %3136 = vmatmul.mubr.f32.gmra.mrb[0].mxu0 %v3069
  %v3137 = vpop.f32.mrb[0].mxu0
  %v3138 = vadd.f32 %v251, %v3137
  %v3139 = vpop.f32.mrb[0].mxu0
  %3140 = vdwg.mxu0
  %v3141 = vld [vmem:[#allocation2 + $0x13] sm:$0x1]
  %v3142 = vld [vmem:[#allocation2 + $0x33] sm:$0x1]
  %v3144 = vrot.slane %v3138, 1
  %v3147 = vadd.f32 %v3141, %v3138
  %v3148 = vadd.f32 %v3142, %v3144
  %v3149 = vxor.u32 %v3147, 2147483648
  %v3150 = vxor.u32 %v3148, 2147483648
  %v3151 = vmul.f32 %v3149, 1.442695
  %v3152 = vpow.pop %v3151
  %v3153 = vmul.f32 %v3150, 1.442695
  %v3154 = vpow.pop %v3153
  %v3155 = vadd.f32 %v3152, 1.0
  %v3156 = vadd.f32 %v3154, 1.0
  %v3157 = vrcp.pop %v3155
  %v3158 = vmul.f32 1.0, %v3157
  %v3159 = vrcp.pop %v3156
  %v3160 = vmul.f32 1.0, %v3159
  %3161 = vrot.lane.b32.xlu0 %v3138, 64
  %v3162 = vpop.permute.xlu0 %3161
  %3163 = vrot.lane.b32.xlu0 %v3144, 64
  %v3164 = vpop.permute.xlu0 %3163
  %v3167 = vmul.f32 %v3158, %v3162
  %v3168 = vmul.f32 %v3160, %v3164
  %3171 = vrot.lane.b32.xlu0 %v3167, 64
  %v3172 = vpop.permute.xlu0 %3171
  %3173 = vrot.lane.b32.xlu0 %v3168, 64
  %v3174 = vpop.permute.xlu0 %3173
  %v3177 = vadd.f32 %v3141, %v3172
  %v3178 = vadd.f32 %v3142, %v3174
  %v3179 = vtanh.pop %v3177
  %v3180 = vtanh.pop %v3178
  %v3181 = vsub.f32 %v3053, %v3179
  %v3182 = vsub.f32 %v3054, %v3180
  %3185 = vrot.lane.b32.xlu0 %v3181, 96
  %v3186 = vpop.permute.xlu0 %3185
  %3187 = vrot.lane.b32.xlu0 %v3182, 96
  %v3188 = vpop.permute.xlu0 %3187
  %v3191 = vmul.f32 %v3158, %v3186
  %v3192 = vmul.f32 %v3160, %v3188
  %3195 = vrot.lane.b32.xlu0 %v3191, 32
  %v3196 = vpop.permute.xlu0 %3195
  %3197 = vrot.lane.b32.xlu0 %v3192, 32
  %v3198 = vpop.permute.xlu0 %3197
  %v3201 = vadd.f32 %v3179, %v3196
  %v3202 = vadd.f32 %v3180, %v3198
  %3205 = vrot.lane.b32.xlu0 %v3201, 64
  %v3206 = vpop.permute.xlu0 %3205
  %3207 = vrot.lane.b32.xlu0 %v3202, 64
  %v3208 = vpop.permute.xlu0 %3207
  %3211 = vst.msk [vmem:[%s5 + $0x13] sm:$0x1] %vm397, %v3206
  %3212 = vst.msk [vmem:[%s5 + $0x33] sm:$0x1] %vm397, %v3208
  %v3213 = vrot.slane %v3202, 7
  %v3214 = vsel %vm401, %v3213, %v3201
  %3215 = vrot.lane.b32.xlu0 %v3214, 64
  %v3216 = vpop.permute.xlu0 %3215
  %v3217 = vsel %vm253, %v3216, 0
  %3219 = vmatprep.subr.mxu0 0.0
  %3220 = vmatpush1.msra.mxu0 %v23
  %3221 = vmatprep.subr.mxu0 0.0
  %3222 = vmatpush1.msra.mxu0 %v24
  %3223 = vmatprep.subr.mxu0 0.0
  %3224 = vmatpush1.msra.mxu0 %v25
  %3225 = vmatprep.subr.mxu0 0.0
  %3226 = vmatpush1.msra.mxu0 %v26
  %3227 = vmatprep.subr.mxu0 0.0
  %3228 = vmatpush1.msra.mxu0 0.0
  %3229 = vmatprep.subr.mxu0 0.0
  %3230 = vmatpush1.msra.mxu0 0.0
  %3231 = vmatprep.subr.mxu0 0.0
  %3232 = vmatpush1.msra.mxu0 0.0
  %3233 = vmatprep.subr.mxu0 0.0
  %3234 = vmatpush1.msra.mxu0 0.0
  %3235 = vmatprep.subr.mxu0 0.0
  %3236 = vmatpush1.msra.mxu0 0.0
  %3237 = vmatprep.subr.mxu0 0.0
  %3238 = vmatpush1.msra.mxu0 0.0
  %3239 = vmatprep.subr.mxu0 0.0
  %3240 = vmatpush1.msra.mxu0 0.0
  %3241 = vmatprep.subr.mxu0 0.0
  %3242 = vmatpush1.msra.mxu0 0.0
  %3243 = vmatprep.subr.mxu0 0.0
  %3244 = vmatpush1.msra.mxu0 0.0
  %3245 = vmatprep.subr.mxu0 0.0
  %3246 = vmatpush1.msra.mxu0 0.0
  %3247 = vmatprep.subr.mxu0 0.0
  %3248 = vmatpush1.msra.mxu0 0.0
  %3249 = vmatprep.subr.mxu0 0.0
  %3250 = vmatpush1.msra.mxu0 0.0
  %3251 = vmatprep.subr.mxu0 0.0
  %3252 = vmatpush1.msra.mxu0 0.0
  %3253 = vmatprep.subr.mxu0 0.0
  %3254 = vmatpush1.msra.mxu0 0.0
  %3255 = vmatprep.subr.mxu0 0.0
  %3256 = vmatpush1.msra.mxu0 0.0
  %3257 = vmatprep.subr.mxu0 0.0
  %3258 = vmatpush1.msra.mxu0 0.0
  %3259 = vmatprep.subr.mxu0 0.0
  %3260 = vmatpush1.msra.mxu0 0.0
  %3261 = vmatprep.subr.mxu0 0.0
  %3262 = vmatpush1.msra.mxu0 0.0
  %3263 = vmatprep.subr.mxu0 0.0
  %3264 = vmatpush1.msra.mxu0 0.0
  %3265 = vmatprep.subr.mxu0 0.0
  %3266 = vmatpush1.msra.mxu0 0.0
  %3267 = vmatprep.subr.mxu0 0.0
  %3268 = vmatpush1.msra.mxu0 0.0
  %3269 = vmatprep.subr.mxu0 0.0
  %3270 = vmatpush1.msra.mxu0 0.0
  %3271 = vmatprep.subr.mxu0 0.0
  %3272 = vmatpush1.msra.mxu0 0.0
  %3273 = vmatprep.subr.mxu0 0.0
  %3274 = vmatpush1.msra.mxu0 0.0
  %3275 = vmatprep.subr.mxu0 0.0
  %3276 = vmatpush1.msra.mxu0 0.0
  %3277 = vmatprep.subr.mxu0 0.0
  %3278 = vmatpush1.msra.mxu0 0.0
  %3279 = vmatprep.subr.mxu0 0.0
  %3280 = vmatpush1.msra.mxu0 0.0
  %3281 = vmatprep.subr.mxu0 0.0
  %3282 = vmatpush1.msra.mxu0 0.0
  %3283 = vmatprep.mubr.f32.mxu0 0.0
  %3284 = vmatmul.mubr.f32.gmra.mrb[0].mxu0 %v3217
  %v3285 = vpop.f32.mrb[0].mxu0
  %v3286 = vadd.f32 %v251, %v3285
  %v3287 = vpop.f32.mrb[0].mxu0
  %3288 = vdwg.mxu0
  %v3289 = vld [vmem:[#allocation2 + $0x14] sm:$0x1]
  %v3290 = vld [vmem:[#allocation2 + $0x34] sm:$0x1]
  %v3292 = vrot.slane %v3286, 1
  %v3295 = vadd.f32 %v3289, %v3286
  %v3296 = vadd.f32 %v3290, %v3292
  %v3297 = vxor.u32 %v3295, 2147483648
  %v3298 = vxor.u32 %v3296, 2147483648
  %v3299 = vmul.f32 %v3297, 1.442695
  %v3300 = vpow.pop %v3299
  %v3301 = vmul.f32 %v3298, 1.442695
  %v3302 = vpow.pop %v3301
  %v3303 = vadd.f32 %v3300, 1.0
  %v3304 = vadd.f32 %v3302, 1.0
  %v3305 = vrcp.pop %v3303
  %v3306 = vmul.f32 1.0, %v3305
  %v3307 = vrcp.pop %v3304
  %v3308 = vmul.f32 1.0, %v3307
  %3309 = vrot.lane.b32.xlu0 %v3286, 64
  %v3310 = vpop.permute.xlu0 %3309
  %3311 = vrot.lane.b32.xlu0 %v3292, 64
  %v3312 = vpop.permute.xlu0 %3311
  %v3315 = vmul.f32 %v3306, %v3310
  %v3316 = vmul.f32 %v3308, %v3312
  %3319 = vrot.lane.b32.xlu0 %v3315, 64
  %v3320 = vpop.permute.xlu0 %3319
  %3321 = vrot.lane.b32.xlu0 %v3316, 64
  %v3322 = vpop.permute.xlu0 %3321
  %v3325 = vadd.f32 %v3289, %v3320
  %v3326 = vadd.f32 %v3290, %v3322
  %v3327 = vtanh.pop %v3325
  %v3328 = vtanh.pop %v3326
  %v3329 = vsub.f32 %v3201, %v3327
  %v3330 = vsub.f32 %v3202, %v3328
  %3333 = vrot.lane.b32.xlu0 %v3329, 96
  %v3334 = vpop.permute.xlu0 %3333
  %3335 = vrot.lane.b32.xlu0 %v3330, 96
  %v3336 = vpop.permute.xlu0 %3335
  %v3339 = vmul.f32 %v3306, %v3334
  %v3340 = vmul.f32 %v3308, %v3336
  %3343 = vrot.lane.b32.xlu0 %v3339, 32
  %v3344 = vpop.permute.xlu0 %3343
  %3345 = vrot.lane.b32.xlu0 %v3340, 32
  %v3346 = vpop.permute.xlu0 %3345
  %v3349 = vadd.f32 %v3327, %v3344
  %v3350 = vadd.f32 %v3328, %v3346
  %3353 = vrot.lane.b32.xlu0 %v3349, 64
  %v3354 = vpop.permute.xlu0 %3353
  %3355 = vrot.lane.b32.xlu0 %v3350, 64
  %v3356 = vpop.permute.xlu0 %3355
  %3359 = vst.msk [vmem:[%s5 + $0x14] sm:$0x1] %vm397, %v3354
  %3360 = vst.msk [vmem:[%s5 + $0x34] sm:$0x1] %vm397, %v3356
  %v3361 = vrot.slane %v3350, 7
  %v3362 = vsel %vm401, %v3361, %v3349
  %3363 = vrot.lane.b32.xlu0 %v3362, 64
  %v3364 = vpop.permute.xlu0 %3363
  %v3365 = vsel %vm253, %v3364, 0
  %3367 = vmatprep.subr.mxu0 0.0
  %3368 = vmatpush1.msra.mxu0 %v23
  %3369 = vmatprep.subr.mxu0 0.0
  %3370 = vmatpush1.msra.mxu0 %v24
  %3371 = vmatprep.subr.mxu0 0.0
  %3372 = vmatpush1.msra.mxu0 %v25
  %3373 = vmatprep.subr.mxu0 0.0
  %3374 = vmatpush1.msra.mxu0 %v26
  %3375 = vmatprep.subr.mxu0 0.0
  %3376 = vmatpush1.msra.mxu0 0.0
  %3377 = vmatprep.subr.mxu0 0.0
  %3378 = vmatpush1.msra.mxu0 0.0
  %3379 = vmatprep.subr.mxu0 0.0
  %3380 = vmatpush1.msra.mxu0 0.0
  %3381 = vmatprep.subr.mxu0 0.0
  %3382 = vmatpush1.msra.mxu0 0.0
  %3383 = vmatprep.subr.mxu0 0.0
  %3384 = vmatpush1.msra.mxu0 0.0
  %3385 = vmatprep.subr.mxu0 0.0
  %3386 = vmatpush1.msra.mxu0 0.0
  %3387 = vmatprep.subr.mxu0 0.0
  %3388 = vmatpush1.msra.mxu0 0.0
  %3389 = vmatprep.subr.mxu0 0.0
  %3390 = vmatpush1.msra.mxu0 0.0
  %3391 = vmatprep.subr.mxu0 0.0
  %3392 = vmatpush1.msra.mxu0 0.0
  %3393 = vmatprep.subr.mxu0 0.0
  %3394 = vmatpush1.msra.mxu0 0.0
  %3395 = vmatprep.subr.mxu0 0.0
  %3396 = vmatpush1.msra.mxu0 0.0
  %3397 = vmatprep.subr.mxu0 0.0
  %3398 = vmatpush1.msra.mxu0 0.0
  %3399 = vmatprep.subr.mxu0 0.0
  %3400 = vmatpush1.msra.mxu0 0.0
  %3401 = vmatprep.subr.mxu0 0.0
  %3402 = vmatpush1.msra.mxu0 0.0
  %3403 = vmatprep.subr.mxu0 0.0
  %3404 = vmatpush1.msra.mxu0 0.0
  %3405 = vmatprep.subr.mxu0 0.0
  %3406 = vmatpush1.msra.mxu0 0.0
  %3407 = vmatprep.subr.mxu0 0.0
  %3408 = vmatpush1.msra.mxu0 0.0
  %3409 = vmatprep.subr.mxu0 0.0
  %3410 = vmatpush1.msra.mxu0 0.0
  %3411 = vmatprep.subr.mxu0 0.0
  %3412 = vmatpush1.msra.mxu0 0.0
  %3413 = vmatprep.subr.mxu0 0.0
  %3414 = vmatpush1.msra.mxu0 0.0
  %3415 = vmatprep.subr.mxu0 0.0
  %3416 = vmatpush1.msra.mxu0 0.0
  %3417 = vmatprep.subr.mxu0 0.0
  %3418 = vmatpush1.msra.mxu0 0.0
  %3419 = vmatprep.subr.mxu0 0.0
  %3420 = vmatpush1.msra.mxu0 0.0
  %3421 = vmatprep.subr.mxu0 0.0
  %3422 = vmatpush1.msra.mxu0 0.0
  %3423 = vmatprep.subr.mxu0 0.0
  %3424 = vmatpush1.msra.mxu0 0.0
  %3425 = vmatprep.subr.mxu0 0.0
  %3426 = vmatpush1.msra.mxu0 0.0
  %3427 = vmatprep.subr.mxu0 0.0
  %3428 = vmatpush1.msra.mxu0 0.0
  %3429 = vmatprep.subr.mxu0 0.0
  %3430 = vmatpush1.msra.mxu0 0.0
  %3431 = vmatprep.mubr.f32.mxu0 0.0
  %3432 = vmatmul.mubr.f32.gmra.mrb[0].mxu0 %v3365
  %v3433 = vpop.f32.mrb[0].mxu0
  %v3434 = vadd.f32 %v251, %v3433
  %v3435 = vpop.f32.mrb[0].mxu0
  %3436 = vdwg.mxu0
  %v3437 = vld [vmem:[#allocation2 + $0x15] sm:$0x1]
  %v3438 = vld [vmem:[#allocation2 + $0x35] sm:$0x1]
  %v3440 = vrot.slane %v3434, 1
  %v3443 = vadd.f32 %v3437, %v3434
  %v3444 = vadd.f32 %v3438, %v3440
  %v3445 = vxor.u32 %v3443, 2147483648
  %v3446 = vxor.u32 %v3444, 2147483648
  %v3447 = vmul.f32 %v3445, 1.442695
  %v3448 = vpow.pop %v3447
  %v3449 = vmul.f32 %v3446, 1.442695
  %v3450 = vpow.pop %v3449
  %v3451 = vadd.f32 %v3448, 1.0
  %v3452 = vadd.f32 %v3450, 1.0
  %v3453 = vrcp.pop %v3451
  %v3454 = vmul.f32 1.0, %v3453
  %v3455 = vrcp.pop %v3452
  %v3456 = vmul.f32 1.0, %v3455
  %3457 = vrot.lane.b32.xlu0 %v3434, 64
  %v3458 = vpop.permute.xlu0 %3457
  %3459 = vrot.lane.b32.xlu0 %v3440, 64
  %v3460 = vpop.permute.xlu0 %3459
  %v3463 = vmul.f32 %v3454, %v3458
  %v3464 = vmul.f32 %v3456, %v3460
  %3467 = vrot.lane.b32.xlu0 %v3463, 64
  %v3468 = vpop.permute.xlu0 %3467
  %3469 = vrot.lane.b32.xlu0 %v3464, 64
  %v3470 = vpop.permute.xlu0 %3469
  %v3473 = vadd.f32 %v3437, %v3468
  %v3474 = vadd.f32 %v3438, %v3470
  %v3475 = vtanh.pop %v3473
  %v3476 = vtanh.pop %v3474
  %v3477 = vsub.f32 %v3349, %v3475
  %v3478 = vsub.f32 %v3350, %v3476
  %3481 = vrot.lane.b32.xlu0 %v3477, 96
  %v3482 = vpop.permute.xlu0 %3481
  %3483 = vrot.lane.b32.xlu0 %v3478, 96
  %v3484 = vpop.permute.xlu0 %3483
  %v3487 = vmul.f32 %v3454, %v3482
  %v3488 = vmul.f32 %v3456, %v3484
  %3491 = vrot.lane.b32.xlu0 %v3487, 32
  %v3492 = vpop.permute.xlu0 %3491
  %3493 = vrot.lane.b32.xlu0 %v3488, 32
  %v3494 = vpop.permute.xlu0 %3493
  %v3497 = vadd.f32 %v3475, %v3492
  %v3498 = vadd.f32 %v3476, %v3494
  %3501 = vrot.lane.b32.xlu0 %v3497, 64
  %v3502 = vpop.permute.xlu0 %3501
  %3503 = vrot.lane.b32.xlu0 %v3498, 64
  %v3504 = vpop.permute.xlu0 %3503
  %3507 = vst.msk [vmem:[%s5 + $0x15] sm:$0x1] %vm397, %v3502
  %3508 = vst.msk [vmem:[%s5 + $0x35] sm:$0x1] %vm397, %v3504
  %v3509 = vrot.slane %v3498, 7
  %v3510 = vsel %vm401, %v3509, %v3497
  %3511 = vrot.lane.b32.xlu0 %v3510, 64
  %v3512 = vpop.permute.xlu0 %3511
  %v3513 = vsel %vm253, %v3512, 0
  %3515 = vmatprep.subr.mxu0 0.0
  %3516 = vmatpush1.msra.mxu0 %v23
  %3517 = vmatprep.subr.mxu0 0.0
  %3518 = vmatpush1.msra.mxu0 %v24
  %3519 = vmatprep.subr.mxu0 0.0
  %3520 = vmatpush1.msra.mxu0 %v25
  %3521 = vmatprep.subr.mxu0 0.0
  %3522 = vmatpush1.msra.mxu0 %v26
  %3523 = vmatprep.subr.mxu0 0.0
  %3524 = vmatpush1.msra.mxu0 0.0
  %3525 = vmatprep.subr.mxu0 0.0
  %3526 = vmatpush1.msra.mxu0 0.0
  %3527 = vmatprep.subr.mxu0 0.0
  %3528 = vmatpush1.msra.mxu0 0.0
  %3529 = vmatprep.subr.mxu0 0.0
  %3530 = vmatpush1.msra.mxu0 0.0
  %3531 = vmatprep.subr.mxu0 0.0
  %3532 = vmatpush1.msra.mxu0 0.0
  %3533 = vmatprep.subr.mxu0 0.0
  %3534 = vmatpush1.msra.mxu0 0.0
  %3535 = vmatprep.subr.mxu0 0.0
  %3536 = vmatpush1.msra.mxu0 0.0
  %3537 = vmatprep.subr.mxu0 0.0
  %3538 = vmatpush1.msra.mxu0 0.0
  %3539 = vmatprep.subr.mxu0 0.0
  %3540 = vmatpush1.msra.mxu0 0.0
  %3541 = vmatprep.subr.mxu0 0.0
  %3542 = vmatpush1.msra.mxu0 0.0
  %3543 = vmatprep.subr.mxu0 0.0
  %3544 = vmatpush1.msra.mxu0 0.0
  %3545 = vmatprep.subr.mxu0 0.0
  %3546 = vmatpush1.msra.mxu0 0.0
  %3547 = vmatprep.subr.mxu0 0.0
  %3548 = vmatpush1.msra.mxu0 0.0
  %3549 = vmatprep.subr.mxu0 0.0
  %3550 = vmatpush1.msra.mxu0 0.0
  %3551 = vmatprep.subr.mxu0 0.0
  %3552 = vmatpush1.msra.mxu0 0.0
  %3553 = vmatprep.subr.mxu0 0.0
  %3554 = vmatpush1.msra.mxu0 0.0
  %3555 = vmatprep.subr.mxu0 0.0
  %3556 = vmatpush1.msra.mxu0 0.0
  %3557 = vmatprep.subr.mxu0 0.0
  %3558 = vmatpush1.msra.mxu0 0.0
  %3559 = vmatprep.subr.mxu0 0.0
  %3560 = vmatpush1.msra.mxu0 0.0
  %3561 = vmatprep.subr.mxu0 0.0
  %3562 = vmatpush1.msra.mxu0 0.0
  %3563 = vmatprep.subr.mxu0 0.0
  %3564 = vmatpush1.msra.mxu0 0.0
  %3565 = vmatprep.subr.mxu0 0.0
  %3566 = vmatpush1.msra.mxu0 0.0
  %3567 = vmatprep.subr.mxu0 0.0
  %3568 = vmatpush1.msra.mxu0 0.0
  %3569 = vmatprep.subr.mxu0 0.0
  %3570 = vmatpush1.msra.mxu0 0.0
  %3571 = vmatprep.subr.mxu0 0.0
  %3572 = vmatpush1.msra.mxu0 0.0
  %3573 = vmatprep.subr.mxu0 0.0
  %3574 = vmatpush1.msra.mxu0 0.0
  %3575 = vmatprep.subr.mxu0 0.0
  %3576 = vmatpush1.msra.mxu0 0.0
  %3577 = vmatprep.subr.mxu0 0.0
  %3578 = vmatpush1.msra.mxu0 0.0
  %3579 = vmatprep.mubr.f32.mxu0 0.0
  %3580 = vmatmul.mubr.f32.gmra.mrb[0].mxu0 %v3513
  %v3581 = vpop.f32.mrb[0].mxu0
  %v3582 = vadd.f32 %v251, %v3581
  %v3583 = vpop.f32.mrb[0].mxu0
  %3584 = vdwg.mxu0
  %v3585 = vld [vmem:[#allocation2 + $0x16] sm:$0x1]
  %v3586 = vld [vmem:[#allocation2 + $0x36] sm:$0x1]
  %v3588 = vrot.slane %v3582, 1
  %v3591 = vadd.f32 %v3585, %v3582
  %v3592 = vadd.f32 %v3586, %v3588
  %v3593 = vxor.u32 %v3591, 2147483648
  %v3594 = vxor.u32 %v3592, 2147483648
  %v3595 = vmul.f32 %v3593, 1.442695
  %v3596 = vpow.pop %v3595
  %v3597 = vmul.f32 %v3594, 1.442695
  %v3598 = vpow.pop %v3597
  %v3599 = vadd.f32 %v3596, 1.0
  %v3600 = vadd.f32 %v3598, 1.0
  %v3601 = vrcp.pop %v3599
  %v3602 = vmul.f32 1.0, %v3601
  %v3603 = vrcp.pop %v3600
  %v3604 = vmul.f32 1.0, %v3603
  %3605 = vrot.lane.b32.xlu0 %v3582, 64
  %v3606 = vpop.permute.xlu0 %3605
  %3607 = vrot.lane.b32.xlu0 %v3588, 64
  %v3608 = vpop.permute.xlu0 %3607
  %v3611 = vmul.f32 %v3602, %v3606
  %v3612 = vmul.f32 %v3604, %v3608
  %3615 = vrot.lane.b32.xlu0 %v3611, 64
  %v3616 = vpop.permute.xlu0 %3615
  %3617 = vrot.lane.b32.xlu0 %v3612, 64
  %v3618 = vpop.permute.xlu0 %3617
  %v3621 = vadd.f32 %v3585, %v3616
  %v3622 = vadd.f32 %v3586, %v3618
  %v3623 = vtanh.pop %v3621
  %v3624 = vtanh.pop %v3622
  %v3625 = vsub.f32 %v3497, %v3623
  %v3626 = vsub.f32 %v3498, %v3624
  %3629 = vrot.lane.b32.xlu0 %v3625, 96
  %v3630 = vpop.permute.xlu0 %3629
  %3631 = vrot.lane.b32.xlu0 %v3626, 96
  %v3632 = vpop.permute.xlu0 %3631
  %v3635 = vmul.f32 %v3602, %v3630
  %v3636 = vmul.f32 %v3604, %v3632
  %3639 = vrot.lane.b32.xlu0 %v3635, 32
  %v3640 = vpop.permute.xlu0 %3639
  %3641 = vrot.lane.b32.xlu0 %v3636, 32
  %v3642 = vpop.permute.xlu0 %3641
  %v3645 = vadd.f32 %v3623, %v3640
  %v3646 = vadd.f32 %v3624, %v3642
  %3649 = vrot.lane.b32.xlu0 %v3645, 64
  %v3650 = vpop.permute.xlu0 %3649
  %3651 = vrot.lane.b32.xlu0 %v3646, 64
  %v3652 = vpop.permute.xlu0 %3651
  %3655 = vst.msk [vmem:[%s5 + $0x16] sm:$0x1] %vm397, %v3650
  %3656 = vst.msk [vmem:[%s5 + $0x36] sm:$0x1] %vm397, %v3652
  %v3657 = vrot.slane %v3646, 7
  %v3658 = vsel %vm401, %v3657, %v3645
  %3659 = vrot.lane.b32.xlu0 %v3658, 64
  %v3660 = vpop.permute.xlu0 %3659
  %v3661 = vsel %vm253, %v3660, 0
  %3663 = vmatprep.subr.mxu0 0.0
  %3664 = vmatpush1.msra.mxu0 %v23
  %3665 = vmatprep.subr.mxu0 0.0
  %3666 = vmatpush1.msra.mxu0 %v24
  %3667 = vmatprep.subr.mxu0 0.0
  %3668 = vmatpush1.msra.mxu0 %v25
  %3669 = vmatprep.subr.mxu0 0.0
  %3670 = vmatpush1.msra.mxu0 %v26
  %3671 = vmatprep.subr.mxu0 0.0
  %3672 = vmatpush1.msra.mxu0 0.0
  %3673 = vmatprep.subr.mxu0 0.0
  %3674 = vmatpush1.msra.mxu0 0.0
  %3675 = vmatprep.subr.mxu0 0.0
  %3676 = vmatpush1.msra.mxu0 0.0
  %3677 = vmatprep.subr.mxu0 0.0
  %3678 = vmatpush1.msra.mxu0 0.0
  %3679 = vmatprep.subr.mxu0 0.0
  %3680 = vmatpush1.msra.mxu0 0.0
  %3681 = vmatprep.subr.mxu0 0.0
  %3682 = vmatpush1.msra.mxu0 0.0
  %3683 = vmatprep.subr.mxu0 0.0
  %3684 = vmatpush1.msra.mxu0 0.0
  %3685 = vmatprep.subr.mxu0 0.0
  %3686 = vmatpush1.msra.mxu0 0.0
  %3687 = vmatprep.subr.mxu0 0.0
  %3688 = vmatpush1.msra.mxu0 0.0
  %3689 = vmatprep.subr.mxu0 0.0
  %3690 = vmatpush1.msra.mxu0 0.0
  %3691 = vmatprep.subr.mxu0 0.0
  %3692 = vmatpush1.msra.mxu0 0.0
  %3693 = vmatprep.subr.mxu0 0.0
  %3694 = vmatpush1.msra.mxu0 0.0
  %3695 = vmatprep.subr.mxu0 0.0
  %3696 = vmatpush1.msra.mxu0 0.0
  %3697 = vmatprep.subr.mxu0 0.0
  %3698 = vmatpush1.msra.mxu0 0.0
  %3699 = vmatprep.subr.mxu0 0.0
  %3700 = vmatpush1.msra.mxu0 0.0
  %3701 = vmatprep.subr.mxu0 0.0
  %3702 = vmatpush1.msra.mxu0 0.0
  %3703 = vmatprep.subr.mxu0 0.0
  %3704 = vmatpush1.msra.mxu0 0.0
  %3705 = vmatprep.subr.mxu0 0.0
  %3706 = vmatpush1.msra.mxu0 0.0
  %3707 = vmatprep.subr.mxu0 0.0
  %3708 = vmatpush1.msra.mxu0 0.0
  %3709 = vmatprep.subr.mxu0 0.0
  %3710 = vmatpush1.msra.mxu0 0.0
  %3711 = vmatprep.subr.mxu0 0.0
  %3712 = vmatpush1.msra.mxu0 0.0
  %3713 = vmatprep.subr.mxu0 0.0
  %3714 = vmatpush1.msra.mxu0 0.0
  %3715 = vmatprep.subr.mxu0 0.0
  %3716 = vmatpush1.msra.mxu0 0.0
  %3717 = vmatprep.subr.mxu0 0.0
  %3718 = vmatpush1.msra.mxu0 0.0
  %3719 = vmatprep.subr.mxu0 0.0
  %3720 = vmatpush1.msra.mxu0 0.0
  %3721 = vmatprep.subr.mxu0 0.0
  %3722 = vmatpush1.msra.mxu0 0.0
  %3723 = vmatprep.subr.mxu0 0.0
  %3724 = vmatpush1.msra.mxu0 0.0
  %3725 = vmatprep.subr.mxu0 0.0
  %3726 = vmatpush1.msra.mxu0 0.0
  %3727 = vmatprep.mubr.f32.mxu0 0.0
  %3728 = vmatmul.mubr.f32.gmra.mrb[0].mxu0 %v3661
  %v3729 = vpop.f32.mrb[0].mxu0
  %v3730 = vadd.f32 %v251, %v3729
  %v3731 = vpop.f32.mrb[0].mxu0
  %3732 = vdwg.mxu0
  %v3733 = vld [vmem:[#allocation2 + $0x17] sm:$0x1]
  %v3734 = vld [vmem:[#allocation2 + $0x37] sm:$0x1]
  %v3736 = vrot.slane %v3730, 1
  %v3739 = vadd.f32 %v3733, %v3730
  %v3740 = vadd.f32 %v3734, %v3736
  %v3741 = vxor.u32 %v3739, 2147483648
  %v3742 = vxor.u32 %v3740, 2147483648
  %v3743 = vmul.f32 %v3741, 1.442695
  %v3744 = vpow.pop %v3743
  %v3745 = vmul.f32 %v3742, 1.442695
  %v3746 = vpow.pop %v3745
  %v3747 = vadd.f32 %v3744, 1.0
  %v3748 = vadd.f32 %v3746, 1.0
  %v3749 = vrcp.pop %v3747
  %v3750 = vmul.f32 1.0, %v3749
  %v3751 = vrcp.pop %v3748
  %v3752 = vmul.f32 1.0, %v3751
  %3753 = vrot.lane.b32.xlu0 %v3730, 64
  %v3754 = vpop.permute.xlu0 %3753
  %3755 = vrot.lane.b32.xlu0 %v3736, 64
  %v3756 = vpop.permute.xlu0 %3755
  %v3759 = vmul.f32 %v3750, %v3754
  %v3760 = vmul.f32 %v3752, %v3756
  %3763 = vrot.lane.b32.xlu0 %v3759, 64
  %v3764 = vpop.permute.xlu0 %3763
  %3765 = vrot.lane.b32.xlu0 %v3760, 64
  %v3766 = vpop.permute.xlu0 %3765
  %v3769 = vadd.f32 %v3733, %v3764
  %v3770 = vadd.f32 %v3734, %v3766
  %v3771 = vtanh.pop %v3769
  %v3772 = vtanh.pop %v3770
  %v3773 = vsub.f32 %v3645, %v3771
  %v3774 = vsub.f32 %v3646, %v3772
  %3777 = vrot.lane.b32.xlu0 %v3773, 96
  %v3778 = vpop.permute.xlu0 %3777
  %3779 = vrot.lane.b32.xlu0 %v3774, 96
  %v3780 = vpop.permute.xlu0 %3779
  %v3783 = vmul.f32 %v3750, %v3778
  %v3784 = vmul.f32 %v3752, %v3780
  %3787 = vrot.lane.b32.xlu0 %v3783, 32
  %v3788 = vpop.permute.xlu0 %3787
  %3789 = vrot.lane.b32.xlu0 %v3784, 32
  %v3790 = vpop.permute.xlu0 %3789
  %v3793 = vadd.f32 %v3771, %v3788
  %v3794 = vadd.f32 %v3772, %v3790
  %3797 = vrot.lane.b32.xlu0 %v3793, 64
  %v3798 = vpop.permute.xlu0 %3797
  %3799 = vrot.lane.b32.xlu0 %v3794, 64
  %v3800 = vpop.permute.xlu0 %3799
  %3803 = vst.msk [vmem:[%s5 + $0x17] sm:$0x1] %vm397, %v3798
  %3804 = vst.msk [vmem:[%s5 + $0x37] sm:$0x1] %vm397, %v3800
  %v3805 = vrot.slane %v3794, 7
  %v3806 = vsel %vm401, %v3805, %v3793
  %3807 = vrot.lane.b32.xlu0 %v3806, 64
  %v3808 = vpop.permute.xlu0 %3807
  %v3809 = vsel %vm253, %v3808, 0
  %3811 = vmatprep.subr.mxu0 0.0
  %3812 = vmatpush1.msra.mxu0 %v23
  %3813 = vmatprep.subr.mxu0 0.0
  %3814 = vmatpush1.msra.mxu0 %v24
  %3815 = vmatprep.subr.mxu0 0.0
  %3816 = vmatpush1.msra.mxu0 %v25
  %3817 = vmatprep.subr.mxu0 0.0
  %3818 = vmatpush1.msra.mxu0 %v26
  %3819 = vmatprep.subr.mxu0 0.0
  %3820 = vmatpush1.msra.mxu0 0.0
  %3821 = vmatprep.subr.mxu0 0.0
  %3822 = vmatpush1.msra.mxu0 0.0
  %3823 = vmatprep.subr.mxu0 0.0
  %3824 = vmatpush1.msra.mxu0 0.0
  %3825 = vmatprep.subr.mxu0 0.0
  %3826 = vmatpush1.msra.mxu0 0.0
  %3827 = vmatprep.subr.mxu0 0.0
  %3828 = vmatpush1.msra.mxu0 0.0
  %3829 = vmatprep.subr.mxu0 0.0
  %3830 = vmatpush1.msra.mxu0 0.0
  %3831 = vmatprep.subr.mxu0 0.0
  %3832 = vmatpush1.msra.mxu0 0.0
  %3833 = vmatprep.subr.mxu0 0.0
  %3834 = vmatpush1.msra.mxu0 0.0
  %3835 = vmatprep.subr.mxu0 0.0
  %3836 = vmatpush1.msra.mxu0 0.0
  %3837 = vmatprep.subr.mxu0 0.0
  %3838 = vmatpush1.msra.mxu0 0.0
  %3839 = vmatprep.subr.mxu0 0.0
  %3840 = vmatpush1.msra.mxu0 0.0
  %3841 = vmatprep.subr.mxu0 0.0
  %3842 = vmatpush1.msra.mxu0 0.0
  %3843 = vmatprep.subr.mxu0 0.0
  %3844 = vmatpush1.msra.mxu0 0.0
  %3845 = vmatprep.subr.mxu0 0.0
  %3846 = vmatpush1.msra.mxu0 0.0
  %3847 = vmatprep.subr.mxu0 0.0
  %3848 = vmatpush1.msra.mxu0 0.0
  %3849 = vmatprep.subr.mxu0 0.0
  %3850 = vmatpush1.msra.mxu0 0.0
  %3851 = vmatprep.subr.mxu0 0.0
  %3852 = vmatpush1.msra.mxu0 0.0
  %3853 = vmatprep.subr.mxu0 0.0
  %3854 = vmatpush1.msra.mxu0 0.0
  %3855 = vmatprep.subr.mxu0 0.0
  %3856 = vmatpush1.msra.mxu0 0.0
  %3857 = vmatprep.subr.mxu0 0.0
  %3858 = vmatpush1.msra.mxu0 0.0
  %3859 = vmatprep.subr.mxu0 0.0
  %3860 = vmatpush1.msra.mxu0 0.0
  %3861 = vmatprep.subr.mxu0 0.0
  %3862 = vmatpush1.msra.mxu0 0.0
  %3863 = vmatprep.subr.mxu0 0.0
  %3864 = vmatpush1.msra.mxu0 0.0
  %3865 = vmatprep.subr.mxu0 0.0
  %3866 = vmatpush1.msra.mxu0 0.0
  %3867 = vmatprep.subr.mxu0 0.0
  %3868 = vmatpush1.msra.mxu0 0.0
  %3869 = vmatprep.subr.mxu0 0.0
  %3870 = vmatpush1.msra.mxu0 0.0
  %3871 = vmatprep.subr.mxu0 0.0
  %3872 = vmatpush1.msra.mxu0 0.0
  %3873 = vmatprep.subr.mxu0 0.0
  %3874 = vmatpush1.msra.mxu0 0.0
  %3875 = vmatprep.mubr.f32.mxu0 0.0
  %3876 = vmatmul.mubr.f32.gmra.mrb[0].mxu0 %v3809
  %v3877 = vpop.f32.mrb[0].mxu0
  %v3878 = vadd.f32 %v251, %v3877
  %v3879 = vpop.f32.mrb[0].mxu0
  %3880 = vdwg.mxu0
  %v3881 = vld [vmem:[#allocation2 + $0x18] sm:$0x1]
  %v3882 = vld [vmem:[#allocation2 + $0x38] sm:$0x1]
  %v3884 = vrot.slane %v3878, 1
  %v3887 = vadd.f32 %v3881, %v3878
  %v3888 = vadd.f32 %v3882, %v3884
  %v3889 = vxor.u32 %v3887, 2147483648
  %v3890 = vxor.u32 %v3888, 2147483648
  %v3891 = vmul.f32 %v3889, 1.442695
  %v3892 = vpow.pop %v3891
  %v3893 = vmul.f32 %v3890, 1.442695
  %v3894 = vpow.pop %v3893
  %v3895 = vadd.f32 %v3892, 1.0
  %v3896 = vadd.f32 %v3894, 1.0
  %v3897 = vrcp.pop %v3895
  %v3898 = vmul.f32 1.0, %v3897
  %v3899 = vrcp.pop %v3896
  %v3900 = vmul.f32 1.0, %v3899
  %3901 = vrot.lane.b32.xlu0 %v3878, 64
  %v3902 = vpop.permute.xlu0 %3901
  %3903 = vrot.lane.b32.xlu0 %v3884, 64
  %v3904 = vpop.permute.xlu0 %3903
  %v3907 = vmul.f32 %v3898, %v3902
  %v3908 = vmul.f32 %v3900, %v3904
  %3911 = vrot.lane.b32.xlu0 %v3907, 64
  %v3912 = vpop.permute.xlu0 %3911
  %3913 = vrot.lane.b32.xlu0 %v3908, 64
  %v3914 = vpop.permute.xlu0 %3913
  %v3917 = vadd.f32 %v3881, %v3912
  %v3918 = vadd.f32 %v3882, %v3914
  %v3919 = vtanh.pop %v3917
  %v3920 = vtanh.pop %v3918
  %v3921 = vsub.f32 %v3793, %v3919
  %v3922 = vsub.f32 %v3794, %v3920
  %3925 = vrot.lane.b32.xlu0 %v3921, 96
  %v3926 = vpop.permute.xlu0 %3925
  %3927 = vrot.lane.b32.xlu0 %v3922, 96
  %v3928 = vpop.permute.xlu0 %3927
  %v3931 = vmul.f32 %v3898, %v3926
  %v3932 = vmul.f32 %v3900, %v3928
  %3935 = vrot.lane.b32.xlu0 %v3931, 32
  %v3936 = vpop.permute.xlu0 %3935
  %3937 = vrot.lane.b32.xlu0 %v3932, 32
  %v3938 = vpop.permute.xlu0 %3937
  %v3941 = vadd.f32 %v3919, %v3936
  %v3942 = vadd.f32 %v3920, %v3938
  %3945 = vrot.lane.b32.xlu0 %v3941, 64
  %v3946 = vpop.permute.xlu0 %3945
  %3947 = vrot.lane.b32.xlu0 %v3942, 64
  %v3948 = vpop.permute.xlu0 %3947
  %3951 = vst.msk [vmem:[%s5 + $0x18] sm:$0x1] %vm397, %v3946
  %3952 = vst.msk [vmem:[%s5 + $0x38] sm:$0x1] %vm397, %v3948
  %v3953 = vrot.slane %v3942, 7
  %v3954 = vsel %vm401, %v3953, %v3941
  %3955 = vrot.lane.b32.xlu0 %v3954, 64
  %v3956 = vpop.permute.xlu0 %3955
  %v3957 = vsel %vm253, %v3956, 0
  %3959 = vmatprep.subr.mxu0 0.0
  %3960 = vmatpush1.msra.mxu0 %v23
  %3961 = vmatprep.subr.mxu0 0.0
  %3962 = vmatpush1.msra.mxu0 %v24
  %3963 = vmatprep.subr.mxu0 0.0
  %3964 = vmatpush1.msra.mxu0 %v25
  %3965 = vmatprep.subr.mxu0 0.0
  %3966 = vmatpush1.msra.mxu0 %v26
  %3967 = vmatprep.subr.mxu0 0.0
  %3968 = vmatpush1.msra.mxu0 0.0
  %3969 = vmatprep.subr.mxu0 0.0
  %3970 = vmatpush1.msra.mxu0 0.0
  %3971 = vmatprep.subr.mxu0 0.0
  %3972 = vmatpush1.msra.mxu0 0.0
  %3973 = vmatprep.subr.mxu0 0.0
  %3974 = vmatpush1.msra.mxu0 0.0
  %3975 = vmatprep.subr.mxu0 0.0
  %3976 = vmatpush1.msra.mxu0 0.0
  %3977 = vmatprep.subr.mxu0 0.0
  %3978 = vmatpush1.msra.mxu0 0.0
  %3979 = vmatprep.subr.mxu0 0.0
  %3980 = vmatpush1.msra.mxu0 0.0
  %3981 = vmatprep.subr.mxu0 0.0
  %3982 = vmatpush1.msra.mxu0 0.0
  %3983 = vmatprep.subr.mxu0 0.0
  %3984 = vmatpush1.msra.mxu0 0.0
  %3985 = vmatprep.subr.mxu0 0.0
  %3986 = vmatpush1.msra.mxu0 0.0
  %3987 = vmatprep.subr.mxu0 0.0
  %3988 = vmatpush1.msra.mxu0 0.0
  %3989 = vmatprep.subr.mxu0 0.0
  %3990 = vmatpush1.msra.mxu0 0.0
  %3991 = vmatprep.subr.mxu0 0.0
  %3992 = vmatpush1.msra.mxu0 0.0
  %3993 = vmatprep.subr.mxu0 0.0
  %3994 = vmatpush1.msra.mxu0 0.0
  %3995 = vmatprep.subr.mxu0 0.0
  %3996 = vmatpush1.msra.mxu0 0.0
  %3997 = vmatprep.subr.mxu0 0.0
  %3998 = vmatpush1.msra.mxu0 0.0
  %3999 = vmatprep.subr.mxu0 0.0
  %4000 = vmatpush1.msra.mxu0 0.0
  %4001 = vmatprep.subr.mxu0 0.0
  %4002 = vmatpush1.msra.mxu0 0.0
  %4003 = vmatprep.subr.mxu0 0.0
  %4004 = vmatpush1.msra.mxu0 0.0
  %4005 = vmatprep.subr.mxu0 0.0
  %4006 = vmatpush1.msra.mxu0 0.0
  %4007 = vmatprep.subr.mxu0 0.0
  %4008 = vmatpush1.msra.mxu0 0.0
  %4009 = vmatprep.subr.mxu0 0.0
  %4010 = vmatpush1.msra.mxu0 0.0
  %4011 = vmatprep.subr.mxu0 0.0
  %4012 = vmatpush1.msra.mxu0 0.0
  %4013 = vmatprep.subr.mxu0 0.0
  %4014 = vmatpush1.msra.mxu0 0.0
  %4015 = vmatprep.subr.mxu0 0.0
  %4016 = vmatpush1.msra.mxu0 0.0
  %4017 = vmatprep.subr.mxu0 0.0
  %4018 = vmatpush1.msra.mxu0 0.0
  %4019 = vmatprep.subr.mxu0 0.0
  %4020 = vmatpush1.msra.mxu0 0.0
  %4021 = vmatprep.subr.mxu0 0.0
  %4022 = vmatpush1.msra.mxu0 0.0
  %4023 = vmatprep.mubr.f32.mxu0 0.0
  %4024 = vmatmul.mubr.f32.gmra.mrb[0].mxu0 %v3957
  %v4025 = vpop.f32.mrb[0].mxu0
  %v4026 = vadd.f32 %v251, %v4025
  %v4027 = vpop.f32.mrb[0].mxu0
  %4028 = vdwg.mxu0
  %v4029 = vld [vmem:[#allocation2 + $0x19] sm:$0x1]
  %v4030 = vld [vmem:[#allocation2 + $0x39] sm:$0x1]
  %v4032 = vrot.slane %v4026, 1
  %v4035 = vadd.f32 %v4029, %v4026
  %v4036 = vadd.f32 %v4030, %v4032
  %v4037 = vxor.u32 %v4035, 2147483648
  %v4038 = vxor.u32 %v4036, 2147483648
  %v4039 = vmul.f32 %v4037, 1.442695
  %v4040 = vpow.pop %v4039
  %v4041 = vmul.f32 %v4038, 1.442695
  %v4042 = vpow.pop %v4041
  %v4043 = vadd.f32 %v4040, 1.0
  %v4044 = vadd.f32 %v4042, 1.0
  %v4045 = vrcp.pop %v4043
  %v4046 = vmul.f32 1.0, %v4045
  %v4047 = vrcp.pop %v4044
  %v4048 = vmul.f32 1.0, %v4047
  %4049 = vrot.lane.b32.xlu0 %v4026, 64
  %v4050 = vpop.permute.xlu0 %4049
  %4051 = vrot.lane.b32.xlu0 %v4032, 64
  %v4052 = vpop.permute.xlu0 %4051
  %v4055 = vmul.f32 %v4046, %v4050
  %v4056 = vmul.f32 %v4048, %v4052
  %4059 = vrot.lane.b32.xlu0 %v4055, 64
  %v4060 = vpop.permute.xlu0 %4059
  %4061 = vrot.lane.b32.xlu0 %v4056, 64
  %v4062 = vpop.permute.xlu0 %4061
  %v4065 = vadd.f32 %v4029, %v4060
  %v4066 = vadd.f32 %v4030, %v4062
  %v4067 = vtanh.pop %v4065
  %v4068 = vtanh.pop %v4066
  %v4069 = vsub.f32 %v3941, %v4067
  %v4070 = vsub.f32 %v3942, %v4068
  %4073 = vrot.lane.b32.xlu0 %v4069, 96
  %v4074 = vpop.permute.xlu0 %4073
  %4075 = vrot.lane.b32.xlu0 %v4070, 96
  %v4076 = vpop.permute.xlu0 %4075
  %v4079 = vmul.f32 %v4046, %v4074
  %v4080 = vmul.f32 %v4048, %v4076
  %4083 = vrot.lane.b32.xlu0 %v4079, 32
  %v4084 = vpop.permute.xlu0 %4083
  %4085 = vrot.lane.b32.xlu0 %v4080, 32
  %v4086 = vpop.permute.xlu0 %4085
  %v4089 = vadd.f32 %v4067, %v4084
  %v4090 = vadd.f32 %v4068, %v4086
  %4093 = vrot.lane.b32.xlu0 %v4089, 64
  %v4094 = vpop.permute.xlu0 %4093
  %4095 = vrot.lane.b32.xlu0 %v4090, 64
  %v4096 = vpop.permute.xlu0 %4095
  %4099 = vst.msk [vmem:[%s5 + $0x19] sm:$0x1] %vm397, %v4094
  %4100 = vst.msk [vmem:[%s5 + $0x39] sm:$0x1] %vm397, %v4096
  %v4101 = vrot.slane %v4090, 7
  %v4102 = vsel %vm401, %v4101, %v4089
  %4103 = vrot.lane.b32.xlu0 %v4102, 64
  %v4104 = vpop.permute.xlu0 %4103
  %v4105 = vsel %vm253, %v4104, 0
  %4107 = vmatprep.subr.mxu0 0.0
  %4108 = vmatpush1.msra.mxu0 %v23
  %4109 = vmatprep.subr.mxu0 0.0
  %4110 = vmatpush1.msra.mxu0 %v24
  %4111 = vmatprep.subr.mxu0 0.0
  %4112 = vmatpush1.msra.mxu0 %v25
  %4113 = vmatprep.subr.mxu0 0.0
  %4114 = vmatpush1.msra.mxu0 %v26
  %4115 = vmatprep.subr.mxu0 0.0
  %4116 = vmatpush1.msra.mxu0 0.0
  %4117 = vmatprep.subr.mxu0 0.0
  %4118 = vmatpush1.msra.mxu0 0.0
  %4119 = vmatprep.subr.mxu0 0.0
  %4120 = vmatpush1.msra.mxu0 0.0
  %4121 = vmatprep.subr.mxu0 0.0
  %4122 = vmatpush1.msra.mxu0 0.0
  %4123 = vmatprep.subr.mxu0 0.0
  %4124 = vmatpush1.msra.mxu0 0.0
  %4125 = vmatprep.subr.mxu0 0.0
  %4126 = vmatpush1.msra.mxu0 0.0
  %4127 = vmatprep.subr.mxu0 0.0
  %4128 = vmatpush1.msra.mxu0 0.0
  %4129 = vmatprep.subr.mxu0 0.0
  %4130 = vmatpush1.msra.mxu0 0.0
  %4131 = vmatprep.subr.mxu0 0.0
  %4132 = vmatpush1.msra.mxu0 0.0
  %4133 = vmatprep.subr.mxu0 0.0
  %4134 = vmatpush1.msra.mxu0 0.0
  %4135 = vmatprep.subr.mxu0 0.0
  %4136 = vmatpush1.msra.mxu0 0.0
  %4137 = vmatprep.subr.mxu0 0.0
  %4138 = vmatpush1.msra.mxu0 0.0
  %4139 = vmatprep.subr.mxu0 0.0
  %4140 = vmatpush1.msra.mxu0 0.0
  %4141 = vmatprep.subr.mxu0 0.0
  %4142 = vmatpush1.msra.mxu0 0.0
  %4143 = vmatprep.subr.mxu0 0.0
  %4144 = vmatpush1.msra.mxu0 0.0
  %4145 = vmatprep.subr.mxu0 0.0
  %4146 = vmatpush1.msra.mxu0 0.0
  %4147 = vmatprep.subr.mxu0 0.0
  %4148 = vmatpush1.msra.mxu0 0.0
  %4149 = vmatprep.subr.mxu0 0.0
  %4150 = vmatpush1.msra.mxu0 0.0
  %4151 = vmatprep.subr.mxu0 0.0
  %4152 = vmatpush1.msra.mxu0 0.0
  %4153 = vmatprep.subr.mxu0 0.0
  %4154 = vmatpush1.msra.mxu0 0.0
  %4155 = vmatprep.subr.mxu0 0.0
  %4156 = vmatpush1.msra.mxu0 0.0
  %4157 = vmatprep.subr.mxu0 0.0
  %4158 = vmatpush1.msra.mxu0 0.0
  %4159 = vmatprep.subr.mxu0 0.0
  %4160 = vmatpush1.msra.mxu0 0.0
  %4161 = vmatprep.subr.mxu0 0.0
  %4162 = vmatpush1.msra.mxu0 0.0
  %4163 = vmatprep.subr.mxu0 0.0
  %4164 = vmatpush1.msra.mxu0 0.0
  %4165 = vmatprep.subr.mxu0 0.0
  %4166 = vmatpush1.msra.mxu0 0.0
  %4167 = vmatprep.subr.mxu0 0.0
  %4168 = vmatpush1.msra.mxu0 0.0
  %4169 = vmatprep.subr.mxu0 0.0
  %4170 = vmatpush1.msra.mxu0 0.0
  %4171 = vmatprep.mubr.f32.mxu0 0.0
  %4172 = vmatmul.mubr.f32.gmra.mrb[0].mxu0 %v4105
  %v4173 = vpop.f32.mrb[0].mxu0
  %v4174 = vadd.f32 %v251, %v4173
  %v4175 = vpop.f32.mrb[0].mxu0
  %4176 = vdwg.mxu0
  %v4177 = vld [vmem:[#allocation2 + $0x1a] sm:$0x1]
  %v4178 = vld [vmem:[#allocation2 + $0x3a] sm:$0x1]
  %v4180 = vrot.slane %v4174, 1
  %v4183 = vadd.f32 %v4177, %v4174
  %v4184 = vadd.f32 %v4178, %v4180
  %v4185 = vxor.u32 %v4183, 2147483648
  %v4186 = vxor.u32 %v4184, 2147483648
  %v4187 = vmul.f32 %v4185, 1.442695
  %v4188 = vpow.pop %v4187
  %v4189 = vmul.f32 %v4186, 1.442695
  %v4190 = vpow.pop %v4189
  %v4191 = vadd.f32 %v4188, 1.0
  %v4192 = vadd.f32 %v4190, 1.0
  %v4193 = vrcp.pop %v4191
  %v4194 = vmul.f32 1.0, %v4193
  %v4195 = vrcp.pop %v4192
  %v4196 = vmul.f32 1.0, %v4195
  %4197 = vrot.lane.b32.xlu0 %v4174, 64
  %v4198 = vpop.permute.xlu0 %4197
  %4199 = vrot.lane.b32.xlu0 %v4180, 64
  %v4200 = vpop.permute.xlu0 %4199
  %v4203 = vmul.f32 %v4194, %v4198
  %v4204 = vmul.f32 %v4196, %v4200
  %4207 = vrot.lane.b32.xlu0 %v4203, 64
  %v4208 = vpop.permute.xlu0 %4207
  %4209 = vrot.lane.b32.xlu0 %v4204, 64
  %v4210 = vpop.permute.xlu0 %4209
  %v4213 = vadd.f32 %v4177, %v4208
  %v4214 = vadd.f32 %v4178, %v4210
  %v4215 = vtanh.pop %v4213
  %v4216 = vtanh.pop %v4214
  %v4217 = vsub.f32 %v4089, %v4215
  %v4218 = vsub.f32 %v4090, %v4216
  %4221 = vrot.lane.b32.xlu0 %v4217, 96
  %v4222 = vpop.permute.xlu0 %4221
  %4223 = vrot.lane.b32.xlu0 %v4218, 96
  %v4224 = vpop.permute.xlu0 %4223
  %v4227 = vmul.f32 %v4194, %v4222
  %v4228 = vmul.f32 %v4196, %v4224
  %4231 = vrot.lane.b32.xlu0 %v4227, 32
  %v4232 = vpop.permute.xlu0 %4231
  %4233 = vrot.lane.b32.xlu0 %v4228, 32
  %v4234 = vpop.permute.xlu0 %4233
  %v4237 = vadd.f32 %v4215, %v4232
  %v4238 = vadd.f32 %v4216, %v4234
  %4241 = vrot.lane.b32.xlu0 %v4237, 64
  %v4242 = vpop.permute.xlu0 %4241
  %4243 = vrot.lane.b32.xlu0 %v4238, 64
  %v4244 = vpop.permute.xlu0 %4243
  %4247 = vst.msk [vmem:[%s5 + $0x1a] sm:$0x1] %vm397, %v4242
  %4248 = vst.msk [vmem:[%s5 + $0x3a] sm:$0x1] %vm397, %v4244
  %v4249 = vrot.slane %v4238, 7
  %v4250 = vsel %vm401, %v4249, %v4237
  %4251 = vrot.lane.b32.xlu0 %v4250, 64
  %v4252 = vpop.permute.xlu0 %4251
  %v4253 = vsel %vm253, %v4252, 0
  %4255 = vmatprep.subr.mxu0 0.0
  %4256 = vmatpush1.msra.mxu0 %v23
  %4257 = vmatprep.subr.mxu0 0.0
  %4258 = vmatpush1.msra.mxu0 %v24
  %4259 = vmatprep.subr.mxu0 0.0
  %4260 = vmatpush1.msra.mxu0 %v25
  %4261 = vmatprep.subr.mxu0 0.0
  %4262 = vmatpush1.msra.mxu0 %v26
  %4263 = vmatprep.subr.mxu0 0.0
  %4264 = vmatpush1.msra.mxu0 0.0
  %4265 = vmatprep.subr.mxu0 0.0
  %4266 = vmatpush1.msra.mxu0 0.0
  %4267 = vmatprep.subr.mxu0 0.0
  %4268 = vmatpush1.msra.mxu0 0.0
  %4269 = vmatprep.subr.mxu0 0.0
  %4270 = vmatpush1.msra.mxu0 0.0
  %4271 = vmatprep.subr.mxu0 0.0
  %4272 = vmatpush1.msra.mxu0 0.0
  %4273 = vmatprep.subr.mxu0 0.0
  %4274 = vmatpush1.msra.mxu0 0.0
  %4275 = vmatprep.subr.mxu0 0.0
  %4276 = vmatpush1.msra.mxu0 0.0
  %4277 = vmatprep.subr.mxu0 0.0
  %4278 = vmatpush1.msra.mxu0 0.0
  %4279 = vmatprep.subr.mxu0 0.0
  %4280 = vmatpush1.msra.mxu0 0.0
  %4281 = vmatprep.subr.mxu0 0.0
  %4282 = vmatpush1.msra.mxu0 0.0
  %4283 = vmatprep.subr.mxu0 0.0
  %4284 = vmatpush1.msra.mxu0 0.0
  %4285 = vmatprep.subr.mxu0 0.0
  %4286 = vmatpush1.msra.mxu0 0.0
  %4287 = vmatprep.subr.mxu0 0.0
  %4288 = vmatpush1.msra.mxu0 0.0
  %4289 = vmatprep.subr.mxu0 0.0
  %4290 = vmatpush1.msra.mxu0 0.0
  %4291 = vmatprep.subr.mxu0 0.0
  %4292 = vmatpush1.msra.mxu0 0.0
  %4293 = vmatprep.subr.mxu0 0.0
  %4294 = vmatpush1.msra.mxu0 0.0
  %4295 = vmatprep.subr.mxu0 0.0
  %4296 = vmatpush1.msra.mxu0 0.0
  %4297 = vmatprep.subr.mxu0 0.0
  %4298 = vmatpush1.msra.mxu0 0.0
  %4299 = vmatprep.subr.mxu0 0.0
  %4300 = vmatpush1.msra.mxu0 0.0
  %4301 = vmatprep.subr.mxu0 0.0
  %4302 = vmatpush1.msra.mxu0 0.0
  %4303 = vmatprep.subr.mxu0 0.0
  %4304 = vmatpush1.msra.mxu0 0.0
  %4305 = vmatprep.subr.mxu0 0.0
  %4306 = vmatpush1.msra.mxu0 0.0
  %4307 = vmatprep.subr.mxu0 0.0
  %4308 = vmatpush1.msra.mxu0 0.0
  %4309 = vmatprep.subr.mxu0 0.0
  %4310 = vmatpush1.msra.mxu0 0.0
  %4311 = vmatprep.subr.mxu0 0.0
  %4312 = vmatpush1.msra.mxu0 0.0
  %4313 = vmatprep.subr.mxu0 0.0
  %4314 = vmatpush1.msra.mxu0 0.0
  %4315 = vmatprep.subr.mxu0 0.0
  %4316 = vmatpush1.msra.mxu0 0.0
  %4317 = vmatprep.subr.mxu0 0.0
  %4318 = vmatpush1.msra.mxu0 0.0
  %4319 = vmatprep.mubr.f32.mxu0 0.0
  %4320 = vmatmul.mubr.f32.gmra.mrb[0].mxu0 %v4253
  %v4321 = vpop.f32.mrb[0].mxu0
  %v4322 = vadd.f32 %v251, %v4321
  %v4323 = vpop.f32.mrb[0].mxu0
  %4324 = vdwg.mxu0
  %v4325 = vld [vmem:[#allocation2 + $0x1b] sm:$0x1]
  %v4326 = vld [vmem:[#allocation2 + $0x3b] sm:$0x1]
  %v4328 = vrot.slane %v4322, 1
  %v4331 = vadd.f32 %v4325, %v4322
  %v4332 = vadd.f32 %v4326, %v4328
  %v4333 = vxor.u32 %v4331, 2147483648
  %v4334 = vxor.u32 %v4332, 2147483648
  %v4335 = vmul.f32 %v4333, 1.442695
  %v4336 = vpow.pop %v4335
  %v4337 = vmul.f32 %v4334, 1.442695
  %v4338 = vpow.pop %v4337
  %v4339 = vadd.f32 %v4336, 1.0
  %v4340 = vadd.f32 %v4338, 1.0
  %v4341 = vrcp.pop %v4339
  %v4342 = vmul.f32 1.0, %v4341
  %v4343 = vrcp.pop %v4340
  %v4344 = vmul.f32 1.0, %v4343
  %4345 = vrot.lane.b32.xlu0 %v4322, 64
  %v4346 = vpop.permute.xlu0 %4345
  %4347 = vrot.lane.b32.xlu0 %v4328, 64
  %v4348 = vpop.permute.xlu0 %4347
  %v4351 = vmul.f32 %v4342, %v4346
  %v4352 = vmul.f32 %v4344, %v4348
  %4355 = vrot.lane.b32.xlu0 %v4351, 64
  %v4356 = vpop.permute.xlu0 %4355
  %4357 = vrot.lane.b32.xlu0 %v4352, 64
  %v4358 = vpop.permute.xlu0 %4357
  %v4361 = vadd.f32 %v4325, %v4356
  %v4362 = vadd.f32 %v4326, %v4358
  %v4363 = vtanh.pop %v4361
  %v4364 = vtanh.pop %v4362
  %v4365 = vsub.f32 %v4237, %v4363
  %v4366 = vsub.f32 %v4238, %v4364
  %4369 = vrot.lane.b32.xlu0 %v4365, 96
  %v4370 = vpop.permute.xlu0 %4369
  %4371 = vrot.lane.b32.xlu0 %v4366, 96
  %v4372 = vpop.permute.xlu0 %4371
  %v4375 = vmul.f32 %v4342, %v4370
  %v4376 = vmul.f32 %v4344, %v4372
  %4379 = vrot.lane.b32.xlu0 %v4375, 32
  %v4380 = vpop.permute.xlu0 %4379
  %4381 = vrot.lane.b32.xlu0 %v4376, 32
  %v4382 = vpop.permute.xlu0 %4381
  %v4385 = vadd.f32 %v4363, %v4380
  %v4386 = vadd.f32 %v4364, %v4382
  %4389 = vrot.lane.b32.xlu0 %v4385, 64
  %v4390 = vpop.permute.xlu0 %4389
  %4391 = vrot.lane.b32.xlu0 %v4386, 64
  %v4392 = vpop.permute.xlu0 %4391
  %4395 = vst.msk [vmem:[%s5 + $0x1b] sm:$0x1] %vm397, %v4390
  %4396 = vst.msk [vmem:[%s5 + $0x3b] sm:$0x1] %vm397, %v4392
  %v4397 = vrot.slane %v4386, 7
  %v4398 = vsel %vm401, %v4397, %v4385
  %4399 = vrot.lane.b32.xlu0 %v4398, 64
  %v4400 = vpop.permute.xlu0 %4399
  %v4401 = vsel %vm253, %v4400, 0
  %4403 = vmatprep.subr.mxu0 0.0
  %4404 = vmatpush1.msra.mxu0 %v23
  %4405 = vmatprep.subr.mxu0 0.0
  %4406 = vmatpush1.msra.mxu0 %v24
  %4407 = vmatprep.subr.mxu0 0.0
  %4408 = vmatpush1.msra.mxu0 %v25
  %4409 = vmatprep.subr.mxu0 0.0
  %4410 = vmatpush1.msra.mxu0 %v26
  %4411 = vmatprep.subr.mxu0 0.0
  %4412 = vmatpush1.msra.mxu0 0.0
  %4413 = vmatprep.subr.mxu0 0.0
  %4414 = vmatpush1.msra.mxu0 0.0
  %4415 = vmatprep.subr.mxu0 0.0
  %4416 = vmatpush1.msra.mxu0 0.0
  %4417 = vmatprep.subr.mxu0 0.0
  %4418 = vmatpush1.msra.mxu0 0.0
  %4419 = vmatprep.subr.mxu0 0.0
  %4420 = vmatpush1.msra.mxu0 0.0
  %4421 = vmatprep.subr.mxu0 0.0
  %4422 = vmatpush1.msra.mxu0 0.0
  %4423 = vmatprep.subr.mxu0 0.0
  %4424 = vmatpush1.msra.mxu0 0.0
  %4425 = vmatprep.subr.mxu0 0.0
  %4426 = vmatpush1.msra.mxu0 0.0
  %4427 = vmatprep.subr.mxu0 0.0
  %4428 = vmatpush1.msra.mxu0 0.0
  %4429 = vmatprep.subr.mxu0 0.0
  %4430 = vmatpush1.msra.mxu0 0.0
  %4431 = vmatprep.subr.mxu0 0.0
  %4432 = vmatpush1.msra.mxu0 0.0
  %4433 = vmatprep.subr.mxu0 0.0
  %4434 = vmatpush1.msra.mxu0 0.0
  %4435 = vmatprep.subr.mxu0 0.0
  %4436 = vmatpush1.msra.mxu0 0.0
  %4437 = vmatprep.subr.mxu0 0.0
  %4438 = vmatpush1.msra.mxu0 0.0
  %4439 = vmatprep.subr.mxu0 0.0
  %4440 = vmatpush1.msra.mxu0 0.0
  %4441 = vmatprep.subr.mxu0 0.0
  %4442 = vmatpush1.msra.mxu0 0.0
  %4443 = vmatprep.subr.mxu0 0.0
  %4444 = vmatpush1.msra.mxu0 0.0
  %4445 = vmatprep.subr.mxu0 0.0
  %4446 = vmatpush1.msra.mxu0 0.0
  %4447 = vmatprep.subr.mxu0 0.0
  %4448 = vmatpush1.msra.mxu0 0.0
  %4449 = vmatprep.subr.mxu0 0.0
  %4450 = vmatpush1.msra.mxu0 0.0
  %4451 = vmatprep.subr.mxu0 0.0
  %4452 = vmatpush1.msra.mxu0 0.0
  %4453 = vmatprep.subr.mxu0 0.0
  %4454 = vmatpush1.msra.mxu0 0.0
  %4455 = vmatprep.subr.mxu0 0.0
  %4456 = vmatpush1.msra.mxu0 0.0
  %4457 = vmatprep.subr.mxu0 0.0
  %4458 = vmatpush1.msra.mxu0 0.0
  %4459 = vmatprep.subr.mxu0 0.0
  %4460 = vmatpush1.msra.mxu0 0.0
  %4461 = vmatprep.subr.mxu0 0.0
  %4462 = vmatpush1.msra.mxu0 0.0
  %4463 = vmatprep.subr.mxu0 0.0
  %4464 = vmatpush1.msra.mxu0 0.0
  %4465 = vmatprep.subr.mxu0 0.0
  %4466 = vmatpush1.msra.mxu0 0.0
  %4467 = vmatprep.mubr.f32.mxu0 0.0
  %4468 = vmatmul.mubr.f32.gmra.mrb[0].mxu0 %v4401
  %v4469 = vpop.f32.mrb[0].mxu0
  %v4470 = vadd.f32 %v251, %v4469
  %v4471 = vpop.f32.mrb[0].mxu0
  %4472 = vdwg.mxu0
  %v4473 = vld [vmem:[#allocation2 + $0x1c] sm:$0x1]
  %v4474 = vld [vmem:[#allocation2 + $0x3c] sm:$0x1]
  %v4476 = vrot.slane %v4470, 1
  %v4479 = vadd.f32 %v4473, %v4470
  %v4480 = vadd.f32 %v4474, %v4476
  %v4481 = vxor.u32 %v4479, 2147483648
  %v4482 = vxor.u32 %v4480, 2147483648
  %v4483 = vmul.f32 %v4481, 1.442695
  %v4484 = vpow.pop %v4483
  %v4485 = vmul.f32 %v4482, 1.442695
  %v4486 = vpow.pop %v4485
  %v4487 = vadd.f32 %v4484, 1.0
  %v4488 = vadd.f32 %v4486, 1.0
  %v4489 = vrcp.pop %v4487
  %v4490 = vmul.f32 1.0, %v4489
  %v4491 = vrcp.pop %v4488
  %v4492 = vmul.f32 1.0, %v4491
  %4493 = vrot.lane.b32.xlu0 %v4470, 64
  %v4494 = vpop.permute.xlu0 %4493
  %4495 = vrot.lane.b32.xlu0 %v4476, 64
  %v4496 = vpop.permute.xlu0 %4495
  %v4499 = vmul.f32 %v4490, %v4494
  %v4500 = vmul.f32 %v4492, %v4496
  %4503 = vrot.lane.b32.xlu0 %v4499, 64
  %v4504 = vpop.permute.xlu0 %4503
  %4505 = vrot.lane.b32.xlu0 %v4500, 64
  %v4506 = vpop.permute.xlu0 %4505
  %v4509 = vadd.f32 %v4473, %v4504
  %v4510 = vadd.f32 %v4474, %v4506
  %v4511 = vtanh.pop %v4509
  %v4512 = vtanh.pop %v4510
  %v4513 = vsub.f32 %v4385, %v4511
  %v4514 = vsub.f32 %v4386, %v4512
  %4517 = vrot.lane.b32.xlu0 %v4513, 96
  %v4518 = vpop.permute.xlu0 %4517
  %4519 = vrot.lane.b32.xlu0 %v4514, 96
  %v4520 = vpop.permute.xlu0 %4519
  %v4523 = vmul.f32 %v4490, %v4518
  %v4524 = vmul.f32 %v4492, %v4520
  %4527 = vrot.lane.b32.xlu0 %v4523, 32
  %v4528 = vpop.permute.xlu0 %4527
  %4529 = vrot.lane.b32.xlu0 %v4524, 32
  %v4530 = vpop.permute.xlu0 %4529
  %v4533 = vadd.f32 %v4511, %v4528
  %v4534 = vadd.f32 %v4512, %v4530
  %4537 = vrot.lane.b32.xlu0 %v4533, 64
  %v4538 = vpop.permute.xlu0 %4537
  %4539 = vrot.lane.b32.xlu0 %v4534, 64
  %v4540 = vpop.permute.xlu0 %4539
  %4543 = vst.msk [vmem:[%s5 + $0x1c] sm:$0x1] %vm397, %v4538
  %4544 = vst.msk [vmem:[%s5 + $0x3c] sm:$0x1] %vm397, %v4540
  %v4545 = vrot.slane %v4534, 7
  %v4546 = vsel %vm401, %v4545, %v4533
  %4547 = vrot.lane.b32.xlu0 %v4546, 64
  %v4548 = vpop.permute.xlu0 %4547
  %v4549 = vsel %vm253, %v4548, 0
  %4551 = vmatprep.subr.mxu0 0.0
  %4552 = vmatpush1.msra.mxu0 %v23
  %4553 = vmatprep.subr.mxu0 0.0
  %4554 = vmatpush1.msra.mxu0 %v24
  %4555 = vmatprep.subr.mxu0 0.0
  %4556 = vmatpush1.msra.mxu0 %v25
  %4557 = vmatprep.subr.mxu0 0.0
  %4558 = vmatpush1.msra.mxu0 %v26
  %4559 = vmatprep.subr.mxu0 0.0
  %4560 = vmatpush1.msra.mxu0 0.0
  %4561 = vmatprep.subr.mxu0 0.0
  %4562 = vmatpush1.msra.mxu0 0.0
  %4563 = vmatprep.subr.mxu0 0.0
  %4564 = vmatpush1.msra.mxu0 0.0
  %4565 = vmatprep.subr.mxu0 0.0
  %4566 = vmatpush1.msra.mxu0 0.0
  %4567 = vmatprep.subr.mxu0 0.0
  %4568 = vmatpush1.msra.mxu0 0.0
  %4569 = vmatprep.subr.mxu0 0.0
  %4570 = vmatpush1.msra.mxu0 0.0
  %4571 = vmatprep.subr.mxu0 0.0
  %4572 = vmatpush1.msra.mxu0 0.0
  %4573 = vmatprep.subr.mxu0 0.0
  %4574 = vmatpush1.msra.mxu0 0.0
  %4575 = vmatprep.subr.mxu0 0.0
  %4576 = vmatpush1.msra.mxu0 0.0
  %4577 = vmatprep.subr.mxu0 0.0
  %4578 = vmatpush1.msra.mxu0 0.0
  %4579 = vmatprep.subr.mxu0 0.0
  %4580 = vmatpush1.msra.mxu0 0.0
  %4581 = vmatprep.subr.mxu0 0.0
  %4582 = vmatpush1.msra.mxu0 0.0
  %4583 = vmatprep.subr.mxu0 0.0
  %4584 = vmatpush1.msra.mxu0 0.0
  %4585 = vmatprep.subr.mxu0 0.0
  %4586 = vmatpush1.msra.mxu0 0.0
  %4587 = vmatprep.subr.mxu0 0.0
  %4588 = vmatpush1.msra.mxu0 0.0
  %4589 = vmatprep.subr.mxu0 0.0
  %4590 = vmatpush1.msra.mxu0 0.0
  %4591 = vmatprep.subr.mxu0 0.0
  %4592 = vmatpush1.msra.mxu0 0.0
  %4593 = vmatprep.subr.mxu0 0.0
  %4594 = vmatpush1.msra.mxu0 0.0
  %4595 = vmatprep.subr.mxu0 0.0
  %4596 = vmatpush1.msra.mxu0 0.0
  %4597 = vmatprep.subr.mxu0 0.0
  %4598 = vmatpush1.msra.mxu0 0.0
  %4599 = vmatprep.subr.mxu0 0.0
  %4600 = vmatpush1.msra.mxu0 0.0
  %4601 = vmatprep.subr.mxu0 0.0
  %4602 = vmatpush1.msra.mxu0 0.0
  %4603 = vmatprep.subr.mxu0 0.0
  %4604 = vmatpush1.msra.mxu0 0.0
  %4605 = vmatprep.subr.mxu0 0.0
  %4606 = vmatpush1.msra.mxu0 0.0
  %4607 = vmatprep.subr.mxu0 0.0
  %4608 = vmatpush1.msra.mxu0 0.0
  %4609 = vmatprep.subr.mxu0 0.0
  %4610 = vmatpush1.msra.mxu0 0.0
  %4611 = vmatprep.subr.mxu0 0.0
  %4612 = vmatpush1.msra.mxu0 0.0
  %4613 = vmatprep.subr.mxu0 0.0
  %4614 = vmatpush1.msra.mxu0 0.0
  %4615 = vmatprep.mubr.f32.mxu0 0.0
  %4616 = vmatmul.mubr.f32.gmra.mrb[0].mxu0 %v4549
  %v4617 = vpop.f32.mrb[0].mxu0
  %v4618 = vadd.f32 %v251, %v4617
  %v4619 = vpop.f32.mrb[0].mxu0
  %4620 = vdwg.mxu0
  %v4621 = vld [vmem:[#allocation2 + $0x1d] sm:$0x1]
  %v4622 = vld [vmem:[#allocation2 + $0x3d] sm:$0x1]
  %v4624 = vrot.slane %v4618, 1
  %v4627 = vadd.f32 %v4621, %v4618
  %v4628 = vadd.f32 %v4622, %v4624
  %v4629 = vxor.u32 %v4627, 2147483648
  %v4630 = vxor.u32 %v4628, 2147483648
  %v4631 = vmul.f32 %v4629, 1.442695
  %v4632 = vpow.pop %v4631
  %v4633 = vmul.f32 %v4630, 1.442695
  %v4634 = vpow.pop %v4633
  %v4635 = vadd.f32 %v4632, 1.0
  %v4636 = vadd.f32 %v4634, 1.0
  %v4637 = vrcp.pop %v4635
  %v4638 = vmul.f32 1.0, %v4637
  %v4639 = vrcp.pop %v4636
  %v4640 = vmul.f32 1.0, %v4639
  %4641 = vrot.lane.b32.xlu0 %v4618, 64
  %v4642 = vpop.permute.xlu0 %4641
  %4643 = vrot.lane.b32.xlu0 %v4624, 64
  %v4644 = vpop.permute.xlu0 %4643
  %v4647 = vmul.f32 %v4638, %v4642
  %v4648 = vmul.f32 %v4640, %v4644
  %4651 = vrot.lane.b32.xlu0 %v4647, 64
  %v4652 = vpop.permute.xlu0 %4651
  %4653 = vrot.lane.b32.xlu0 %v4648, 64
  %v4654 = vpop.permute.xlu0 %4653
  %v4657 = vadd.f32 %v4621, %v4652
  %v4658 = vadd.f32 %v4622, %v4654
  %v4659 = vtanh.pop %v4657
  %v4660 = vtanh.pop %v4658
  %v4661 = vsub.f32 %v4533, %v4659
  %v4662 = vsub.f32 %v4534, %v4660
  %4665 = vrot.lane.b32.xlu0 %v4661, 96
  %v4666 = vpop.permute.xlu0 %4665
  %4667 = vrot.lane.b32.xlu0 %v4662, 96
  %v4668 = vpop.permute.xlu0 %4667
  %v4671 = vmul.f32 %v4638, %v4666
  %v4672 = vmul.f32 %v4640, %v4668
  %4675 = vrot.lane.b32.xlu0 %v4671, 32
  %v4676 = vpop.permute.xlu0 %4675
  %4677 = vrot.lane.b32.xlu0 %v4672, 32
  %v4678 = vpop.permute.xlu0 %4677
  %v4681 = vadd.f32 %v4659, %v4676
  %v4682 = vadd.f32 %v4660, %v4678
  %4685 = vrot.lane.b32.xlu0 %v4681, 64
  %v4686 = vpop.permute.xlu0 %4685
  %4687 = vrot.lane.b32.xlu0 %v4682, 64
  %v4688 = vpop.permute.xlu0 %4687
  %4691 = vst.msk [vmem:[%s5 + $0x1d] sm:$0x1] %vm397, %v4686
  %4692 = vst.msk [vmem:[%s5 + $0x3d] sm:$0x1] %vm397, %v4688
  // Predicated region
  $region22: #{gru_forward.1} parent=0 // pred_check
    _
  $region23: #{gru_forward.1} parent=0 // pred_check_branch
    %4694 = sbr.rel (0) target = $region25
  $region24: #{gru_forward.1} parent=0 // pred_region
    _
  $region25: #{gru_forward.1} parent=0 // pred_fallthru
    _
  // Predicated region
  $region26: #{gru_forward.1} parent=0 // pred_check
    _
  $region27: #{gru_forward.1} parent=0 // pred_check_branch
    %4696 = sbr.rel (0) target = $region29
  $region28: #{gru_forward.1} parent=0 // pred_region
    _
  $region29: #{gru_forward.1} parent=0 // pred_fallthru
    _

</llo_original>
